<compile_context>
chip_gen: v5e
topology: v5e:2x2
jax: 0.10.0
libtpu: 0.0.40
codegen_flags: <defaults>
</compile_context>

<pallas_src>
import jax
import jax.numpy as jnp
from jax import lax
from jax.experimental import pallas as pl
from jax.experimental.pallas import tpu as pltpu


def _bn_relu_conv1x1_bn_relu_kernel(x_ref, s1_ref, sh1_ref, w1_ref, bc1_ref,
                                    s2_ref, sh2_ref, o_ref):
    # x: (TM, Cin) f32; s1/sh1: (1, Cin) f32; w1: (Cin, Cb) bf16;
    # bc1/s2/sh2: (1, Cb) f32; o: (TM, Cb) bf16.
    h = jnp.maximum(x_ref[...] * s1_ref[...] + sh1_ref[...], 0.0)
    y = jnp.dot(h.astype(jnp.bfloat16), w1_ref[...],
                preferred_element_type=jnp.float32) + bc1_ref[...]
    h2 = jnp.maximum(y * s2_ref[...] + sh2_ref[...], 0.0)
    o_ref[...] = h2.astype(o_ref.dtype)


def _conv3x3_kernel(a_ref, b_ref, w_ref, bc_ref, o_ref):
    # a/b: (1, TH, W+2, Cb) bf16 -- consecutive TH-row blocks of the padded h2
    #      (block t and block t+1), together covering the TH+2 halo rows needed.
    # w:  (9*Cb, G) bf16 ordered (ky, kx, c); bc: (1, G) f32; o: (1, TH, W, G) f32.
    _, th, wp, cb = a_ref.shape
    w_img = wp - 2
    g = o_ref.shape[-1]

    rows = jnp.concatenate([a_ref[0], b_ref[0]], axis=0)      # (2*TH, W+2, Cb)
    patches = [rows[dy:dy + th, dx:dx + w_img, :].reshape(th * w_img, cb)
               for dy in range(3) for dx in range(3)]
    p = jnp.concatenate(patches, axis=-1)                     # (TH*W, 9*Cb) bf16
    y = jnp.dot(p, w_ref[...], preferred_element_type=jnp.float32) + bc_ref[...]
    o_ref[0] = y.reshape(th, w_img, g)


def _pick_row_tile(h):
    for th in (32, 16, 8, 4, 2):
        if h % th == 0:
            return th
    return h  # odd H fallback: one row tile covering all rows (needs H >= 2)


def _bottleneck_forward(x_nhwc, p):
    N, H, W, Cin = x_nhwc.shape
    assert H >= 2, "3x3 conv tiling assumes H >= 2"
    M = N * H * W
    Cb = p["w1_bf16"].shape[1]
    G = p["w3_bf16"].shape[-1]

    # ---------- stage 1: fused BN1 + ReLU + 1x1 conv + BN2 + ReLU ----------
    TM = 512
    M_pad = ((M + TM - 1) // TM) * TM
    x2d = x_nhwc.reshape(M, Cin)
    if M_pad != M:
        x2d = jnp.pad(x2d, ((0, M_pad - M), (0, 0)))

    h2 = pl.pallas_call(
        _bn_relu_conv1x1_bn_relu_kernel,
        out_shape=jax.ShapeDtypeStruct((M_pad, Cb), jnp.bfloat16),
        grid=(M_pad // TM,),
        in_specs=[
            pl.BlockSpec((TM, Cin), lambda i: (i, 0)),
            pl.BlockSpec((1, Cin), lambda i: (0, 0)),
            pl.BlockSpec((1, Cin), lambda i: (0, 0)),
            pl.BlockSpec((Cin, Cb), lambda i: (0, 0)),
            pl.BlockSpec((1, Cb), lambda i: (0, 0)),
            pl.BlockSpec((1, Cb), lambda i: (0, 0)),
            pl.BlockSpec((1, Cb), lambda i: (0, 0)),
        ],
        out_specs=pl.BlockSpec((TM, Cb), lambda i: (i, 0)),
        compiler_params=pltpu.CompilerParams(
            dimension_semantics=("parallel",)),
    )(x2d, p["s1"], p["sh1"], p["w1_bf16"], p["bc1"], p["s2"], p["sh2"])

    h2 = h2[:M].reshape(N, H, W, Cb)

    # ---------- stage 2: 3x3 conv (pad=1) as one matmul per spatial tile ----------
    TH = _pick_row_tile(H)
    num_t = H // TH
    # Pad rows: 1 zero row on top (conv pad), TH-1 on the bottom (1 is the conv
    # pad, the rest only make the "t+1" halo block of the last tile in-bounds);
    # pad columns by 1 on each side (conv pad).  Total padded rows = H + TH.
    hp = jnp.pad(h2, ((0, 0), (1, TH - 1), (1, 1), (0, 0)))

    y2 = pl.pallas_call(
        _conv3x3_kernel,
        out_shape=jax.ShapeDtypeStruct((N, H, W, G), jnp.float32),
        grid=(N, num_t),
        in_specs=[
            pl.BlockSpec((1, TH, W + 2, Cb), lambda n, t: (n, t, 0, 0)),
            pl.BlockSpec((1, TH, W + 2, Cb), lambda n, t: (n, t + 1, 0, 0)),
            pl.BlockSpec((9 * Cb, G), lambda n, t: (0, 0)),
            pl.BlockSpec((1, G), lambda n, t: (0, 0)),
        ],
        out_specs=pl.BlockSpec((1, TH, W, G), lambda n, t: (n, t, 0, 0)),
        compiler_params=pltpu.CompilerParams(
            dimension_semantics=("parallel", "parallel")),
    )(hp, hp, p["w3_bf16"], p["bc3"])

    # torch.cat([x, input], dim=1) -> new features first, then the input.
    return jnp.concatenate([y2, x_nhwc], axis=-1)


def dense_block_forward(x_nchw, params_list):
    x = jnp.transpose(x_nchw, (0, 2, 3, 1))          # NCHW -> NHWC
    for p in params_list:
        x = _bottleneck_forward(x, p)
    return jnp.transpose(x, (0, 3, 1, 2))            # NHWC -> NCHW


def init_dense_block_params(key, in_chan, num_layers, bottleneck_size, growth_rate):
    eps = 1e-5
    params = []
    for layer_idx in range(num_layers):
        cin = in_chan + layer_idx * growth_rate
        cb = bottleneck_size * growth_rate
        g = growth_rate
        key, *ks = jax.random.split(key, 13)
        gamma1 = 1.0 + 0.1 * jax.random.normal(ks[0], (cin,), jnp.float32)
        beta1 = 0.1 * jax.random.normal(ks[1], (cin,), jnp.float32)
        mean1 = 0.1 * jax.random.normal(ks[2], (cin,), jnp.float32)
        var1 = jax.random.uniform(ks[3], (cin,), jnp.float32, 0.5, 1.5)
        w1 = 0.1 * jax.random.normal(ks[4], (cin, cb), jnp.float32)
        bc1 = 0.1 * jax.random.normal(ks[5], (cb,), jnp.float32)
        gamma2 = 1.0 + 0.1 * jax.random.normal(ks[6], (cb,), jnp.float32)
        beta2 = 0.1 * jax.random.normal(ks[7], (cb,), jnp.float32)
        mean2 = 0.1 * jax.random.normal(ks[8], (cb,), jnp.float32)
        var2 = jax.random.uniform(ks[9], (cb,), jnp.float32, 0.5, 1.5)
        w3_hwio = 0.1 * jax.random.normal(ks[10], (3, 3, cb, g), jnp.float32)
        bc3 = 0.1 * jax.random.normal(ks[11], (g,), jnp.float32)

        s1 = gamma1 / jnp.sqrt(var1 + eps)
        sh1 = beta1 - mean1 * s1
        s2 = gamma2 / jnp.sqrt(var2 + eps)
        sh2 = beta2 - mean2 * s2

        params.append(dict(
            s1=s1.reshape(1, cin), sh1=sh1.reshape(1, cin),
            w1=w1, w1_bf16=w1.astype(jnp.bfloat16),
            bc1=bc1.reshape(1, cb),
            s2=s2.reshape(1, cb), sh2=sh2.reshape(1, cb),
            w3_hwio=w3_hwio,
            w3_bf16=w3_hwio.reshape(9 * cb, g).astype(jnp.bfloat16),
            bc3=bc3.reshape(1, g),
        ))
    return params


def _reference_forward(x_nchw, params_list):
    # Independent pure-JAX reference (XLA conv, f32) for validation.
    x = jnp.transpose(x_nchw, (0, 2, 3, 1))
    for p in params_list:
        h = jnp.maximum(x * p["s1"][0] + p["sh1"][0], 0.0)
        y1 = jnp.einsum("nhwc,cd->nhwd", h, p["w1"],
                        precision=lax.Precision.HIGHEST) + p["bc1"][0]
        h2 = jnp.maximum(y1 * p["s2"][0] + p["sh2"][0], 0.0)
        y2 = lax.conv_general_dilated(
            h2, p["w3_hwio"], window_strides=(1, 1), padding="SAME",
            dimension_numbers=("NHWC", "HWIO", "NHWC"),
            precision=lax.Precision.HIGHEST) + p["bc3"][0]
        x = jnp.concatenate([y2, x], axis=-1)
    return jnp.transpose(x, (0, 3, 1, 2))


if __name__ == "__main__":
    # Dense_Block(in_chan=4, num_layers=3, bottleneck_size=4, growth_rate=4)
    in_chan, num_layers, bottleneck_size, growth_rate = 4, 3, 4, 4
    N, H, W = 2, 16, 16

    key = jax.random.PRNGKey(0)
    k_x, k_p = jax.random.split(key)
    x = jax.random.normal(k_x, (N, in_chan, H, W), jnp.float32)   # NCHW like PyTorch
    params = init_dense_block_params(k_p, in_chan, num_layers,
                                     bottleneck_size, growth_rate)

    fwd = jax.jit(dense_block_forward)
    out = jax.block_until_ready(fwd(x, params))
    expected_channels = in_chan + num_layers * growth_rate
    assert out.shape == (N, expected_channels, H, W), out.shape

    ref = jax.block_until_ready(_reference_forward(x, params))
    # bf16 matmul path vs. f32 HIGHEST reference -> slightly looser tolerance.
    assert jnp.allclose(out, ref, rtol=2e-2, atol=2e-2), (
        float(jnp.max(jnp.abs(out - ref))))

    print("KERNEL_OK")
</pallas_src>

<mosaic_0001>
module attributes {stable_mosaic.version = 11 : i64} {
  func.func @_bn_relu_conv1x1_bn_relu_kernel(%arg0: i32, %arg1: memref<512x4xf32, #tpu.memory_space<vmem>>, %arg2: memref<1x4xf32, #tpu.memory_space<vmem>>, %arg3: memref<1x4xf32, #tpu.memory_space<vmem>>, %arg4: memref<4x16xbf16, #tpu.memory_space<vmem>>, %arg5: memref<1x16xf32, #tpu.memory_space<vmem>>, %arg6: memref<1x16xf32, #tpu.memory_space<vmem>>, %arg7: memref<1x16xf32, #tpu.memory_space<vmem>>, %arg8: memref<512x16xbf16, #tpu.memory_space<vmem>>) attributes {dimension_semantics = [#tpu.dimension_semantics<parallel>], iteration_bounds = array<i64: 1>, scalar_prefetch = 0 : i64, scratch_operands = 0 : i64, tpu.core_type = #tpu.core_type<tc>, window_params = [{transform_indices = @transform_0, window_bounds = array<i64: 512, 4>}, {pipeline_mode = #tpu.pipeline_mode<synchronous>, transform_indices = @transform_1, window_bounds = array<i64: 1, 4>}, {pipeline_mode = #tpu.pipeline_mode<synchronous>, transform_indices = @transform_2, window_bounds = array<i64: 1, 4>}, {pipeline_mode = #tpu.pipeline_mode<synchronous>, transform_indices = @transform_3, window_bounds = array<i64: 4, 16>}, {pipeline_mode = #tpu.pipeline_mode<synchronous>, transform_indices = @transform_4, window_bounds = array<i64: 1, 16>}, {pipeline_mode = #tpu.pipeline_mode<synchronous>, transform_indices = @transform_5, window_bounds = array<i64: 1, 16>}, {pipeline_mode = #tpu.pipeline_mode<synchronous>, transform_indices = @transform_6, window_bounds = array<i64: 1, 16>}, {transform_indices = @transform_7, window_bounds = array<i64: 512, 16>}]} {
    %c0 = arith.constant 0 : index
    %c0_0 = arith.constant 0 : index
    %0 = vector.load %arg1[%c0, %c0_0] : memref<512x4xf32, #tpu.memory_space<vmem>>, vector<512x4xf32>
    %c0_1 = arith.constant 0 : index
    %c0_2 = arith.constant 0 : index
    %1 = vector.load %arg2[%c0_1, %c0_2] : memref<1x4xf32, #tpu.memory_space<vmem>>, vector<1x4xf32>
    %2 = vector.broadcast %1 : vector<1x4xf32> to vector<512x4xf32>
    %3 = arith.mulf %0, %2 : vector<512x4xf32>
    %c0_3 = arith.constant 0 : index
    %c0_4 = arith.constant 0 : index
    %4 = vector.load %arg3[%c0_3, %c0_4] : memref<1x4xf32, #tpu.memory_space<vmem>>, vector<1x4xf32>
    %5 = vector.broadcast %4 : vector<1x4xf32> to vector<512x4xf32>
    %6 = arith.addf %3, %5 : vector<512x4xf32>
    %cst = arith.constant 0.000000e+00 : f32
    %7 = vector.broadcast %cst : f32 to vector<512x4xf32>
    %8 = arith.maximumf %6, %7 : vector<512x4xf32>
    %9 = arith.truncf %8 : vector<512x4xf32> to vector<512x4xbf16>
    %c0_5 = arith.constant 0 : index
    %c0_6 = arith.constant 0 : index
    %10 = vector.load %arg4[%c0_5, %c0_6] : memref<4x16xbf16, #tpu.memory_space<vmem>>, vector<4x16xbf16>
    %cst_7 = arith.constant dense<0.000000e+00> : vector<512x16xf32>
    %11 = tpu.matmul %9, %10, %cst_7 {dimension_numbers = #tpu.dot_dimension_numbers<[1], [0], [0], [1], [0, 0, 1, 1], [], []>} : vector<512x4xbf16>, vector<4x16xbf16>, vector<512x16xf32> -> vector<512x16xf32>
    %c0_8 = arith.constant 0 : index
    %c0_9 = arith.constant 0 : index
    %12 = vector.load %arg5[%c0_8, %c0_9] : memref<1x16xf32, #tpu.memory_space<vmem>>, vector<1x16xf32>
    %13 = vector.broadcast %12 : vector<1x16xf32> to vector<512x16xf32>
    %14 = arith.addf %11, %13 : vector<512x16xf32>
    %c0_10 = arith.constant 0 : index
    %c0_11 = arith.constant 0 : index
    %15 = vector.load %arg6[%c0_10, %c0_11] : memref<1x16xf32, #tpu.memory_space<vmem>>, vector<1x16xf32>
    %16 = vector.broadcast %15 : vector<1x16xf32> to vector<512x16xf32>
    %17 = arith.mulf %14, %16 : vector<512x16xf32>
    %c0_12 = arith.constant 0 : index
    %c0_13 = arith.constant 0 : index
    %18 = vector.load %arg7[%c0_12, %c0_13] : memref<1x16xf32, #tpu.memory_space<vmem>>, vector<1x16xf32>
    %19 = vector.broadcast %18 : vector<1x16xf32> to vector<512x16xf32>
    %20 = arith.addf %17, %19 : vector<512x16xf32>
    %cst_14 = arith.constant 0.000000e+00 : f32
    %21 = vector.broadcast %cst_14 : f32 to vector<512x16xf32>
    %22 = arith.maximumf %20, %21 : vector<512x16xf32>
    %23 = arith.truncf %22 : vector<512x16xf32> to vector<512x16xbf16>
    %c0_15 = arith.constant 0 : index
    %c0_16 = arith.constant 0 : index
    %24 = vector.load %arg8[%c0_15, %c0_16] : memref<512x16xbf16, #tpu.memory_space<vmem>>, vector<512x16xbf16>
    tpu.vector_store %arg8[%c0_15, %c0_16], %23 {strides = array<i32>} : memref<512x16xbf16, #tpu.memory_space<vmem>>, vector<512x16xbf16>,
    return
  }
  func.func @transform_0(%arg0: i32) -> (i32, i32) {
    %c0_i32 = arith.constant 0 : i32
    %c0_i32_0 = arith.constant 0 : i32
    return %arg0, %c0_i32 : i32, i32
  }
  func.func @transform_1(%arg0: i32) -> (i32, i32) {
    %c0_i32 = arith.constant 0 : i32
    %c0_i32_0 = arith.constant 0 : i32
    %c0_i32_1 = arith.constant 0 : i32
    return %c0_i32, %c0_i32_0 : i32, i32
  }
  func.func @transform_2(%arg0: i32) -> (i32, i32) {
    %c0_i32 = arith.constant 0 : i32
    %c0_i32_0 = arith.constant 0 : i32
    %c0_i32_1 = arith.constant 0 : i32
    return %c0_i32, %c0_i32_0 : i32, i32
  }
  func.func @transform_3(%arg0: i32) -> (i32, i32) {
    %c0_i32 = arith.constant 0 : i32
    %c0_i32_0 = arith.constant 0 : i32
    %c0_i32_1 = arith.constant 0 : i32
    return %c0_i32, %c0_i32_0 : i32, i32
  }
  func.func @transform_4(%arg0: i32) -> (i32, i32) {
    %c0_i32 = arith.constant 0 : i32
    %c0_i32_0 = arith.constant 0 : i32
    %c0_i32_1 = arith.constant 0 : i32
    return %c0_i32, %c0_i32_0 : i32, i32
  }
  func.func @transform_5(%arg0: i32) -> (i32, i32) {
    %c0_i32 = arith.constant 0 : i32
    %c0_i32_0 = arith.constant 0 : i32
    %c0_i32_1 = arith.constant 0 : i32
    return %c0_i32, %c0_i32_0 : i32, i32
  }
  func.func @transform_6(%arg0: i32) -> (i32, i32) {
    %c0_i32 = arith.constant 0 : i32
    %c0_i32_0 = arith.constant 0 : i32
    %c0_i32_1 = arith.constant 0 : i32
    return %c0_i32, %c0_i32_0 : i32, i32
  }
  func.func @transform_7(%arg0: i32) -> (i32, i32) {
    %c0_i32 = arith.constant 0 : i32
    %c0_i32_0 = arith.constant 0 : i32
    return %arg0, %c0_i32 : i32, i32
  }
}

module attributes {stable_mosaic.version = 11 : i64} {
  func.func @_conv3x3_kernel(%arg0: i32, %arg1: i32, %arg2: memref<1x16x18x16xbf16, #tpu.memory_space<vmem>>, %arg3: memref<1x16x18x16xbf16, #tpu.memory_space<vmem>>, %arg4: memref<144x4xbf16, #tpu.memory_space<vmem>>, %arg5: memref<1x4xf32, #tpu.memory_space<vmem>>, %arg6: memref<1x16x16x4xf32, #tpu.memory_space<vmem>>) attributes {dimension_semantics = [#tpu.dimension_semantics<parallel>, #tpu.dimension_semantics<parallel>], iteration_bounds = array<i64: 2, 1>, scalar_prefetch = 0 : i64, scratch_operands = 0 : i64, tpu.core_type = #tpu.core_type<tc>, window_params = [{transform_indices = @transform_0, window_bounds = array<i64: 1, 16, 18, 16>}, {transform_indices = @transform_1, window_bounds = array<i64: 1, 16, 18, 16>}, {pipeline_mode = #tpu.pipeline_mode<synchronous>, transform_indices = @transform_2, window_bounds = array<i64: 144, 4>}, {pipeline_mode = #tpu.pipeline_mode<synchronous>, transform_indices = @transform_3, window_bounds = array<i64: 1, 4>}, {transform_indices = @transform_4, window_bounds = array<i64: 1, 16, 16, 4>}]} {
    %c0 = arith.constant 0 : index
    %c0_0 = arith.constant 0 : index
    %c0_1 = arith.constant 0 : index
    %c0_2 = arith.constant 0 : index
    %0 = vector.load %arg2[%c0, %c0_0, %c0_1, %c0_2] : memref<1x16x18x16xbf16, #tpu.memory_space<vmem>>, vector<1x16x18x16xbf16>
    %1 = vector.shape_cast %0 : vector<1x16x18x16xbf16> to vector<16x18x16xbf16>
    %c0_3 = arith.constant 0 : index
    %c0_4 = arith.constant 0 : index
    %c0_5 = arith.constant 0 : index
    %c0_6 = arith.constant 0 : index
    %2 = vector.load %arg3[%c0_3, %c0_4, %c0_5, %c0_6] : memref<1x16x18x16xbf16, #tpu.memory_space<vmem>>, vector<1x16x18x16xbf16>
    %3 = vector.shape_cast %2 : vector<1x16x18x16xbf16> to vector<16x18x16xbf16>
    %4 = tpu.concatenate %1, %3 in 0 : vector<16x18x16xbf16>, vector<16x18x16xbf16> -> vector<32x18x16xbf16>
    %5 = vector.extract_strided_slice %4 {offsets = [0, 0, 0], sizes = [16, 16, 16], strides = [1, 1, 1]} : vector<32x18x16xbf16> to vector<16x16x16xbf16>
    %6 = vector.shape_cast %5 : vector<16x16x16xbf16> to vector<256x16xbf16>
    %7 = vector.extract_strided_slice %4 {offsets = [0, 1, 0], sizes = [16, 16, 16], strides = [1, 1, 1]} : vector<32x18x16xbf16> to vector<16x16x16xbf16>
    %8 = vector.shape_cast %7 : vector<16x16x16xbf16> to vector<256x16xbf16>
    %9 = vector.extract_strided_slice %4 {offsets = [0, 2, 0], sizes = [16, 16, 16], strides = [1, 1, 1]} : vector<32x18x16xbf16> to vector<16x16x16xbf16>
    %10 = vector.shape_cast %9 : vector<16x16x16xbf16> to vector<256x16xbf16>
    %11 = vector.extract_strided_slice %4 {offsets = [1, 0, 0], sizes = [16, 16, 16], strides = [1, 1, 1]} : vector<32x18x16xbf16> to vector<16x16x16xbf16>
    %12 = vector.shape_cast %11 : vector<16x16x16xbf16> to vector<256x16xbf16>
    %13 = vector.extract_strided_slice %4 {offsets = [1, 1, 0], sizes = [16, 16, 16], strides = [1, 1, 1]} : vector<32x18x16xbf16> to vector<16x16x16xbf16>
    %14 = vector.shape_cast %13 : vector<16x16x16xbf16> to vector<256x16xbf16>
    %15 = vector.extract_strided_slice %4 {offsets = [1, 2, 0], sizes = [16, 16, 16], strides = [1, 1, 1]} : vector<32x18x16xbf16> to vector<16x16x16xbf16>
    %16 = vector.shape_cast %15 : vector<16x16x16xbf16> to vector<256x16xbf16>
    %17 = vector.extract_strided_slice %4 {offsets = [2, 0, 0], sizes = [16, 16, 16], strides = [1, 1, 1]} : vector<32x18x16xbf16> to vector<16x16x16xbf16>
    %18 = vector.shape_cast %17 : vector<16x16x16xbf16> to vector<256x16xbf16>
    %19 = vector.extract_strided_slice %4 {offsets = [2, 1, 0], sizes = [16, 16, 16], strides = [1, 1, 1]} : vector<32x18x16xbf16> to vector<16x16x16xbf16>
    %20 = vector.shape_cast %19 : vector<16x16x16xbf16> to vector<256x16xbf16>
    %21 = vector.extract_strided_slice %4 {offsets = [2, 2, 0], sizes = [16, 16, 16], strides = [1, 1, 1]} : vector<32x18x16xbf16> to vector<16x16x16xbf16>
    %22 = vector.shape_cast %21 : vector<16x16x16xbf16> to vector<256x16xbf16>
    %23 = tpu.concatenate %6, %8, %10, %12, %14, %16, %18, %20, %22 in 1 : vector<256x16xbf16>, vector<256x16xbf16>, vector<256x16xbf16>, vector<256x16xbf16>, vector<256x16xbf16>, vector<256x16xbf16>, vector<256x16xbf16>, vector<256x16xbf16>, vector<256x16xbf16> -> vector<256x144xbf16>
    %c0_7 = arith.constant 0 : index
    %c0_8 = arith.constant 0 : index
    %24 = vector.load %arg4[%c0_7, %c0_8] : memref<144x4xbf16, #tpu.memory_space<vmem>>, vector<144x4xbf16>
    %cst = arith.constant dense<0.000000e+00> : vector<256x4xf32>
    %25 = tpu.matmul %23, %24, %cst {dimension_numbers = #tpu.dot_dimension_numbers<[1], [0], [0], [1], [0, 0, 1, 1], [], []>} : vector<256x144xbf16>, vector<144x4xbf16>, vector<256x4xf32> -> vector<256x4xf32>
    %c0_9 = arith.constant 0 : index
    %c0_10 = arith.constant 0 : index
    %26 = vector.load %arg5[%c0_9, %c0_10] : memref<1x4xf32, #tpu.memory_space<vmem>>, vector<1x4xf32>
    %27 = vector.broadcast %26 : vector<1x4xf32> to vector<256x4xf32>
    %28 = arith.addf %25, %27 : vector<256x4xf32>
    %29 = vector.shape_cast %28 : vector<256x4xf32> to vector<16x16x4xf32>
    %c0_11 = arith.constant 0 : index
    %c0_12 = arith.constant 0 : index
    %c0_13 = arith.constant 0 : index
    %c0_14 = arith.constant 0 : index
    %30 = vector.load %arg6[%c0_11, %c0_12, %c0_13, %c0_14] : memref<1x16x16x4xf32, #tpu.memory_space<vmem>>, vector<1x16x16x4xf32>
    %31 = vector.shape_cast %30 : vector<1x16x16x4xf32> to vector<16x16x4xf32>
    %32 = vector.shape_cast %29 : vector<16x16x4xf32> to vector<1x16x16x4xf32>
    tpu.vector_store %arg6[%c0_11, %c0_12, %c0_13, %c0_14], %32 {strides = array<i32>} : memref<1x16x16x4xf32, #tpu.memory_space<vmem>>, vector<1x16x16x4xf32>,
    return
  }
  func.func @transform_0(%arg0: i32, %arg1: i32) -> (i32, i32, i32, i32) {
    %c0_i32 = arith.constant 0 : i32
    %c0_i32_0 = arith.constant 0 : i32
    %c0_i32_1 = arith.constant 0 : i32
    return %arg0, %arg1, %c0_i32, %c0_i32_0 : i32, i32, i32, i32
  }
  func.func @transform_1(%arg0: i32, %arg1: i32) -> (i32, i32, i32, i32) {
    %c1_i32 = arith.constant 1 : i32
    %0 = arith.addi %arg1, %c1_i32 : i32
    %c0_i32 = arith.constant 0 : i32
    %c0_i32_0 = arith.constant 0 : i32
    %c0_i32_1 = arith.constant 0 : i32
    return %arg0, %0, %c0_i32, %c0_i32_0 : i32, i32, i32, i32
  }
  func.func @transform_2(%arg0: i32, %arg1: i32) -> (i32, i32) {
    %c0_i32 = arith.constant 0 : i32
    %c0_i32_0 = arith.constant 0 : i32
    %c0_i32_1 = arith.constant 0 : i32
    return %c0_i32, %c0_i32_0 : i32, i32
  }
  func.func @transform_3(%arg0: i32, %arg1: i32) -> (i32, i32) {
    %c0_i32 = arith.constant 0 : i32
    %c0_i32_0 = arith.constant 0 : i32
    %c0_i32_1 = arith.constant 0 : i32
    return %c0_i32, %c0_i32_0 : i32, i32
  }
  func.func @transform_4(%arg0: i32, %arg1: i32) -> (i32, i32, i32, i32) {
    %c0_i32 = arith.constant 0 : i32
    %c0_i32_0 = arith.constant 0 : i32
    %c0_i32_1 = arith.constant 0 : i32
    return %arg0, %arg1, %c0_i32, %c0_i32_0 : i32, i32, i32, i32
  }
}

module attributes {stable_mosaic.version = 11 : i64} {
  func.func @_bn_relu_conv1x1_bn_relu_kernel(%arg0: i32, %arg1: memref<512x8xf32, #tpu.memory_space<vmem>>, %arg2: memref<1x8xf32, #tpu.memory_space<vmem>>, %arg3: memref<1x8xf32, #tpu.memory_space<vmem>>, %arg4: memref<8x16xbf16, #tpu.memory_space<vmem>>, %arg5: memref<1x16xf32, #tpu.memory_space<vmem>>, %arg6: memref<1x16xf32, #tpu.memory_space<vmem>>, %arg7: memref<1x16xf32, #tpu.memory_space<vmem>>, %arg8: memref<512x16xbf16, #tpu.memory_space<vmem>>) attributes {dimension_semantics = [#tpu.dimension_semantics<parallel>], iteration_bounds = array<i64: 1>, scalar_prefetch = 0 : i64, scratch_operands = 0 : i64, tpu.core_type = #tpu.core_type<tc>, window_params = [{transform_indices = @transform_0, window_bounds = array<i64: 512, 8>}, {pipeline_mode = #tpu.pipeline_mode<synchronous>, transform_indices = @transform_1, window_bounds = array<i64: 1, 8>}, {pipeline_mode = #tpu.pipeline_mode<synchronous>, transform_indices = @transform_2, window_bounds = array<i64: 1, 8>}, {pipeline_mode = #tpu.pipeline_mode<synchronous>, transform_indices = @transform_3, window_bounds = array<i64: 8, 16>}, {pipeline_mode = #tpu.pipeline_mode<synchronous>, transform_indices = @transform_4, window_bounds = array<i64: 1, 16>}, {pipeline_mode = #tpu.pipeline_mode<synchronous>, transform_indices = @transform_5, window_bounds = array<i64: 1, 16>}, {pipeline_mode = #tpu.pipeline_mode<synchronous>, transform_indices = @transform_6, window_bounds = array<i64: 1, 16>}, {transform_indices = @transform_7, window_bounds = array<i64: 512, 16>}]} {
    %c0 = arith.constant 0 : index
    %c0_0 = arith.constant 0 : index
    %0 = vector.load %arg1[%c0, %c0_0] : memref<512x8xf32, #tpu.memory_space<vmem>>, vector<512x8xf32>
    %c0_1 = arith.constant 0 : index
    %c0_2 = arith.constant 0 : index
    %1 = vector.load %arg2[%c0_1, %c0_2] : memref<1x8xf32, #tpu.memory_space<vmem>>, vector<1x8xf32>
    %2 = vector.broadcast %1 : vector<1x8xf32> to vector<512x8xf32>
    %3 = arith.mulf %0, %2 : vector<512x8xf32>
    %c0_3 = arith.constant 0 : index
    %c0_4 = arith.constant 0 : index
    %4 = vector.load %arg3[%c0_3, %c0_4] : memref<1x8xf32, #tpu.memory_space<vmem>>, vector<1x8xf32>
    %5 = vector.broadcast %4 : vector<1x8xf32> to vector<512x8xf32>
    %6 = arith.addf %3, %5 : vector<512x8xf32>
    %cst = arith.constant 0.000000e+00 : f32
    %7 = vector.broadcast %cst : f32 to vector<512x8xf32>
    %8 = arith.maximumf %6, %7 : vector<512x8xf32>
    %9 = arith.truncf %8 : vector<512x8xf32> to vector<512x8xbf16>
    %c0_5 = arith.constant 0 : index
    %c0_6 = arith.constant 0 : index
    %10 = vector.load %arg4[%c0_5, %c0_6] : memref<8x16xbf16, #tpu.memory_space<vmem>>, vector<8x16xbf16>
    %cst_7 = arith.constant dense<0.000000e+00> : vector<512x16xf32>
    %11 = tpu.matmul %9, %10, %cst_7 {dimension_numbers = #tpu.dot_dimension_numbers<[1], [0], [0], [1], [0, 0, 1, 1], [], []>} : vector<512x8xbf16>, vector<8x16xbf16>, vector<512x16xf32> -> vector<512x16xf32>
    %c0_8 = arith.constant 0 : index
    %c0_9 = arith.constant 0 : index
    %12 = vector.load %arg5[%c0_8, %c0_9] : memref<1x16xf32, #tpu.memory_space<vmem>>, vector<1x16xf32>
    %13 = vector.broadcast %12 : vector<1x16xf32> to vector<512x16xf32>
    %14 = arith.addf %11, %13 : vector<512x16xf32>
    %c0_10 = arith.constant 0 : index
    %c0_11 = arith.constant 0 : index
    %15 = vector.load %arg6[%c0_10, %c0_11] : memref<1x16xf32, #tpu.memory_space<vmem>>, vector<1x16xf32>
    %16 = vector.broadcast %15 : vector<1x16xf32> to vector<512x16xf32>
    %17 = arith.mulf %14, %16 : vector<512x16xf32>
    %c0_12 = arith.constant 0 : index
    %c0_13 = arith.constant 0 : index
    %18 = vector.load %arg7[%c0_12, %c0_13] : memref<1x16xf32, #tpu.memory_space<vmem>>, vector<1x16xf32>
    %19 = vector.broadcast %18 : vector<1x16xf32> to vector<512x16xf32>
    %20 = arith.addf %17, %19 : vector<512x16xf32>
    %cst_14 = arith.constant 0.000000e+00 : f32
    %21 = vector.broadcast %cst_14 : f32 to vector<512x16xf32>
    %22 = arith.maximumf %20, %21 : vector<512x16xf32>
    %23 = arith.truncf %22 : vector<512x16xf32> to vector<512x16xbf16>
    %c0_15 = arith.constant 0 : index
    %c0_16 = arith.constant 0 : index
    %24 = vector.load %arg8[%c0_15, %c0_16] : memref<512x16xbf16, #tpu.memory_space<vmem>>, vector<512x16xbf16>
    tpu.vector_store %arg8[%c0_15, %c0_16], %23 {strides = array<i32>} : memref<512x16xbf16, #tpu.memory_space<vmem>>, vector<512x16xbf16>,
    return
  }
  func.func @transform_0(%arg0: i32) -> (i32, i32) {
    %c0_i32 = arith.constant 0 : i32
    %c0_i32_0 = arith.constant 0 : i32
    return %arg0, %c0_i32 : i32, i32
  }
  func.func @transform_1(%arg0: i32) -> (i32, i32) {
    %c0_i32 = arith.constant 0 : i32
    %c0_i32_0 = arith.constant 0 : i32
    %c0_i32_1 = arith.constant 0 : i32
    return %c0_i32, %c0_i32_0 : i32, i32
  }
  func.func @transform_2(%arg0: i32) -> (i32, i32) {
    %c0_i32 = arith.constant 0 : i32
    %c0_i32_0 = arith.constant 0 : i32
    %c0_i32_1 = arith.constant 0 : i32
    return %c0_i32, %c0_i32_0 : i32, i32
  }
  func.func @transform_3(%arg0: i32) -> (i32, i32) {
    %c0_i32 = arith.constant 0 : i32
    %c0_i32_0 = arith.constant 0 : i32
    %c0_i32_1 = arith.constant 0 : i32
    return %c0_i32, %c0_i32_0 : i32, i32
  }
  func.func @transform_4(%arg0: i32) -> (i32, i32) {
    %c0_i32 = arith.constant 0 : i32
    %c0_i32_0 = arith.constant 0 : i32
    %c0_i32_1 = arith.constant 0 : i32
    return %c0_i32, %c0_i32_0 : i32, i32
  }
  func.func @transform_5(%arg0: i32) -> (i32, i32) {
    %c0_i32 = arith.constant 0 : i32
    %c0_i32_0 = arith.constant 0 : i32
    %c0_i32_1 = arith.constant 0 : i32
    return %c0_i32, %c0_i32_0 : i32, i32
  }
  func.func @transform_6(%arg0: i32) -> (i32, i32) {
    %c0_i32 = arith.constant 0 : i32
    %c0_i32_0 = arith.constant 0 : i32
    %c0_i32_1 = arith.constant 0 : i32
    return %c0_i32, %c0_i32_0 : i32, i32
  }
  func.func @transform_7(%arg0: i32) -> (i32, i32) {
    %c0_i32 = arith.constant 0 : i32
    %c0_i32_0 = arith.constant 0 : i32
    return %arg0, %c0_i32 : i32, i32
  }
}

module attributes {stable_mosaic.version = 11 : i64} {
  func.func @_bn_relu_conv1x1_bn_relu_kernel(%arg0: i32, %arg1: memref<512x12xf32, #tpu.memory_space<vmem>>, %arg2: memref<1x12xf32, #tpu.memory_space<vmem>>, %arg3: memref<1x12xf32, #tpu.memory_space<vmem>>, %arg4: memref<12x16xbf16, #tpu.memory_space<vmem>>, %arg5: memref<1x16xf32, #tpu.memory_space<vmem>>, %arg6: memref<1x16xf32, #tpu.memory_space<vmem>>, %arg7: memref<1x16xf32, #tpu.memory_space<vmem>>, %arg8: memref<512x16xbf16, #tpu.memory_space<vmem>>) attributes {dimension_semantics = [#tpu.dimension_semantics<parallel>], iteration_bounds = array<i64: 1>, scalar_prefetch = 0 : i64, scratch_operands = 0 : i64, tpu.core_type = #tpu.core_type<tc>, window_params = [{transform_indices = @transform_0, window_bounds = array<i64: 512, 12>}, {pipeline_mode = #tpu.pipeline_mode<synchronous>, transform_indices = @transform_1, window_bounds = array<i64: 1, 12>}, {pipeline_mode = #tpu.pipeline_mode<synchronous>, transform_indices = @transform_2, window_bounds = array<i64: 1, 12>}, {pipeline_mode = #tpu.pipeline_mode<synchronous>, transform_indices = @transform_3, window_bounds = array<i64: 12, 16>}, {pipeline_mode = #tpu.pipeline_mode<synchronous>, transform_indices = @transform_4, window_bounds = array<i64: 1, 16>}, {pipeline_mode = #tpu.pipeline_mode<synchronous>, transform_indices = @transform_5, window_bounds = array<i64: 1, 16>}, {pipeline_mode = #tpu.pipeline_mode<synchronous>, transform_indices = @transform_6, window_bounds = array<i64: 1, 16>}, {transform_indices = @transform_7, window_bounds = array<i64: 512, 16>}]} {
    %c0 = arith.constant 0 : index
    %c0_0 = arith.constant 0 : index
    %0 = vector.load %arg1[%c0, %c0_0] : memref<512x12xf32, #tpu.memory_space<vmem>>, vector<512x12xf32>
    %c0_1 = arith.constant 0 : index
    %c0_2 = arith.constant 0 : index
    %1 = vector.load %arg2[%c0_1, %c0_2] : memref<1x12xf32, #tpu.memory_space<vmem>>, vector<1x12xf32>
    %2 = vector.broadcast %1 : vector<1x12xf32> to vector<512x12xf32>
    %3 = arith.mulf %0, %2 : vector<512x12xf32>
    %c0_3 = arith.constant 0 : index
    %c0_4 = arith.constant 0 : index
    %4 = vector.load %arg3[%c0_3, %c0_4] : memref<1x12xf32, #tpu.memory_space<vmem>>, vector<1x12xf32>
    %5 = vector.broadcast %4 : vector<1x12xf32> to vector<512x12xf32>
    %6 = arith.addf %3, %5 : vector<512x12xf32>
    %cst = arith.constant 0.000000e+00 : f32
    %7 = vector.broadcast %cst : f32 to vector<512x12xf32>
    %8 = arith.maximumf %6, %7 : vector<512x12xf32>
    %9 = arith.truncf %8 : vector<512x12xf32> to vector<512x12xbf16>
    %c0_5 = arith.constant 0 : index
    %c0_6 = arith.constant 0 : index
    %10 = vector.load %arg4[%c0_5, %c0_6] : memref<12x16xbf16, #tpu.memory_space<vmem>>, vector<12x16xbf16>
    %cst_7 = arith.constant dense<0.000000e+00> : vector<512x16xf32>
    %11 = tpu.matmul %9, %10, %cst_7 {dimension_numbers = #tpu.dot_dimension_numbers<[1], [0], [0], [1], [0, 0, 1, 1], [], []>} : vector<512x12xbf16>, vector<12x16xbf16>, vector<512x16xf32> -> vector<512x16xf32>
    %c0_8 = arith.constant 0 : index
    %c0_9 = arith.constant 0 : index
    %12 = vector.load %arg5[%c0_8, %c0_9] : memref<1x16xf32, #tpu.memory_space<vmem>>, vector<1x16xf32>
    %13 = vector.broadcast %12 : vector<1x16xf32> to vector<512x16xf32>
    %14 = arith.addf %11, %13 : vector<512x16xf32>
    %c0_10 = arith.constant 0 : index
    %c0_11 = arith.constant 0 : index
    %15 = vector.load %arg6[%c0_10, %c0_11] : memref<1x16xf32, #tpu.memory_space<vmem>>, vector<1x16xf32>
    %16 = vector.broadcast %15 : vector<1x16xf32> to vector<512x16xf32>
    %17 = arith.mulf %14, %16 : vector<512x16xf32>
    %c0_12 = arith.constant 0 : index
    %c0_13 = arith.constant 0 : index
    %18 = vector.load %arg7[%c0_12, %c0_13] : memref<1x16xf32, #tpu.memory_space<vmem>>, vector<1x16xf32>
    %19 = vector.broadcast %18 : vector<1x16xf32> to vector<512x16xf32>
    %20 = arith.addf %17, %19 : vector<512x16xf32>
    %cst_14 = arith.constant 0.000000e+00 : f32
    %21 = vector.broadcast %cst_14 : f32 to vector<512x16xf32>
    %22 = arith.maximumf %20, %21 : vector<512x16xf32>
    %23 = arith.truncf %22 : vector<512x16xf32> to vector<512x16xbf16>
    %c0_15 = arith.constant 0 : index
    %c0_16 = arith.constant 0 : index
    %24 = vector.load %arg8[%c0_15, %c0_16] : memref<512x16xbf16, #tpu.memory_space<vmem>>, vector<512x16xbf16>
    tpu.vector_store %arg8[%c0_15, %c0_16], %23 {strides = array<i32>} : memref<512x16xbf16, #tpu.memory_space<vmem>>, vector<512x16xbf16>,
    return
  }
  func.func @transform_0(%arg0: i32) -> (i32, i32) {
    %c0_i32 = arith.constant 0 : i32
    %c0_i32_0 = arith.constant 0 : i32
    return %arg0, %c0_i32 : i32, i32
  }
  func.func @transform_1(%arg0: i32) -> (i32, i32) {
    %c0_i32 = arith.constant 0 : i32
    %c0_i32_0 = arith.constant 0 : i32
    %c0_i32_1 = arith.constant 0 : i32
    return %c0_i32, %c0_i32_0 : i32, i32
  }
  func.func @transform_2(%arg0: i32) -> (i32, i32) {
    %c0_i32 = arith.constant 0 : i32
    %c0_i32_0 = arith.constant 0 : i32
    %c0_i32_1 = arith.constant 0 : i32
    return %c0_i32, %c0_i32_0 : i32, i32
  }
  func.func @transform_3(%arg0: i32) -> (i32, i32) {
    %c0_i32 = arith.constant 0 : i32
    %c0_i32_0 = arith.constant 0 : i32
    %c0_i32_1 = arith.constant 0 : i32
    return %c0_i32, %c0_i32_0 : i32, i32
  }
  func.func @transform_4(%arg0: i32) -> (i32, i32) {
    %c0_i32 = arith.constant 0 : i32
    %c0_i32_0 = arith.constant 0 : i32
    %c0_i32_1 = arith.constant 0 : i32
    return %c0_i32, %c0_i32_0 : i32, i32
  }
  func.func @transform_5(%arg0: i32) -> (i32, i32) {
    %c0_i32 = arith.constant 0 : i32
    %c0_i32_0 = arith.constant 0 : i32
    %c0_i32_1 = arith.constant 0 : i32
    return %c0_i32, %c0_i32_0 : i32, i32
  }
  func.func @transform_6(%arg0: i32) -> (i32, i32) {
    %c0_i32 = arith.constant 0 : i32
    %c0_i32_0 = arith.constant 0 : i32
    %c0_i32_1 = arith.constant 0 : i32
    return %c0_i32, %c0_i32_0 : i32, i32
  }
  func.func @transform_7(%arg0: i32) -> (i32, i32) {
    %c0_i32 = arith.constant 0 : i32
    %c0_i32_0 = arith.constant 0 : i32
    return %arg0, %c0_i32 : i32, i32
  }
}

</mosaic_0001>

<llo_original>
// kernel: dense_block_forward.6
$region0: #{dense_block_forward.6}
  #allocation0 [shape = 'u32[]', space=smem, size = 0x4, offset = 0x4, fixed_abs, tag = 'smem constant byte address 0x4 - core index']
  #allocation1 [shape = 'u32[72,128]{1,0:T(1,128)}', space=vmem, size = 0x9000, scoped, tag = 'internal scratch']
  %s0 = inlined_call_operand.vmem [shape: f32[512,4], index: 0, kind: input, shape index: {}]
  %s1 = inlined_call_operand.vmem [shape: f32[1,4], index: 1, kind: input, shape index: {}]
  %s2 = inlined_call_operand.vmem [shape: f32[1,4], index: 2, kind: input, shape index: {}]
  %s3 = inlined_call_operand.vmem [shape: bf16[4,16], index: 3, kind: input, shape index: {}]
  %s4 = inlined_call_operand.vmem [shape: f32[1,16], index: 4, kind: input, shape index: {}]
  %s5 = inlined_call_operand.vmem [shape: f32[1,16], index: 5, kind: input, shape index: {}]
  %s6 = inlined_call_operand.vmem [shape: f32[1,16], index: 6, kind: input, shape index: {}]
  %s7 = inlined_call_operand.vmem [shape: bf16[512,16], index: 7, kind: output, shape index: {}]
  %s8 = sld [smem:[#allocation0]]
  $region38: #{dense_block_forward.6} parent=0
    _
  %s10 = ssub.s32 1, %s8
  %s11 = scalar_select 0, %s10, %s8
  // Predicated region
  $region2: #{dense_block_forward.6} parent=0 // pred_check
    _
  $region3: #{dense_block_forward.6} parent=0 // pred_check_branch
    %13 = sbr.rel (0) target = $region5
  $region4: #{dense_block_forward.6} parent=0 // pred_region
    _
  $region5: #{dense_block_forward.6} parent=0 // pred_fallthru
    _
  // Predicated region
  $region6: #{dense_block_forward.6} parent=0 // pred_check
    _
  $region7: #{dense_block_forward.6} parent=0 // pred_check_branch
    %15 = sbr.rel (0) target = $region9
  $region8: #{dense_block_forward.6} parent=0 // pred_region
    _
  $region9: #{dense_block_forward.6} parent=0 // pred_fallthru
    _
  // Predicated region
  $region10: #{dense_block_forward.6} parent=0 // pred_check
    _
  $region11: #{dense_block_forward.6} parent=0 // pred_check_branch
    %17 = sbr.rel (0) target = $region13
  $region12: #{dense_block_forward.6} parent=0 // pred_region
    _
  $region13: #{dense_block_forward.6} parent=0 // pred_fallthru
    _
  // Predicated region
  $region14: #{dense_block_forward.6} parent=0 // pred_check
    _
  $region15: #{dense_block_forward.6} parent=0 // pred_check_branch
    %19 = sbr.rel (0) target = $region17
  $region16: #{dense_block_forward.6} parent=0 // pred_region
    _
  $region17: #{dense_block_forward.6} parent=0 // pred_fallthru
    _
  // Predicated region
  $region18: #{dense_block_forward.6} parent=0 // pred_check
    _
  $region19: #{dense_block_forward.6} parent=0 // pred_check_branch
    %21 = sbr.rel (0) target = $region21
  $region20: #{dense_block_forward.6} parent=0 // pred_region
    _
  $region21: #{dense_block_forward.6} parent=0 // pred_fallthru
    _
  // Predicated region
  $region22: #{dense_block_forward.6} parent=0 // pred_check
    _
  $region23: #{dense_block_forward.6} parent=0 // pred_check_branch
    %23 = sbr.rel (0) target = $region25
  $region24: #{dense_block_forward.6} parent=0 // pred_region
    _
  $region25: #{dense_block_forward.6} parent=0 // pred_fallthru
    _
  // Predicated region
  $region26: #{dense_block_forward.6} parent=0 // pred_check
    _
  $region27: #{dense_block_forward.6} parent=0 // pred_check_branch
    %25 = sbr.rel (0) target = $region29
  $region28: #{dense_block_forward.6} parent=0 // pred_region
    _
  $region29: #{dense_block_forward.6} parent=0 // pred_fallthru
    _
  %v27 = vld [vmem:[%s0] sm:$0xff]
  %v28 = vld [vmem:[%s0 + $0x8] sm:$0xff]
  %v29 = vld [vmem:[%s0 + $0x10] sm:$0xff]
  %v30 = vld [vmem:[%s0 + $0x18] sm:$0xff]
  %v31 = vld [vmem:[%s0 + $0x20] sm:$0xff]
  %v32 = vld [vmem:[%s0 + $0x28] sm:$0xff]
  %v33 = vld [vmem:[%s0 + $0x30] sm:$0xff]
  %v34 = vld [vmem:[%s0 + $0x38] sm:$0xff]
  %v35 = vld [vmem:[%s0 + $0x40] sm:$0xff]
  %v36 = vld [vmem:[%s0 + $0x48] sm:$0xff]
  %v37 = vld [vmem:[%s0 + $0x50] sm:$0xff]
  %v38 = vld [vmem:[%s0 + $0x58] sm:$0xff]
  %v39 = vld [vmem:[%s0 + $0x60] sm:$0xff]
  %v40 = vld [vmem:[%s0 + $0x68] sm:$0xff]
  %v41 = vld [vmem:[%s0 + $0x70] sm:$0xff]
  %v42 = vld [vmem:[%s0 + $0x78] sm:$0xff]
  %v43 = vld [vmem:[%s0 + $0x80] sm:$0xff]
  %v44 = vld [vmem:[%s0 + $0x88] sm:$0xff]
  %v45 = vld [vmem:[%s0 + $0x90] sm:$0xff]
  %v46 = vld [vmem:[%s0 + $0x98] sm:$0xff]
  %v47 = vld [vmem:[%s0 + $0xa0] sm:$0xff]
  %v48 = vld [vmem:[%s0 + $0xa8] sm:$0xff]
  %v49 = vld [vmem:[%s0 + $0xb0] sm:$0xff]
  %v50 = vld [vmem:[%s0 + $0xb8] sm:$0xff]
  %v51 = vld [vmem:[%s0 + $0xc0] sm:$0xff]
  %v52 = vld [vmem:[%s0 + $0xc8] sm:$0xff]
  %v53 = vld [vmem:[%s0 + $0xd0] sm:$0xff]
  %v54 = vld [vmem:[%s0 + $0xd8] sm:$0xff]
  %v55 = vld [vmem:[%s0 + $0xe0] sm:$0xff]
  %v56 = vld [vmem:[%s0 + $0xe8] sm:$0xff]
  %v57 = vld [vmem:[%s0 + $0xf0] sm:$0xff]
  %v58 = vld [vmem:[%s0 + $0xf8] sm:$0xff]
  %v59 = vld [vmem:[%s0 + $0x100] sm:$0xff]
  %v60 = vld [vmem:[%s0 + $0x108] sm:$0xff]
  %v61 = vld [vmem:[%s0 + $0x110] sm:$0xff]
  %v62 = vld [vmem:[%s0 + $0x118] sm:$0xff]
  %v63 = vld [vmem:[%s0 + $0x120] sm:$0xff]
  %v64 = vld [vmem:[%s0 + $0x128] sm:$0xff]
  %v65 = vld [vmem:[%s0 + $0x130] sm:$0xff]
  %v66 = vld [vmem:[%s0 + $0x138] sm:$0xff]
  %v67 = vld [vmem:[%s0 + $0x140] sm:$0xff]
  %v68 = vld [vmem:[%s0 + $0x148] sm:$0xff]
  %v69 = vld [vmem:[%s0 + $0x150] sm:$0xff]
  %v70 = vld [vmem:[%s0 + $0x158] sm:$0xff]
  %v71 = vld [vmem:[%s0 + $0x160] sm:$0xff]
  %v72 = vld [vmem:[%s0 + $0x168] sm:$0xff]
  %v73 = vld [vmem:[%s0 + $0x170] sm:$0xff]
  %v74 = vld [vmem:[%s0 + $0x178] sm:$0xff]
  %v75 = vld [vmem:[%s0 + $0x180] sm:$0xff]
  %v76 = vld [vmem:[%s0 + $0x188] sm:$0xff]
  %v77 = vld [vmem:[%s0 + $0x190] sm:$0xff]
  %v78 = vld [vmem:[%s0 + $0x198] sm:$0xff]
  %v79 = vld [vmem:[%s0 + $0x1a0] sm:$0xff]
  %v80 = vld [vmem:[%s0 + $0x1a8] sm:$0xff]
  %v81 = vld [vmem:[%s0 + $0x1b0] sm:$0xff]
  %v82 = vld [vmem:[%s0 + $0x1b8] sm:$0xff]
  %v83 = vld [vmem:[%s0 + $0x1c0] sm:$0xff]
  %v84 = vld [vmem:[%s0 + $0x1c8] sm:$0xff]
  %v85 = vld [vmem:[%s0 + $0x1d0] sm:$0xff]
  %v86 = vld [vmem:[%s0 + $0x1d8] sm:$0xff]
  %v87 = vld [vmem:[%s0 + $0x1e0] sm:$0xff]
  %v88 = vld [vmem:[%s0 + $0x1e8] sm:$0xff]
  %v89 = vld [vmem:[%s0 + $0x1f0] sm:$0xff]
  %v90 = vld [vmem:[%s0 + $0x1f8] sm:$0xff]
  %v91 = vld [vmem:[%s1] sm:$0x1]
  %v93 = vperm.slane %v91, 0
  %v95 = vmul.f32 %v27, %v93
  %v96 = vmul.f32 %v28, %v93
  %v97 = vmul.f32 %v29, %v93
  %v98 = vmul.f32 %v30, %v93
  %v99 = vmul.f32 %v31, %v93
  %v100 = vmul.f32 %v32, %v93
  %v101 = vmul.f32 %v33, %v93
  %v102 = vmul.f32 %v34, %v93
  %v103 = vmul.f32 %v35, %v93
  %v104 = vmul.f32 %v36, %v93
  %v105 = vmul.f32 %v37, %v93
  %v106 = vmul.f32 %v38, %v93
  %v107 = vmul.f32 %v39, %v93
  %v108 = vmul.f32 %v40, %v93
  %v109 = vmul.f32 %v41, %v93
  %v110 = vmul.f32 %v42, %v93
  %v111 = vmul.f32 %v43, %v93
  %v112 = vmul.f32 %v44, %v93
  %v113 = vmul.f32 %v45, %v93
  %v114 = vmul.f32 %v46, %v93
  %v115 = vmul.f32 %v47, %v93
  %v116 = vmul.f32 %v48, %v93
  %v117 = vmul.f32 %v49, %v93
  %v118 = vmul.f32 %v50, %v93
  %v119 = vmul.f32 %v51, %v93
  %v120 = vmul.f32 %v52, %v93
  %v121 = vmul.f32 %v53, %v93
  %v122 = vmul.f32 %v54, %v93
  %v123 = vmul.f32 %v55, %v93
  %v124 = vmul.f32 %v56, %v93
  %v125 = vmul.f32 %v57, %v93
  %v126 = vmul.f32 %v58, %v93
  %v127 = vmul.f32 %v59, %v93
  %v128 = vmul.f32 %v60, %v93
  %v129 = vmul.f32 %v61, %v93
  %v130 = vmul.f32 %v62, %v93
  %v131 = vmul.f32 %v63, %v93
  %v132 = vmul.f32 %v64, %v93
  %v133 = vmul.f32 %v65, %v93
  %v134 = vmul.f32 %v66, %v93
  %v135 = vmul.f32 %v67, %v93
  %v136 = vmul.f32 %v68, %v93
  %v137 = vmul.f32 %v69, %v93
  %v138 = vmul.f32 %v70, %v93
  %v139 = vmul.f32 %v71, %v93
  %v140 = vmul.f32 %v72, %v93
  %v141 = vmul.f32 %v73, %v93
  %v142 = vmul.f32 %v74, %v93
  %v143 = vmul.f32 %v75, %v93
  %v144 = vmul.f32 %v76, %v93
  %v145 = vmul.f32 %v77, %v93
  %v146 = vmul.f32 %v78, %v93
  %v147 = vmul.f32 %v79, %v93
  %v148 = vmul.f32 %v80, %v93
  %v149 = vmul.f32 %v81, %v93
  %v150 = vmul.f32 %v82, %v93
  %v151 = vmul.f32 %v83, %v93
  %v152 = vmul.f32 %v84, %v93
  %v153 = vmul.f32 %v85, %v93
  %v154 = vmul.f32 %v86, %v93
  %v155 = vmul.f32 %v87, %v93
  %v156 = vmul.f32 %v88, %v93
  %v157 = vmul.f32 %v89, %v93
  %v158 = vmul.f32 %v90, %v93
  %v159 = vld [vmem:[%s2] sm:$0x1]
  %v161 = vperm.slane %v159, 0
  %v163 = vadd.f32 %v95, %v161
  %v164 = vadd.f32 %v96, %v161
  %v165 = vadd.f32 %v97, %v161
  %v166 = vadd.f32 %v98, %v161
  %v167 = vadd.f32 %v99, %v161
  %v168 = vadd.f32 %v100, %v161
  %v169 = vadd.f32 %v101, %v161
  %v170 = vadd.f32 %v102, %v161
  %v171 = vadd.f32 %v103, %v161
  %v172 = vadd.f32 %v104, %v161
  %v173 = vadd.f32 %v105, %v161
  %v174 = vadd.f32 %v106, %v161
  %v175 = vadd.f32 %v107, %v161
  %v176 = vadd.f32 %v108, %v161
  %v177 = vadd.f32 %v109, %v161
  %v178 = vadd.f32 %v110, %v161
  %v179 = vadd.f32 %v111, %v161
  %v180 = vadd.f32 %v112, %v161
  %v181 = vadd.f32 %v113, %v161
  %v182 = vadd.f32 %v114, %v161
  %v183 = vadd.f32 %v115, %v161
  %v184 = vadd.f32 %v116, %v161
  %v185 = vadd.f32 %v117, %v161
  %v186 = vadd.f32 %v118, %v161
  %v187 = vadd.f32 %v119, %v161
  %v188 = vadd.f32 %v120, %v161
  %v189 = vadd.f32 %v121, %v161
  %v190 = vadd.f32 %v122, %v161
  %v191 = vadd.f32 %v123, %v161
  %v192 = vadd.f32 %v124, %v161
  %v193 = vadd.f32 %v125, %v161
  %v194 = vadd.f32 %v126, %v161
  %v195 = vadd.f32 %v127, %v161
  %v196 = vadd.f32 %v128, %v161
  %v197 = vadd.f32 %v129, %v161
  %v198 = vadd.f32 %v130, %v161
  %v199 = vadd.f32 %v131, %v161
  %v200 = vadd.f32 %v132, %v161
  %v201 = vadd.f32 %v133, %v161
  %v202 = vadd.f32 %v134, %v161
  %v203 = vadd.f32 %v135, %v161
  %v204 = vadd.f32 %v136, %v161
  %v205 = vadd.f32 %v137, %v161
  %v206 = vadd.f32 %v138, %v161
  %v207 = vadd.f32 %v139, %v161
  %v208 = vadd.f32 %v140, %v161
  %v209 = vadd.f32 %v141, %v161
  %v210 = vadd.f32 %v142, %v161
  %v211 = vadd.f32 %v143, %v161
  %v212 = vadd.f32 %v144, %v161
  %v213 = vadd.f32 %v145, %v161
  %v214 = vadd.f32 %v146, %v161
  %v215 = vadd.f32 %v147, %v161
  %v216 = vadd.f32 %v148, %v161
  %v217 = vadd.f32 %v149, %v161
  %v218 = vadd.f32 %v150, %v161
  %v219 = vadd.f32 %v151, %v161
  %v220 = vadd.f32 %v152, %v161
  %v221 = vadd.f32 %v153, %v161
  %v222 = vadd.f32 %v154, %v161
  %v223 = vadd.f32 %v155, %v161
  %v224 = vadd.f32 %v156, %v161
  %v225 = vadd.f32 %v157, %v161
  %v226 = vadd.f32 %v158, %v161
  %v227 = vmax.f32 %v163, 0.0
  %v228 = vmax.f32 %v164, 0.0
  %v229 = vmax.f32 %v165, 0.0
  %v230 = vmax.f32 %v166, 0.0
  %v231 = vmax.f32 %v167, 0.0
  %v232 = vmax.f32 %v168, 0.0
  %v233 = vmax.f32 %v169, 0.0
  %v234 = vmax.f32 %v170, 0.0
  %v235 = vmax.f32 %v171, 0.0
  %v236 = vmax.f32 %v172, 0.0
  %v237 = vmax.f32 %v173, 0.0
  %v238 = vmax.f32 %v174, 0.0
  %v239 = vmax.f32 %v175, 0.0
  %v240 = vmax.f32 %v176, 0.0
  %v241 = vmax.f32 %v177, 0.0
  %v242 = vmax.f32 %v178, 0.0
  %v243 = vmax.f32 %v179, 0.0
  %v244 = vmax.f32 %v180, 0.0
  %v245 = vmax.f32 %v181, 0.0
  %v246 = vmax.f32 %v182, 0.0
  %v247 = vmax.f32 %v183, 0.0
  %v248 = vmax.f32 %v184, 0.0
  %v249 = vmax.f32 %v185, 0.0
  %v250 = vmax.f32 %v186, 0.0
  %v251 = vmax.f32 %v187, 0.0
  %v252 = vmax.f32 %v188, 0.0
  %v253 = vmax.f32 %v189, 0.0
  %v254 = vmax.f32 %v190, 0.0
  %v255 = vmax.f32 %v191, 0.0
  %v256 = vmax.f32 %v192, 0.0
  %v257 = vmax.f32 %v193, 0.0
  %v258 = vmax.f32 %v194, 0.0
  %v259 = vmax.f32 %v195, 0.0
  %v260 = vmax.f32 %v196, 0.0
  %v261 = vmax.f32 %v197, 0.0
  %v262 = vmax.f32 %v198, 0.0
  %v263 = vmax.f32 %v199, 0.0
  %v264 = vmax.f32 %v200, 0.0
  %v265 = vmax.f32 %v201, 0.0
  %v266 = vmax.f32 %v202, 0.0
  %v267 = vmax.f32 %v203, 0.0
  %v268 = vmax.f32 %v204, 0.0
  %v269 = vmax.f32 %v205, 0.0
  %v270 = vmax.f32 %v206, 0.0
  %v271 = vmax.f32 %v207, 0.0
  %v272 = vmax.f32 %v208, 0.0
  %v273 = vmax.f32 %v209, 0.0
  %v274 = vmax.f32 %v210, 0.0
  %v275 = vmax.f32 %v211, 0.0
  %v276 = vmax.f32 %v212, 0.0
  %v277 = vmax.f32 %v213, 0.0
  %v278 = vmax.f32 %v214, 0.0
  %v279 = vmax.f32 %v215, 0.0
  %v280 = vmax.f32 %v216, 0.0
  %v281 = vmax.f32 %v217, 0.0
  %v282 = vmax.f32 %v218, 0.0
  %v283 = vmax.f32 %v219, 0.0
  %v284 = vmax.f32 %v220, 0.0
  %v285 = vmax.f32 %v221, 0.0
  %v286 = vmax.f32 %v222, 0.0
  %v287 = vmax.f32 %v223, 0.0
  %v288 = vmax.f32 %v224, 0.0
  %v289 = vmax.f32 %v225, 0.0
  %v290 = vmax.f32 %v226, 0.0
  %v291 = vpack.c.bf16 %v228, %v227
  %v292 = vpack.c.bf16 %v230, %v229
  %v293 = vpack.c.bf16 %v232, %v231
  %v294 = vpack.c.bf16 %v234, %v233
  %v295 = vpack.c.bf16 %v236, %v235
  %v296 = vpack.c.bf16 %v238, %v237
  %v297 = vpack.c.bf16 %v240, %v239
  %v298 = vpack.c.bf16 %v242, %v241
  %v299 = vpack.c.bf16 %v244, %v243
  %v300 = vpack.c.bf16 %v246, %v245
  %v301 = vpack.c.bf16 %v248, %v247
  %v302 = vpack.c.bf16 %v250, %v249
  %v303 = vpack.c.bf16 %v252, %v251
  %v304 = vpack.c.bf16 %v254, %v253
  %v305 = vpack.c.bf16 %v256, %v255
  %v306 = vpack.c.bf16 %v258, %v257
  %v307 = vpack.c.bf16 %v260, %v259
  %v308 = vpack.c.bf16 %v262, %v261
  %v309 = vpack.c.bf16 %v264, %v263
  %v310 = vpack.c.bf16 %v266, %v265
  %v311 = vpack.c.bf16 %v268, %v267
  %v312 = vpack.c.bf16 %v270, %v269
  %v313 = vpack.c.bf16 %v272, %v271
  %v314 = vpack.c.bf16 %v274, %v273
  %v315 = vpack.c.bf16 %v276, %v275
  %v316 = vpack.c.bf16 %v278, %v277
  %v317 = vpack.c.bf16 %v280, %v279
  %v318 = vpack.c.bf16 %v282, %v281
  %v319 = vpack.c.bf16 %v284, %v283
  %v320 = vpack.c.bf16 %v286, %v285
  %v321 = vpack.c.bf16 %v288, %v287
  %v322 = vpack.c.bf16 %v290, %v289
  %v323 = vld [vmem:[%s3] sm:$0x3]
  %v324 = vld [vmem:[%s4] sm:$0x1]
  %v326 = vperm.slane %v324, 0
  %vm328 = vcmask 31744
  %v330 = vsel %vm328, %v291, 0
  %v333 = vsel %vm328, %v292, 0
  %v336 = vsel %vm328, %v293, 0
  %v339 = vsel %vm328, %v294, 0
  %v342 = vsel %vm328, %v295, 0
  %v345 = vsel %vm328, %v296, 0
  %v348 = vsel %vm328, %v297, 0
  %v351 = vsel %vm328, %v298, 0
  %v354 = vsel %vm328, %v299, 0
  %v357 = vsel %vm328, %v300, 0
  %v360 = vsel %vm328, %v301, 0
  %v363 = vsel %vm328, %v302, 0
  %v366 = vsel %vm328, %v303, 0
  %v369 = vsel %vm328, %v304, 0
  %v372 = vsel %vm328, %v305, 0
  %v375 = vsel %vm328, %v306, 0
  %v378 = vsel %vm328, %v307, 0
  %v381 = vsel %vm328, %v308, 0
  %v384 = vsel %vm328, %v309, 0
  %v387 = vsel %vm328, %v310, 0
  %v390 = vsel %vm328, %v311, 0
  %v393 = vsel %vm328, %v312, 0
  %v396 = vsel %vm328, %v313, 0
  %v399 = vsel %vm328, %v314, 0
  %v402 = vsel %vm328, %v315, 0
  %v405 = vsel %vm328, %v316, 0
  %v408 = vsel %vm328, %v317, 0
  %v411 = vsel %vm328, %v318, 0
  %v414 = vsel %vm328, %v319, 0
  %v417 = vsel %vm328, %v320, 0
  %v420 = vsel %vm328, %v321, 0
  %v423 = vsel %vm328, %v322, 0
  %vm425 = vcmask 1041408
  %v427 = vsel %vm425, %v323, 0
  %429 = vmatpush.bf16.msra.mxu0 0
  %430 = vmatpush.bf16.msra.mxu0 0
  %431 = vmatpush.bf16.msra.mxu0 0
  %432 = vmatpush.bf16.msra.mxu0 0
  %433 = vmatpush.bf16.msra.mxu0 0
  %434 = vmatpush.bf16.msra.mxu0 0
  %435 = vmatpush.bf16.msra.mxu0 0
  %436 = vmatpush.bf16.msra.mxu0 %v427
  %437 = vmatmul.bf16.gmra.mxu0 %v330
  %v438 = vpop.f32.mrf.mxu0
  %v439 = vadd.f32 %v326, %v438
  %v440 = vpop.f32.mrf.mxu0
  %v441 = vadd.f32 %v326, %v440
  %442 = vmatmul.bf16.gmra.mxu0 %v333
  %v443 = vpop.f32.mrf.mxu0
  %v444 = vadd.f32 %v326, %v443
  %v445 = vpop.f32.mrf.mxu0
  %v446 = vadd.f32 %v326, %v445
  %447 = vmatmul.bf16.gmra.mxu0 %v336
  %v448 = vpop.f32.mrf.mxu0
  %v449 = vadd.f32 %v326, %v448
  %v450 = vpop.f32.mrf.mxu0
  %v451 = vadd.f32 %v326, %v450
  %452 = vmatmul.bf16.gmra.mxu0 %v339
  %v453 = vpop.f32.mrf.mxu0
  %v454 = vadd.f32 %v326, %v453
  %v455 = vpop.f32.mrf.mxu0
  %v456 = vadd.f32 %v326, %v455
  %457 = vmatmul.bf16.gmra.mxu0 %v342
  %v458 = vpop.f32.mrf.mxu0
  %v459 = vadd.f32 %v326, %v458
  %v460 = vpop.f32.mrf.mxu0
  %v461 = vadd.f32 %v326, %v460
  %462 = vmatmul.bf16.gmra.mxu0 %v345
  %v463 = vpop.f32.mrf.mxu0
  %v464 = vadd.f32 %v326, %v463
  %v465 = vpop.f32.mrf.mxu0
  %v466 = vadd.f32 %v326, %v465
  %467 = vmatmul.bf16.gmra.mxu0 %v348
  %v468 = vpop.f32.mrf.mxu0
  %v469 = vadd.f32 %v326, %v468
  %v470 = vpop.f32.mrf.mxu0
  %v471 = vadd.f32 %v326, %v470
  %472 = vmatmul.bf16.gmra.mxu0 %v351
  %v473 = vpop.f32.mrf.mxu0
  %v474 = vadd.f32 %v326, %v473
  %v475 = vpop.f32.mrf.mxu0
  %v476 = vadd.f32 %v326, %v475
  %477 = vmatmul.bf16.gmra.mxu0 %v354
  %v478 = vpop.f32.mrf.mxu0
  %v479 = vadd.f32 %v326, %v478
  %v480 = vpop.f32.mrf.mxu0
  %v481 = vadd.f32 %v326, %v480
  %482 = vmatmul.bf16.gmra.mxu0 %v357
  %v483 = vpop.f32.mrf.mxu0
  %v484 = vadd.f32 %v326, %v483
  %v485 = vpop.f32.mrf.mxu0
  %v486 = vadd.f32 %v326, %v485
  %487 = vmatmul.bf16.gmra.mxu0 %v360
  %v488 = vpop.f32.mrf.mxu0
  %v489 = vadd.f32 %v326, %v488
  %v490 = vpop.f32.mrf.mxu0
  %v491 = vadd.f32 %v326, %v490
  %492 = vmatmul.bf16.gmra.mxu0 %v363
  %v493 = vpop.f32.mrf.mxu0
  %v494 = vadd.f32 %v326, %v493
  %v495 = vpop.f32.mrf.mxu0
  %v496 = vadd.f32 %v326, %v495
  %497 = vmatmul.bf16.gmra.mxu0 %v366
  %v498 = vpop.f32.mrf.mxu0
  %v499 = vadd.f32 %v326, %v498
  %v500 = vpop.f32.mrf.mxu0
  %v501 = vadd.f32 %v326, %v500
  %502 = vmatmul.bf16.gmra.mxu0 %v369
  %v503 = vpop.f32.mrf.mxu0
  %v504 = vadd.f32 %v326, %v503
  %v505 = vpop.f32.mrf.mxu0
  %v506 = vadd.f32 %v326, %v505
  %507 = vmatmul.bf16.gmra.mxu0 %v372
  %v508 = vpop.f32.mrf.mxu0
  %v509 = vadd.f32 %v326, %v508
  %v510 = vpop.f32.mrf.mxu0
  %v511 = vadd.f32 %v326, %v510
  %512 = vmatmul.bf16.gmra.mxu0 %v375
  %v513 = vpop.f32.mrf.mxu0
  %v514 = vadd.f32 %v326, %v513
  %v515 = vpop.f32.mrf.mxu0
  %v516 = vadd.f32 %v326, %v515
  %517 = vmatmul.bf16.gmra.mxu0 %v378
  %v518 = vpop.f32.mrf.mxu0
  %v519 = vadd.f32 %v326, %v518
  %v520 = vpop.f32.mrf.mxu0
  %v521 = vadd.f32 %v326, %v520
  %522 = vmatmul.bf16.gmra.mxu0 %v381
  %v523 = vpop.f32.mrf.mxu0
  %v524 = vadd.f32 %v326, %v523
  %v525 = vpop.f32.mrf.mxu0
  %v526 = vadd.f32 %v326, %v525
  %527 = vmatmul.bf16.gmra.mxu0 %v384
  %v528 = vpop.f32.mrf.mxu0
  %v529 = vadd.f32 %v326, %v528
  %v530 = vpop.f32.mrf.mxu0
  %v531 = vadd.f32 %v326, %v530
  %532 = vmatmul.bf16.gmra.mxu0 %v387
  %v533 = vpop.f32.mrf.mxu0
  %v534 = vadd.f32 %v326, %v533
  %v535 = vpop.f32.mrf.mxu0
  %v536 = vadd.f32 %v326, %v535
  %537 = vmatmul.bf16.gmra.mxu0 %v390
  %v538 = vpop.f32.mrf.mxu0
  %v539 = vadd.f32 %v326, %v538
  %v540 = vpop.f32.mrf.mxu0
  %v541 = vadd.f32 %v326, %v540
  %542 = vmatmul.bf16.gmra.mxu0 %v393
  %v543 = vpop.f32.mrf.mxu0
  %v544 = vadd.f32 %v326, %v543
  %v545 = vpop.f32.mrf.mxu0
  %v546 = vadd.f32 %v326, %v545
  %547 = vmatmul.bf16.gmra.mxu0 %v396
  %v548 = vpop.f32.mrf.mxu0
  %v549 = vadd.f32 %v326, %v548
  %v550 = vpop.f32.mrf.mxu0
  %v551 = vadd.f32 %v326, %v550
  %552 = vmatmul.bf16.gmra.mxu0 %v399
  %v553 = vpop.f32.mrf.mxu0
  %v554 = vadd.f32 %v326, %v553
  %v555 = vpop.f32.mrf.mxu0
  %v556 = vadd.f32 %v326, %v555
  %557 = vmatmul.bf16.gmra.mxu0 %v402
  %v558 = vpop.f32.mrf.mxu0
  %v559 = vadd.f32 %v326, %v558
  %v560 = vpop.f32.mrf.mxu0
  %v561 = vadd.f32 %v326, %v560
  %562 = vmatmul.bf16.gmra.mxu0 %v405
  %v563 = vpop.f32.mrf.mxu0
  %v564 = vadd.f32 %v326, %v563
  %v565 = vpop.f32.mrf.mxu0
  %v566 = vadd.f32 %v326, %v565
  %567 = vmatmul.bf16.gmra.mxu0 %v408
  %v568 = vpop.f32.mrf.mxu0
  %v569 = vadd.f32 %v326, %v568
  %v570 = vpop.f32.mrf.mxu0
  %v571 = vadd.f32 %v326, %v570
  %572 = vmatmul.bf16.gmra.mxu0 %v411
  %v573 = vpop.f32.mrf.mxu0
  %v574 = vadd.f32 %v326, %v573
  %v575 = vpop.f32.mrf.mxu0
  %v576 = vadd.f32 %v326, %v575
  %577 = vmatmul.bf16.gmra.mxu0 %v414
  %v578 = vpop.f32.mrf.mxu0
  %v579 = vadd.f32 %v326, %v578
  %v580 = vpop.f32.mrf.mxu0
  %v581 = vadd.f32 %v326, %v580
  %582 = vmatmul.bf16.gmra.mxu0 %v417
  %v583 = vpop.f32.mrf.mxu0
  %v584 = vadd.f32 %v326, %v583
  %v585 = vpop.f32.mrf.mxu0
  %v586 = vadd.f32 %v326, %v585
  %587 = vmatmul.bf16.gmra.mxu0 %v420
  %v588 = vpop.f32.mrf.mxu0
  %v589 = vadd.f32 %v326, %v588
  %v590 = vpop.f32.mrf.mxu0
  %v591 = vadd.f32 %v326, %v590
  %592 = vmatmul.bf16.gmra.mxu0 %v423
  %v593 = vpop.f32.mrf.mxu0
  %v594 = vadd.f32 %v326, %v593
  %v595 = vpop.f32.mrf.mxu0
  %v596 = vadd.f32 %v326, %v595
  %597 = vdwg.mxu0
  %v598 = vld [vmem:[%s5] sm:$0x1]
  %v600 = vperm.slane %v598, 0
  %v602 = vmul.f32 %v439, %v600
  %v603 = vmul.f32 %v441, %v600
  %v604 = vmul.f32 %v444, %v600
  %v605 = vmul.f32 %v446, %v600
  %v606 = vmul.f32 %v449, %v600
  %v607 = vmul.f32 %v451, %v600
  %v608 = vmul.f32 %v454, %v600
  %v609 = vmul.f32 %v456, %v600
  %v610 = vmul.f32 %v459, %v600
  %v611 = vmul.f32 %v461, %v600
  %v612 = vmul.f32 %v464, %v600
  %v613 = vmul.f32 %v466, %v600
  %v614 = vmul.f32 %v469, %v600
  %v615 = vmul.f32 %v471, %v600
  %v616 = vmul.f32 %v474, %v600
  %v617 = vmul.f32 %v476, %v600
  %v618 = vmul.f32 %v479, %v600
  %v619 = vmul.f32 %v481, %v600
  %v620 = vmul.f32 %v484, %v600
  %v621 = vmul.f32 %v486, %v600
  %v622 = vmul.f32 %v489, %v600
  %v623 = vmul.f32 %v491, %v600
  %v624 = vmul.f32 %v494, %v600
  %v625 = vmul.f32 %v496, %v600
  %v626 = vmul.f32 %v499, %v600
  %v627 = vmul.f32 %v501, %v600
  %v628 = vmul.f32 %v504, %v600
  %v629 = vmul.f32 %v506, %v600
  %v630 = vmul.f32 %v509, %v600
  %v631 = vmul.f32 %v511, %v600
  %v632 = vmul.f32 %v514, %v600
  %v633 = vmul.f32 %v516, %v600
  %v634 = vmul.f32 %v519, %v600
  %v635 = vmul.f32 %v521, %v600
  %v636 = vmul.f32 %v524, %v600
  %v637 = vmul.f32 %v526, %v600
  %v638 = vmul.f32 %v529, %v600
  %v639 = vmul.f32 %v531, %v600
  %v640 = vmul.f32 %v534, %v600
  %v641 = vmul.f32 %v536, %v600
  %v642 = vmul.f32 %v539, %v600
  %v643 = vmul.f32 %v541, %v600
  %v644 = vmul.f32 %v544, %v600
  %v645 = vmul.f32 %v546, %v600
  %v646 = vmul.f32 %v549, %v600
  %v647 = vmul.f32 %v551, %v600
  %v648 = vmul.f32 %v554, %v600
  %v649 = vmul.f32 %v556, %v600
  %v650 = vmul.f32 %v559, %v600
  %v651 = vmul.f32 %v561, %v600
  %v652 = vmul.f32 %v564, %v600
  %v653 = vmul.f32 %v566, %v600
  %v654 = vmul.f32 %v569, %v600
  %v655 = vmul.f32 %v571, %v600
  %v656 = vmul.f32 %v574, %v600
  %v657 = vmul.f32 %v576, %v600
  %v658 = vmul.f32 %v579, %v600
  %v659 = vmul.f32 %v581, %v600
  %v660 = vmul.f32 %v584, %v600
  %v661 = vmul.f32 %v586, %v600
  %v662 = vmul.f32 %v589, %v600
  %v663 = vmul.f32 %v591, %v600
  %v664 = vmul.f32 %v594, %v600
  %v665 = vmul.f32 %v596, %v600
  %v666 = vld [vmem:[%s6] sm:$0x1]
  %v668 = vperm.slane %v666, 0
  %v670 = vadd.f32 %v602, %v668
  %v671 = vadd.f32 %v603, %v668
  %v672 = vadd.f32 %v604, %v668
  %v673 = vadd.f32 %v605, %v668
  %v674 = vadd.f32 %v606, %v668
  %v675 = vadd.f32 %v607, %v668
  %v676 = vadd.f32 %v608, %v668
  %v677 = vadd.f32 %v609, %v668
  %v678 = vadd.f32 %v610, %v668
  %v679 = vadd.f32 %v611, %v668
  %v680 = vadd.f32 %v612, %v668
  %v681 = vadd.f32 %v613, %v668
  %v682 = vadd.f32 %v614, %v668
  %v683 = vadd.f32 %v615, %v668
  %v684 = vadd.f32 %v616, %v668
  %v685 = vadd.f32 %v617, %v668
  %v686 = vadd.f32 %v618, %v668
  %v687 = vadd.f32 %v619, %v668
  %v688 = vadd.f32 %v620, %v668
  %v689 = vadd.f32 %v621, %v668
  %v690 = vadd.f32 %v622, %v668
  %v691 = vadd.f32 %v623, %v668
  %v692 = vadd.f32 %v624, %v668
  %v693 = vadd.f32 %v625, %v668
  %v694 = vadd.f32 %v626, %v668
  %v695 = vadd.f32 %v627, %v668
  %v696 = vadd.f32 %v628, %v668
  %v697 = vadd.f32 %v629, %v668
  %v698 = vadd.f32 %v630, %v668
  %v699 = vadd.f32 %v631, %v668
  %v700 = vadd.f32 %v632, %v668
  %v701 = vadd.f32 %v633, %v668
  %v702 = vadd.f32 %v634, %v668
  %v703 = vadd.f32 %v635, %v668
  %v704 = vadd.f32 %v636, %v668
  %v705 = vadd.f32 %v637, %v668
  %v706 = vadd.f32 %v638, %v668
  %v707 = vadd.f32 %v639, %v668
  %v708 = vadd.f32 %v640, %v668
  %v709 = vadd.f32 %v641, %v668
  %v710 = vadd.f32 %v642, %v668
  %v711 = vadd.f32 %v643, %v668
  %v712 = vadd.f32 %v644, %v668
  %v713 = vadd.f32 %v645, %v668
  %v714 = vadd.f32 %v646, %v668
  %v715 = vadd.f32 %v647, %v668
  %v716 = vadd.f32 %v648, %v668
  %v717 = vadd.f32 %v649, %v668
  %v718 = vadd.f32 %v650, %v668
  %v719 = vadd.f32 %v651, %v668
  %v720 = vadd.f32 %v652, %v668
  %v721 = vadd.f32 %v653, %v668
  %v722 = vadd.f32 %v654, %v668
  %v723 = vadd.f32 %v655, %v668
  %v724 = vadd.f32 %v656, %v668
  %v725 = vadd.f32 %v657, %v668
  %v726 = vadd.f32 %v658, %v668
  %v727 = vadd.f32 %v659, %v668
  %v728 = vadd.f32 %v660, %v668
  %v729 = vadd.f32 %v661, %v668
  %v730 = vadd.f32 %v662, %v668
  %v731 = vadd.f32 %v663, %v668
  %v732 = vadd.f32 %v664, %v668
  %v733 = vadd.f32 %v665, %v668
  %v734 = vmax.f32 %v670, 0.0
  %v735 = vmax.f32 %v671, 0.0
  %v736 = vmax.f32 %v672, 0.0
  %v737 = vmax.f32 %v673, 0.0
  %v738 = vmax.f32 %v674, 0.0
  %v739 = vmax.f32 %v675, 0.0
  %v740 = vmax.f32 %v676, 0.0
  %v741 = vmax.f32 %v677, 0.0
  %v742 = vmax.f32 %v678, 0.0
  %v743 = vmax.f32 %v679, 0.0
  %v744 = vmax.f32 %v680, 0.0
  %v745 = vmax.f32 %v681, 0.0
  %v746 = vmax.f32 %v682, 0.0
  %v747 = vmax.f32 %v683, 0.0
  %v748 = vmax.f32 %v684, 0.0
  %v749 = vmax.f32 %v685, 0.0
  %v750 = vmax.f32 %v686, 0.0
  %v751 = vmax.f32 %v687, 0.0
  %v752 = vmax.f32 %v688, 0.0
  %v753 = vmax.f32 %v689, 0.0
  %v754 = vmax.f32 %v690, 0.0
  %v755 = vmax.f32 %v691, 0.0
  %v756 = vmax.f32 %v692, 0.0
  %v757 = vmax.f32 %v693, 0.0
  %v758 = vmax.f32 %v694, 0.0
  %v759 = vmax.f32 %v695, 0.0
  %v760 = vmax.f32 %v696, 0.0
  %v761 = vmax.f32 %v697, 0.0
  %v762 = vmax.f32 %v698, 0.0
  %v763 = vmax.f32 %v699, 0.0
  %v764 = vmax.f32 %v700, 0.0
  %v765 = vmax.f32 %v701, 0.0
  %v766 = vmax.f32 %v702, 0.0
  %v767 = vmax.f32 %v703, 0.0
  %v768 = vmax.f32 %v704, 0.0
  %v769 = vmax.f32 %v705, 0.0
  %v770 = vmax.f32 %v706, 0.0
  %v771 = vmax.f32 %v707, 0.0
  %v772 = vmax.f32 %v708, 0.0
  %v773 = vmax.f32 %v709, 0.0
  %v774 = vmax.f32 %v710, 0.0
  %v775 = vmax.f32 %v711, 0.0
  %v776 = vmax.f32 %v712, 0.0
  %v777 = vmax.f32 %v713, 0.0
  %v778 = vmax.f32 %v714, 0.0
  %v779 = vmax.f32 %v715, 0.0
  %v780 = vmax.f32 %v716, 0.0
  %v781 = vmax.f32 %v717, 0.0
  %v782 = vmax.f32 %v718, 0.0
  %v783 = vmax.f32 %v719, 0.0
  %v784 = vmax.f32 %v720, 0.0
  %v785 = vmax.f32 %v721, 0.0
  %v786 = vmax.f32 %v722, 0.0
  %v787 = vmax.f32 %v723, 0.0
  %v788 = vmax.f32 %v724, 0.0
  %v789 = vmax.f32 %v725, 0.0
  %v790 = vmax.f32 %v726, 0.0
  %v791 = vmax.f32 %v727, 0.0
  %v792 = vmax.f32 %v728, 0.0
  %v793 = vmax.f32 %v729, 0.0
  %v794 = vmax.f32 %v730, 0.0
  %v795 = vmax.f32 %v731, 0.0
  %v796 = vmax.f32 %v732, 0.0
  %v797 = vmax.f32 %v733, 0.0
  %v798 = vpack.c.bf16 %v734, %v734
  %v799 = vpack.c.bf16 %v735, %v735
  %v800 = vpack.c.bf16 %v736, %v736
  %v801 = vpack.c.bf16 %v737, %v737
  %v802 = vpack.c.bf16 %v738, %v738
  %v803 = vpack.c.bf16 %v739, %v739
  %v804 = vpack.c.bf16 %v740, %v740
  %v805 = vpack.c.bf16 %v741, %v741
  %v806 = vpack.c.bf16 %v742, %v742
  %v807 = vpack.c.bf16 %v743, %v743
  %v808 = vpack.c.bf16 %v744, %v744
  %v809 = vpack.c.bf16 %v745, %v745
  %v810 = vpack.c.bf16 %v746, %v746
  %v811 = vpack.c.bf16 %v747, %v747
  %v812 = vpack.c.bf16 %v748, %v748
  %v813 = vpack.c.bf16 %v749, %v749
  %v814 = vpack.c.bf16 %v750, %v750
  %v815 = vpack.c.bf16 %v751, %v751
  %v816 = vpack.c.bf16 %v752, %v752
  %v817 = vpack.c.bf16 %v753, %v753
  %v818 = vpack.c.bf16 %v754, %v754
  %v819 = vpack.c.bf16 %v755, %v755
  %v820 = vpack.c.bf16 %v756, %v756
  %v821 = vpack.c.bf16 %v757, %v757
  %v822 = vpack.c.bf16 %v758, %v758
  %v823 = vpack.c.bf16 %v759, %v759
  %v824 = vpack.c.bf16 %v760, %v760
  %v825 = vpack.c.bf16 %v761, %v761
  %v826 = vpack.c.bf16 %v762, %v762
  %v827 = vpack.c.bf16 %v763, %v763
  %v828 = vpack.c.bf16 %v764, %v764
  %v829 = vpack.c.bf16 %v765, %v765
  %v830 = vpack.c.bf16 %v766, %v766
  %v831 = vpack.c.bf16 %v767, %v767
  %v832 = vpack.c.bf16 %v768, %v768
  %v833 = vpack.c.bf16 %v769, %v769
  %v834 = vpack.c.bf16 %v770, %v770
  %v835 = vpack.c.bf16 %v771, %v771
  %v836 = vpack.c.bf16 %v772, %v772
  %v837 = vpack.c.bf16 %v773, %v773
  %v838 = vpack.c.bf16 %v774, %v774
  %v839 = vpack.c.bf16 %v775, %v775
  %v840 = vpack.c.bf16 %v776, %v776
  %v841 = vpack.c.bf16 %v777, %v777
  %v842 = vpack.c.bf16 %v778, %v778
  %v843 = vpack.c.bf16 %v779, %v779
  %v844 = vpack.c.bf16 %v780, %v780
  %v845 = vpack.c.bf16 %v781, %v781
  %v846 = vpack.c.bf16 %v782, %v782
  %v847 = vpack.c.bf16 %v783, %v783
  %v848 = vpack.c.bf16 %v784, %v784
  %v849 = vpack.c.bf16 %v785, %v785
  %v850 = vpack.c.bf16 %v786, %v786
  %v851 = vpack.c.bf16 %v787, %v787
  %v852 = vpack.c.bf16 %v788, %v788
  %v853 = vpack.c.bf16 %v789, %v789
  %v854 = vpack.c.bf16 %v790, %v790
  %v855 = vpack.c.bf16 %v791, %v791
  %v856 = vpack.c.bf16 %v792, %v792
  %v857 = vpack.c.bf16 %v793, %v793
  %v858 = vpack.c.bf16 %v794, %v794
  %v859 = vpack.c.bf16 %v795, %v795
  %v860 = vpack.c.bf16 %v796, %v796
  %v861 = vpack.c.bf16 %v797, %v797
  %vm862 = vcmask 125952
  %863 = vst.msk [vmem:[%s7] sm:$0xf] %vm862, %v798
  %864 = vst.msk [vmem:[%s7 + $0x4] sm:$0xf] %vm862, %v799
  %865 = vst.msk [vmem:[%s7 + $0x8] sm:$0xf] %vm862, %v800
  %866 = vst.msk [vmem:[%s7 + $0xc] sm:$0xf] %vm862, %v801
  %867 = vst.msk [vmem:[%s7 + $0x10] sm:$0xf] %vm862, %v802
  %868 = vst.msk [vmem:[%s7 + $0x14] sm:$0xf] %vm862, %v803
  %869 = vst.msk [vmem:[%s7 + $0x18] sm:$0xf] %vm862, %v804
  %870 = vst.msk [vmem:[%s7 + $0x1c] sm:$0xf] %vm862, %v805
  %871 = vst.msk [vmem:[%s7 + $0x20] sm:$0xf] %vm862, %v806
  %872 = vst.msk [vmem:[%s7 + $0x24] sm:$0xf] %vm862, %v807
  %873 = vst.msk [vmem:[%s7 + $0x28] sm:$0xf] %vm862, %v808
  %874 = vst.msk [vmem:[%s7 + $0x2c] sm:$0xf] %vm862, %v809
  %875 = vst.msk [vmem:[%s7 + $0x30] sm:$0xf] %vm862, %v810
  %876 = vst.msk [vmem:[%s7 + $0x34] sm:$0xf] %vm862, %v811
  %877 = vst.msk [vmem:[%s7 + $0x38] sm:$0xf] %vm862, %v812
  %878 = vst.msk [vmem:[%s7 + $0x3c] sm:$0xf] %vm862, %v813
  %879 = vst.msk [vmem:[%s7 + $0x40] sm:$0xf] %vm862, %v814
  %880 = vst.msk [vmem:[%s7 + $0x44] sm:$0xf] %vm862, %v815
  %881 = vst.msk [vmem:[%s7 + $0x48] sm:$0xf] %vm862, %v816
  %882 = vst.msk [vmem:[%s7 + $0x4c] sm:$0xf] %vm862, %v817
  %883 = vst.msk [vmem:[%s7 + $0x50] sm:$0xf] %vm862, %v818
  %884 = vst.msk [vmem:[%s7 + $0x54] sm:$0xf] %vm862, %v819
  %885 = vst.msk [vmem:[%s7 + $0x58] sm:$0xf] %vm862, %v820
  %886 = vst.msk [vmem:[%s7 + $0x5c] sm:$0xf] %vm862, %v821
  %887 = vst.msk [vmem:[%s7 + $0x60] sm:$0xf] %vm862, %v822
  %888 = vst.msk [vmem:[%s7 + $0x64] sm:$0xf] %vm862, %v823
  %889 = vst.msk [vmem:[%s7 + $0x68] sm:$0xf] %vm862, %v824
  %890 = vst.msk [vmem:[%s7 + $0x6c] sm:$0xf] %vm862, %v825
  %891 = vst.msk [vmem:[%s7 + $0x70] sm:$0xf] %vm862, %v826
  %892 = vst.msk [vmem:[%s7 + $0x74] sm:$0xf] %vm862, %v827
  %893 = vst.msk [vmem:[%s7 + $0x78] sm:$0xf] %vm862, %v828
  %894 = vst.msk [vmem:[%s7 + $0x7c] sm:$0xf] %vm862, %v829
  %895 = vst.msk [vmem:[%s7 + $0x80] sm:$0xf] %vm862, %v830
  %896 = vst.msk [vmem:[%s7 + $0x84] sm:$0xf] %vm862, %v831
  %897 = vst.msk [vmem:[%s7 + $0x88] sm:$0xf] %vm862, %v832
  %898 = vst.msk [vmem:[%s7 + $0x8c] sm:$0xf] %vm862, %v833
  %899 = vst.msk [vmem:[%s7 + $0x90] sm:$0xf] %vm862, %v834
  %900 = vst.msk [vmem:[%s7 + $0x94] sm:$0xf] %vm862, %v835
  %901 = vst.msk [vmem:[%s7 + $0x98] sm:$0xf] %vm862, %v836
  %902 = vst.msk [vmem:[%s7 + $0x9c] sm:$0xf] %vm862, %v837
  %903 = vst.msk [vmem:[%s7 + $0xa0] sm:$0xf] %vm862, %v838
  %904 = vst.msk [vmem:[%s7 + $0xa4] sm:$0xf] %vm862, %v839
  %905 = vst.msk [vmem:[%s7 + $0xa8] sm:$0xf] %vm862, %v840
  %906 = vst.msk [vmem:[%s7 + $0xac] sm:$0xf] %vm862, %v841
  %907 = vst.msk [vmem:[%s7 + $0xb0] sm:$0xf] %vm862, %v842
  %908 = vst.msk [vmem:[%s7 + $0xb4] sm:$0xf] %vm862, %v843
  %909 = vst.msk [vmem:[%s7 + $0xb8] sm:$0xf] %vm862, %v844
  %910 = vst.msk [vmem:[%s7 + $0xbc] sm:$0xf] %vm862, %v845
  %911 = vst.msk [vmem:[%s7 + $0xc0] sm:$0xf] %vm862, %v846
  %912 = vst.msk [vmem:[%s7 + $0xc4] sm:$0xf] %vm862, %v847
  %913 = vst.msk [vmem:[%s7 + $0xc8] sm:$0xf] %vm862, %v848
  %914 = vst.msk [vmem:[%s7 + $0xcc] sm:$0xf] %vm862, %v849
  %915 = vst.msk [vmem:[%s7 + $0xd0] sm:$0xf] %vm862, %v850
  %916 = vst.msk [vmem:[%s7 + $0xd4] sm:$0xf] %vm862, %v851
  %917 = vst.msk [vmem:[%s7 + $0xd8] sm:$0xf] %vm862, %v852
  %918 = vst.msk [vmem:[%s7 + $0xdc] sm:$0xf] %vm862, %v853
  %919 = vst.msk [vmem:[%s7 + $0xe0] sm:$0xf] %vm862, %v854
  %920 = vst.msk [vmem:[%s7 + $0xe4] sm:$0xf] %vm862, %v855
  %921 = vst.msk [vmem:[%s7 + $0xe8] sm:$0xf] %vm862, %v856
  %922 = vst.msk [vmem:[%s7 + $0xec] sm:$0xf] %vm862, %v857
  %923 = vst.msk [vmem:[%s7 + $0xf0] sm:$0xf] %vm862, %v858
  %924 = vst.msk [vmem:[%s7 + $0xf4] sm:$0xf] %vm862, %v859
  %925 = vst.msk [vmem:[%s7 + $0xf8] sm:$0xf] %vm862, %v860
  %926 = vst.msk [vmem:[%s7 + $0xfc] sm:$0xf] %vm862, %v861
  // Predicated region
  $region30: #{dense_block_forward.6} parent=0 // pred_check
    _
  $region31: #{dense_block_forward.6} parent=0 // pred_check_branch
    %928 = sbr.rel (0) target = $region33
  $region32: #{dense_block_forward.6} parent=0 // pred_region
    _
  $region33: #{dense_block_forward.6} parent=0 // pred_fallthru
    _
  // Predicated region
  $region34: #{dense_block_forward.6} parent=0 // pred_check
    _
  $region35: #{dense_block_forward.6} parent=0 // pred_check_branch
    %930 = sbr.rel (0) target = $region37
  $region36: #{dense_block_forward.6} parent=0 // pred_region
    _
  $region37: #{dense_block_forward.6} parent=0 // pred_fallthru
    _

// kernel: dense_block_forward.8
$region0: #{dense_block_forward.8}
  #allocation0 [shape = 'u32[]', space=smem, size = 0x4, offset = 0x4, fixed_abs, tag = 'smem constant byte address 0x4 - core index']
  #allocation1 [shape = 'u32[72,128]{1,0:T(1,128)}', space=vmem, size = 0x9000, scoped, tag = 'internal scratch']
  %s0 = inlined_call_operand.vmem [shape: f32[512,8], index: 0, kind: input, shape index: {}]
  %s1 = inlined_call_operand.vmem [shape: f32[1,8], index: 1, kind: input, shape index: {}]
  %s2 = inlined_call_operand.vmem [shape: f32[1,8], index: 2, kind: input, shape index: {}]
  %s3 = inlined_call_operand.vmem [shape: bf16[8,16], index: 3, kind: input, shape index: {}]
  %s4 = inlined_call_operand.vmem [shape: f32[1,16], index: 4, kind: input, shape index: {}]
  %s5 = inlined_call_operand.vmem [shape: f32[1,16], index: 5, kind: input, shape index: {}]
  %s6 = inlined_call_operand.vmem [shape: f32[1,16], index: 6, kind: input, shape index: {}]
  %s7 = inlined_call_operand.vmem [shape: bf16[512,16], index: 7, kind: output, shape index: {}]
  %s8 = sld [smem:[#allocation0]]
  $region38: #{dense_block_forward.8} parent=0
    _
  %s10 = ssub.s32 1, %s8
  %s11 = scalar_select 0, %s10, %s8
  // Predicated region
  $region2: #{dense_block_forward.8} parent=0 // pred_check
    _
  $region3: #{dense_block_forward.8} parent=0 // pred_check_branch
    %13 = sbr.rel (0) target = $region5
  $region4: #{dense_block_forward.8} parent=0 // pred_region
    _
  $region5: #{dense_block_forward.8} parent=0 // pred_fallthru
    _
  // Predicated region
  $region6: #{dense_block_forward.8} parent=0 // pred_check
    _
  $region7: #{dense_block_forward.8} parent=0 // pred_check_branch
    %15 = sbr.rel (0) target = $region9
  $region8: #{dense_block_forward.8} parent=0 // pred_region
    _
  $region9: #{dense_block_forward.8} parent=0 // pred_fallthru
    _
  // Predicated region
  $region10: #{dense_block_forward.8} parent=0 // pred_check
    _
  $region11: #{dense_block_forward.8} parent=0 // pred_check_branch
    %17 = sbr.rel (0) target = $region13
  $region12: #{dense_block_forward.8} parent=0 // pred_region
    _
  $region13: #{dense_block_forward.8} parent=0 // pred_fallthru
    _
  // Predicated region
  $region14: #{dense_block_forward.8} parent=0 // pred_check
    _
  $region15: #{dense_block_forward.8} parent=0 // pred_check_branch
    %19 = sbr.rel (0) target = $region17
  $region16: #{dense_block_forward.8} parent=0 // pred_region
    _
  $region17: #{dense_block_forward.8} parent=0 // pred_fallthru
    _
  // Predicated region
  $region18: #{dense_block_forward.8} parent=0 // pred_check
    _
  $region19: #{dense_block_forward.8} parent=0 // pred_check_branch
    %21 = sbr.rel (0) target = $region21
  $region20: #{dense_block_forward.8} parent=0 // pred_region
    _
  $region21: #{dense_block_forward.8} parent=0 // pred_fallthru
    _
  // Predicated region
  $region22: #{dense_block_forward.8} parent=0 // pred_check
    _
  $region23: #{dense_block_forward.8} parent=0 // pred_check_branch
    %23 = sbr.rel (0) target = $region25
  $region24: #{dense_block_forward.8} parent=0 // pred_region
    _
  $region25: #{dense_block_forward.8} parent=0 // pred_fallthru
    _
  // Predicated region
  $region26: #{dense_block_forward.8} parent=0 // pred_check
    _
  $region27: #{dense_block_forward.8} parent=0 // pred_check_branch
    %25 = sbr.rel (0) target = $region29
  $region28: #{dense_block_forward.8} parent=0 // pred_region
    _
  $region29: #{dense_block_forward.8} parent=0 // pred_fallthru
    _
  %v27 = vld [vmem:[%s0] sm:$0xff]
  %v28 = vld [vmem:[%s0 + $0x8] sm:$0xff]
  %v29 = vld [vmem:[%s0 + $0x10] sm:$0xff]
  %v30 = vld [vmem:[%s0 + $0x18] sm:$0xff]
  %v31 = vld [vmem:[%s0 + $0x20] sm:$0xff]
  %v32 = vld [vmem:[%s0 + $0x28] sm:$0xff]
  %v33 = vld [vmem:[%s0 + $0x30] sm:$0xff]
  %v34 = vld [vmem:[%s0 + $0x38] sm:$0xff]
  %v35 = vld [vmem:[%s0 + $0x40] sm:$0xff]
  %v36 = vld [vmem:[%s0 + $0x48] sm:$0xff]
  %v37 = vld [vmem:[%s0 + $0x50] sm:$0xff]
  %v38 = vld [vmem:[%s0 + $0x58] sm:$0xff]
  %v39 = vld [vmem:[%s0 + $0x60] sm:$0xff]
  %v40 = vld [vmem:[%s0 + $0x68] sm:$0xff]
  %v41 = vld [vmem:[%s0 + $0x70] sm:$0xff]
  %v42 = vld [vmem:[%s0 + $0x78] sm:$0xff]
  %v43 = vld [vmem:[%s0 + $0x80] sm:$0xff]
  %v44 = vld [vmem:[%s0 + $0x88] sm:$0xff]
  %v45 = vld [vmem:[%s0 + $0x90] sm:$0xff]
  %v46 = vld [vmem:[%s0 + $0x98] sm:$0xff]
  %v47 = vld [vmem:[%s0 + $0xa0] sm:$0xff]
  %v48 = vld [vmem:[%s0 + $0xa8] sm:$0xff]
  %v49 = vld [vmem:[%s0 + $0xb0] sm:$0xff]
  %v50 = vld [vmem:[%s0 + $0xb8] sm:$0xff]
  %v51 = vld [vmem:[%s0 + $0xc0] sm:$0xff]
  %v52 = vld [vmem:[%s0 + $0xc8] sm:$0xff]
  %v53 = vld [vmem:[%s0 + $0xd0] sm:$0xff]
  %v54 = vld [vmem:[%s0 + $0xd8] sm:$0xff]
  %v55 = vld [vmem:[%s0 + $0xe0] sm:$0xff]
  %v56 = vld [vmem:[%s0 + $0xe8] sm:$0xff]
  %v57 = vld [vmem:[%s0 + $0xf0] sm:$0xff]
  %v58 = vld [vmem:[%s0 + $0xf8] sm:$0xff]
  %v59 = vld [vmem:[%s0 + $0x100] sm:$0xff]
  %v60 = vld [vmem:[%s0 + $0x108] sm:$0xff]
  %v61 = vld [vmem:[%s0 + $0x110] sm:$0xff]
  %v62 = vld [vmem:[%s0 + $0x118] sm:$0xff]
  %v63 = vld [vmem:[%s0 + $0x120] sm:$0xff]
  %v64 = vld [vmem:[%s0 + $0x128] sm:$0xff]
  %v65 = vld [vmem:[%s0 + $0x130] sm:$0xff]
  %v66 = vld [vmem:[%s0 + $0x138] sm:$0xff]
  %v67 = vld [vmem:[%s0 + $0x140] sm:$0xff]
  %v68 = vld [vmem:[%s0 + $0x148] sm:$0xff]
  %v69 = vld [vmem:[%s0 + $0x150] sm:$0xff]
  %v70 = vld [vmem:[%s0 + $0x158] sm:$0xff]
  %v71 = vld [vmem:[%s0 + $0x160] sm:$0xff]
  %v72 = vld [vmem:[%s0 + $0x168] sm:$0xff]
  %v73 = vld [vmem:[%s0 + $0x170] sm:$0xff]
  %v74 = vld [vmem:[%s0 + $0x178] sm:$0xff]
  %v75 = vld [vmem:[%s0 + $0x180] sm:$0xff]
  %v76 = vld [vmem:[%s0 + $0x188] sm:$0xff]
  %v77 = vld [vmem:[%s0 + $0x190] sm:$0xff]
  %v78 = vld [vmem:[%s0 + $0x198] sm:$0xff]
  %v79 = vld [vmem:[%s0 + $0x1a0] sm:$0xff]
  %v80 = vld [vmem:[%s0 + $0x1a8] sm:$0xff]
  %v81 = vld [vmem:[%s0 + $0x1b0] sm:$0xff]
  %v82 = vld [vmem:[%s0 + $0x1b8] sm:$0xff]
  %v83 = vld [vmem:[%s0 + $0x1c0] sm:$0xff]
  %v84 = vld [vmem:[%s0 + $0x1c8] sm:$0xff]
  %v85 = vld [vmem:[%s0 + $0x1d0] sm:$0xff]
  %v86 = vld [vmem:[%s0 + $0x1d8] sm:$0xff]
  %v87 = vld [vmem:[%s0 + $0x1e0] sm:$0xff]
  %v88 = vld [vmem:[%s0 + $0x1e8] sm:$0xff]
  %v89 = vld [vmem:[%s0 + $0x1f0] sm:$0xff]
  %v90 = vld [vmem:[%s0 + $0x1f8] sm:$0xff]
  %v91 = vld [vmem:[%s1] sm:$0x1]
  %v93 = vperm.slane %v91, 0
  %v95 = vmul.f32 %v27, %v93
  %v96 = vmul.f32 %v28, %v93
  %v97 = vmul.f32 %v29, %v93
  %v98 = vmul.f32 %v30, %v93
  %v99 = vmul.f32 %v31, %v93
  %v100 = vmul.f32 %v32, %v93
  %v101 = vmul.f32 %v33, %v93
  %v102 = vmul.f32 %v34, %v93
  %v103 = vmul.f32 %v35, %v93
  %v104 = vmul.f32 %v36, %v93
  %v105 = vmul.f32 %v37, %v93
  %v106 = vmul.f32 %v38, %v93
  %v107 = vmul.f32 %v39, %v93
  %v108 = vmul.f32 %v40, %v93
  %v109 = vmul.f32 %v41, %v93
  %v110 = vmul.f32 %v42, %v93
  %v111 = vmul.f32 %v43, %v93
  %v112 = vmul.f32 %v44, %v93
  %v113 = vmul.f32 %v45, %v93
  %v114 = vmul.f32 %v46, %v93
  %v115 = vmul.f32 %v47, %v93
  %v116 = vmul.f32 %v48, %v93
  %v117 = vmul.f32 %v49, %v93
  %v118 = vmul.f32 %v50, %v93
  %v119 = vmul.f32 %v51, %v93
  %v120 = vmul.f32 %v52, %v93
  %v121 = vmul.f32 %v53, %v93
  %v122 = vmul.f32 %v54, %v93
  %v123 = vmul.f32 %v55, %v93
  %v124 = vmul.f32 %v56, %v93
  %v125 = vmul.f32 %v57, %v93
  %v126 = vmul.f32 %v58, %v93
  %v127 = vmul.f32 %v59, %v93
  %v128 = vmul.f32 %v60, %v93
  %v129 = vmul.f32 %v61, %v93
  %v130 = vmul.f32 %v62, %v93
  %v131 = vmul.f32 %v63, %v93
  %v132 = vmul.f32 %v64, %v93
  %v133 = vmul.f32 %v65, %v93
  %v134 = vmul.f32 %v66, %v93
  %v135 = vmul.f32 %v67, %v93
  %v136 = vmul.f32 %v68, %v93
  %v137 = vmul.f32 %v69, %v93
  %v138 = vmul.f32 %v70, %v93
  %v139 = vmul.f32 %v71, %v93
  %v140 = vmul.f32 %v72, %v93
  %v141 = vmul.f32 %v73, %v93
  %v142 = vmul.f32 %v74, %v93
  %v143 = vmul.f32 %v75, %v93
  %v144 = vmul.f32 %v76, %v93
  %v145 = vmul.f32 %v77, %v93
  %v146 = vmul.f32 %v78, %v93
  %v147 = vmul.f32 %v79, %v93
  %v148 = vmul.f32 %v80, %v93
  %v149 = vmul.f32 %v81, %v93
  %v150 = vmul.f32 %v82, %v93
  %v151 = vmul.f32 %v83, %v93
  %v152 = vmul.f32 %v84, %v93
  %v153 = vmul.f32 %v85, %v93
  %v154 = vmul.f32 %v86, %v93
  %v155 = vmul.f32 %v87, %v93
  %v156 = vmul.f32 %v88, %v93
  %v157 = vmul.f32 %v89, %v93
  %v158 = vmul.f32 %v90, %v93
  %v159 = vld [vmem:[%s2] sm:$0x1]
  %v161 = vperm.slane %v159, 0
  %v163 = vadd.f32 %v95, %v161
  %v164 = vadd.f32 %v96, %v161
  %v165 = vadd.f32 %v97, %v161
  %v166 = vadd.f32 %v98, %v161
  %v167 = vadd.f32 %v99, %v161
  %v168 = vadd.f32 %v100, %v161
  %v169 = vadd.f32 %v101, %v161
  %v170 = vadd.f32 %v102, %v161
  %v171 = vadd.f32 %v103, %v161
  %v172 = vadd.f32 %v104, %v161
  %v173 = vadd.f32 %v105, %v161
  %v174 = vadd.f32 %v106, %v161
  %v175 = vadd.f32 %v107, %v161
  %v176 = vadd.f32 %v108, %v161
  %v177 = vadd.f32 %v109, %v161
  %v178 = vadd.f32 %v110, %v161
  %v179 = vadd.f32 %v111, %v161
  %v180 = vadd.f32 %v112, %v161
  %v181 = vadd.f32 %v113, %v161
  %v182 = vadd.f32 %v114, %v161
  %v183 = vadd.f32 %v115, %v161
  %v184 = vadd.f32 %v116, %v161
  %v185 = vadd.f32 %v117, %v161
  %v186 = vadd.f32 %v118, %v161
  %v187 = vadd.f32 %v119, %v161
  %v188 = vadd.f32 %v120, %v161
  %v189 = vadd.f32 %v121, %v161
  %v190 = vadd.f32 %v122, %v161
  %v191 = vadd.f32 %v123, %v161
  %v192 = vadd.f32 %v124, %v161
  %v193 = vadd.f32 %v125, %v161
  %v194 = vadd.f32 %v126, %v161
  %v195 = vadd.f32 %v127, %v161
  %v196 = vadd.f32 %v128, %v161
  %v197 = vadd.f32 %v129, %v161
  %v198 = vadd.f32 %v130, %v161
  %v199 = vadd.f32 %v131, %v161
  %v200 = vadd.f32 %v132, %v161
  %v201 = vadd.f32 %v133, %v161
  %v202 = vadd.f32 %v134, %v161
  %v203 = vadd.f32 %v135, %v161
  %v204 = vadd.f32 %v136, %v161
  %v205 = vadd.f32 %v137, %v161
  %v206 = vadd.f32 %v138, %v161
  %v207 = vadd.f32 %v139, %v161
  %v208 = vadd.f32 %v140, %v161
  %v209 = vadd.f32 %v141, %v161
  %v210 = vadd.f32 %v142, %v161
  %v211 = vadd.f32 %v143, %v161
  %v212 = vadd.f32 %v144, %v161
  %v213 = vadd.f32 %v145, %v161
  %v214 = vadd.f32 %v146, %v161
  %v215 = vadd.f32 %v147, %v161
  %v216 = vadd.f32 %v148, %v161
  %v217 = vadd.f32 %v149, %v161
  %v218 = vadd.f32 %v150, %v161
  %v219 = vadd.f32 %v151, %v161
  %v220 = vadd.f32 %v152, %v161
  %v221 = vadd.f32 %v153, %v161
  %v222 = vadd.f32 %v154, %v161
  %v223 = vadd.f32 %v155, %v161
  %v224 = vadd.f32 %v156, %v161
  %v225 = vadd.f32 %v157, %v161
  %v226 = vadd.f32 %v158, %v161
  %v227 = vmax.f32 %v163, 0.0
  %v228 = vmax.f32 %v164, 0.0
  %v229 = vmax.f32 %v165, 0.0
  %v230 = vmax.f32 %v166, 0.0
  %v231 = vmax.f32 %v167, 0.0
  %v232 = vmax.f32 %v168, 0.0
  %v233 = vmax.f32 %v169, 0.0
  %v234 = vmax.f32 %v170, 0.0
  %v235 = vmax.f32 %v171, 0.0
  %v236 = vmax.f32 %v172, 0.0
  %v237 = vmax.f32 %v173, 0.0
  %v238 = vmax.f32 %v174, 0.0
  %v239 = vmax.f32 %v175, 0.0
  %v240 = vmax.f32 %v176, 0.0
  %v241 = vmax.f32 %v177, 0.0
  %v242 = vmax.f32 %v178, 0.0
  %v243 = vmax.f32 %v179, 0.0
  %v244 = vmax.f32 %v180, 0.0
  %v245 = vmax.f32 %v181, 0.0
  %v246 = vmax.f32 %v182, 0.0
  %v247 = vmax.f32 %v183, 0.0
  %v248 = vmax.f32 %v184, 0.0
  %v249 = vmax.f32 %v185, 0.0
  %v250 = vmax.f32 %v186, 0.0
  %v251 = vmax.f32 %v187, 0.0
  %v252 = vmax.f32 %v188, 0.0
  %v253 = vmax.f32 %v189, 0.0
  %v254 = vmax.f32 %v190, 0.0
  %v255 = vmax.f32 %v191, 0.0
  %v256 = vmax.f32 %v192, 0.0
  %v257 = vmax.f32 %v193, 0.0
  %v258 = vmax.f32 %v194, 0.0
  %v259 = vmax.f32 %v195, 0.0
  %v260 = vmax.f32 %v196, 0.0
  %v261 = vmax.f32 %v197, 0.0
  %v262 = vmax.f32 %v198, 0.0
  %v263 = vmax.f32 %v199, 0.0
  %v264 = vmax.f32 %v200, 0.0
  %v265 = vmax.f32 %v201, 0.0
  %v266 = vmax.f32 %v202, 0.0
  %v267 = vmax.f32 %v203, 0.0
  %v268 = vmax.f32 %v204, 0.0
  %v269 = vmax.f32 %v205, 0.0
  %v270 = vmax.f32 %v206, 0.0
  %v271 = vmax.f32 %v207, 0.0
  %v272 = vmax.f32 %v208, 0.0
  %v273 = vmax.f32 %v209, 0.0
  %v274 = vmax.f32 %v210, 0.0
  %v275 = vmax.f32 %v211, 0.0
  %v276 = vmax.f32 %v212, 0.0
  %v277 = vmax.f32 %v213, 0.0
  %v278 = vmax.f32 %v214, 0.0
  %v279 = vmax.f32 %v215, 0.0
  %v280 = vmax.f32 %v216, 0.0
  %v281 = vmax.f32 %v217, 0.0
  %v282 = vmax.f32 %v218, 0.0
  %v283 = vmax.f32 %v219, 0.0
  %v284 = vmax.f32 %v220, 0.0
  %v285 = vmax.f32 %v221, 0.0
  %v286 = vmax.f32 %v222, 0.0
  %v287 = vmax.f32 %v223, 0.0
  %v288 = vmax.f32 %v224, 0.0
  %v289 = vmax.f32 %v225, 0.0
  %v290 = vmax.f32 %v226, 0.0
  %v291 = vpack.c.bf16 %v228, %v227
  %v292 = vpack.c.bf16 %v230, %v229
  %v293 = vpack.c.bf16 %v232, %v231
  %v294 = vpack.c.bf16 %v234, %v233
  %v295 = vpack.c.bf16 %v236, %v235
  %v296 = vpack.c.bf16 %v238, %v237
  %v297 = vpack.c.bf16 %v240, %v239
  %v298 = vpack.c.bf16 %v242, %v241
  %v299 = vpack.c.bf16 %v244, %v243
  %v300 = vpack.c.bf16 %v246, %v245
  %v301 = vpack.c.bf16 %v248, %v247
  %v302 = vpack.c.bf16 %v250, %v249
  %v303 = vpack.c.bf16 %v252, %v251
  %v304 = vpack.c.bf16 %v254, %v253
  %v305 = vpack.c.bf16 %v256, %v255
  %v306 = vpack.c.bf16 %v258, %v257
  %v307 = vpack.c.bf16 %v260, %v259
  %v308 = vpack.c.bf16 %v262, %v261
  %v309 = vpack.c.bf16 %v264, %v263
  %v310 = vpack.c.bf16 %v266, %v265
  %v311 = vpack.c.bf16 %v268, %v267
  %v312 = vpack.c.bf16 %v270, %v269
  %v313 = vpack.c.bf16 %v272, %v271
  %v314 = vpack.c.bf16 %v274, %v273
  %v315 = vpack.c.bf16 %v276, %v275
  %v316 = vpack.c.bf16 %v278, %v277
  %v317 = vpack.c.bf16 %v280, %v279
  %v318 = vpack.c.bf16 %v282, %v281
  %v319 = vpack.c.bf16 %v284, %v283
  %v320 = vpack.c.bf16 %v286, %v285
  %v321 = vpack.c.bf16 %v288, %v287
  %v322 = vpack.c.bf16 %v290, %v289
  %v323 = vld [vmem:[%s3] sm:$0xf]
  %v324 = vld [vmem:[%s4] sm:$0x1]
  %v326 = vperm.slane %v324, 0
  %vm328 = vcmask 64512
  %v330 = vsel %vm328, %v291, 0
  %v333 = vsel %vm328, %v292, 0
  %v336 = vsel %vm328, %v293, 0
  %v339 = vsel %vm328, %v294, 0
  %v342 = vsel %vm328, %v295, 0
  %v345 = vsel %vm328, %v296, 0
  %v348 = vsel %vm328, %v297, 0
  %v351 = vsel %vm328, %v298, 0
  %v354 = vsel %vm328, %v299, 0
  %v357 = vsel %vm328, %v300, 0
  %v360 = vsel %vm328, %v301, 0
  %v363 = vsel %vm328, %v302, 0
  %v366 = vsel %vm328, %v303, 0
  %v369 = vsel %vm328, %v304, 0
  %v372 = vsel %vm328, %v305, 0
  %v375 = vsel %vm328, %v306, 0
  %v378 = vsel %vm328, %v307, 0
  %v381 = vsel %vm328, %v308, 0
  %v384 = vsel %vm328, %v309, 0
  %v387 = vsel %vm328, %v310, 0
  %v390 = vsel %vm328, %v311, 0
  %v393 = vsel %vm328, %v312, 0
  %v396 = vsel %vm328, %v313, 0
  %v399 = vsel %vm328, %v314, 0
  %v402 = vsel %vm328, %v315, 0
  %v405 = vsel %vm328, %v316, 0
  %v408 = vsel %vm328, %v317, 0
  %v411 = vsel %vm328, %v318, 0
  %v414 = vsel %vm328, %v319, 0
  %v417 = vsel %vm328, %v320, 0
  %v420 = vsel %vm328, %v321, 0
  %v423 = vsel %vm328, %v322, 0
  %vm425 = vcmask 1043456
  %v427 = vsel %vm425, %v323, 0
  %429 = vmatpush.bf16.msra.mxu0 0
  %430 = vmatpush.bf16.msra.mxu0 0
  %431 = vmatpush.bf16.msra.mxu0 0
  %432 = vmatpush.bf16.msra.mxu0 0
  %433 = vmatpush.bf16.msra.mxu0 0
  %434 = vmatpush.bf16.msra.mxu0 0
  %435 = vmatpush.bf16.msra.mxu0 0
  %436 = vmatpush.bf16.msra.mxu0 %v427
  %437 = vmatmul.bf16.gmra.mxu0 %v330
  %v438 = vpop.f32.mrf.mxu0
  %v439 = vadd.f32 %v326, %v438
  %v440 = vpop.f32.mrf.mxu0
  %v441 = vadd.f32 %v326, %v440
  %442 = vmatmul.bf16.gmra.mxu0 %v333
  %v443 = vpop.f32.mrf.mxu0
  %v444 = vadd.f32 %v326, %v443
  %v445 = vpop.f32.mrf.mxu0
  %v446 = vadd.f32 %v326, %v445
  %447 = vmatmul.bf16.gmra.mxu0 %v336
  %v448 = vpop.f32.mrf.mxu0
  %v449 = vadd.f32 %v326, %v448
  %v450 = vpop.f32.mrf.mxu0
  %v451 = vadd.f32 %v326, %v450
  %452 = vmatmul.bf16.gmra.mxu0 %v339
  %v453 = vpop.f32.mrf.mxu0
  %v454 = vadd.f32 %v326, %v453
  %v455 = vpop.f32.mrf.mxu0
  %v456 = vadd.f32 %v326, %v455
  %457 = vmatmul.bf16.gmra.mxu0 %v342
  %v458 = vpop.f32.mrf.mxu0
  %v459 = vadd.f32 %v326, %v458
  %v460 = vpop.f32.mrf.mxu0
  %v461 = vadd.f32 %v326, %v460
  %462 = vmatmul.bf16.gmra.mxu0 %v345
  %v463 = vpop.f32.mrf.mxu0
  %v464 = vadd.f32 %v326, %v463
  %v465 = vpop.f32.mrf.mxu0
  %v466 = vadd.f32 %v326, %v465
  %467 = vmatmul.bf16.gmra.mxu0 %v348
  %v468 = vpop.f32.mrf.mxu0
  %v469 = vadd.f32 %v326, %v468
  %v470 = vpop.f32.mrf.mxu0
  %v471 = vadd.f32 %v326, %v470
  %472 = vmatmul.bf16.gmra.mxu0 %v351
  %v473 = vpop.f32.mrf.mxu0
  %v474 = vadd.f32 %v326, %v473
  %v475 = vpop.f32.mrf.mxu0
  %v476 = vadd.f32 %v326, %v475
  %477 = vmatmul.bf16.gmra.mxu0 %v354
  %v478 = vpop.f32.mrf.mxu0
  %v479 = vadd.f32 %v326, %v478
  %v480 = vpop.f32.mrf.mxu0
  %v481 = vadd.f32 %v326, %v480
  %482 = vmatmul.bf16.gmra.mxu0 %v357
  %v483 = vpop.f32.mrf.mxu0
  %v484 = vadd.f32 %v326, %v483
  %v485 = vpop.f32.mrf.mxu0
  %v486 = vadd.f32 %v326, %v485
  %487 = vmatmul.bf16.gmra.mxu0 %v360
  %v488 = vpop.f32.mrf.mxu0
  %v489 = vadd.f32 %v326, %v488
  %v490 = vpop.f32.mrf.mxu0
  %v491 = vadd.f32 %v326, %v490
  %492 = vmatmul.bf16.gmra.mxu0 %v363
  %v493 = vpop.f32.mrf.mxu0
  %v494 = vadd.f32 %v326, %v493
  %v495 = vpop.f32.mrf.mxu0
  %v496 = vadd.f32 %v326, %v495
  %497 = vmatmul.bf16.gmra.mxu0 %v366
  %v498 = vpop.f32.mrf.mxu0
  %v499 = vadd.f32 %v326, %v498
  %v500 = vpop.f32.mrf.mxu0
  %v501 = vadd.f32 %v326, %v500
  %502 = vmatmul.bf16.gmra.mxu0 %v369
  %v503 = vpop.f32.mrf.mxu0
  %v504 = vadd.f32 %v326, %v503
  %v505 = vpop.f32.mrf.mxu0
  %v506 = vadd.f32 %v326, %v505
  %507 = vmatmul.bf16.gmra.mxu0 %v372
  %v508 = vpop.f32.mrf.mxu0
  %v509 = vadd.f32 %v326, %v508
  %v510 = vpop.f32.mrf.mxu0
  %v511 = vadd.f32 %v326, %v510
  %512 = vmatmul.bf16.gmra.mxu0 %v375
  %v513 = vpop.f32.mrf.mxu0
  %v514 = vadd.f32 %v326, %v513
  %v515 = vpop.f32.mrf.mxu0
  %v516 = vadd.f32 %v326, %v515
  %517 = vmatmul.bf16.gmra.mxu0 %v378
  %v518 = vpop.f32.mrf.mxu0
  %v519 = vadd.f32 %v326, %v518
  %v520 = vpop.f32.mrf.mxu0
  %v521 = vadd.f32 %v326, %v520
  %522 = vmatmul.bf16.gmra.mxu0 %v381
  %v523 = vpop.f32.mrf.mxu0
  %v524 = vadd.f32 %v326, %v523
  %v525 = vpop.f32.mrf.mxu0
  %v526 = vadd.f32 %v326, %v525
  %527 = vmatmul.bf16.gmra.mxu0 %v384
  %v528 = vpop.f32.mrf.mxu0
  %v529 = vadd.f32 %v326, %v528
  %v530 = vpop.f32.mrf.mxu0
  %v531 = vadd.f32 %v326, %v530
  %532 = vmatmul.bf16.gmra.mxu0 %v387
  %v533 = vpop.f32.mrf.mxu0
  %v534 = vadd.f32 %v326, %v533
  %v535 = vpop.f32.mrf.mxu0
  %v536 = vadd.f32 %v326, %v535
  %537 = vmatmul.bf16.gmra.mxu0 %v390
  %v538 = vpop.f32.mrf.mxu0
  %v539 = vadd.f32 %v326, %v538
  %v540 = vpop.f32.mrf.mxu0
  %v541 = vadd.f32 %v326, %v540
  %542 = vmatmul.bf16.gmra.mxu0 %v393
  %v543 = vpop.f32.mrf.mxu0
  %v544 = vadd.f32 %v326, %v543
  %v545 = vpop.f32.mrf.mxu0
  %v546 = vadd.f32 %v326, %v545
  %547 = vmatmul.bf16.gmra.mxu0 %v396
  %v548 = vpop.f32.mrf.mxu0
  %v549 = vadd.f32 %v326, %v548
  %v550 = vpop.f32.mrf.mxu0
  %v551 = vadd.f32 %v326, %v550
  %552 = vmatmul.bf16.gmra.mxu0 %v399
  %v553 = vpop.f32.mrf.mxu0
  %v554 = vadd.f32 %v326, %v553
  %v555 = vpop.f32.mrf.mxu0
  %v556 = vadd.f32 %v326, %v555
  %557 = vmatmul.bf16.gmra.mxu0 %v402
  %v558 = vpop.f32.mrf.mxu0
  %v559 = vadd.f32 %v326, %v558
  %v560 = vpop.f32.mrf.mxu0
  %v561 = vadd.f32 %v326, %v560
  %562 = vmatmul.bf16.gmra.mxu0 %v405
  %v563 = vpop.f32.mrf.mxu0
  %v564 = vadd.f32 %v326, %v563
  %v565 = vpop.f32.mrf.mxu0
  %v566 = vadd.f32 %v326, %v565
  %567 = vmatmul.bf16.gmra.mxu0 %v408
  %v568 = vpop.f32.mrf.mxu0
  %v569 = vadd.f32 %v326, %v568
  %v570 = vpop.f32.mrf.mxu0
  %v571 = vadd.f32 %v326, %v570
  %572 = vmatmul.bf16.gmra.mxu0 %v411
  %v573 = vpop.f32.mrf.mxu0
  %v574 = vadd.f32 %v326, %v573
  %v575 = vpop.f32.mrf.mxu0
  %v576 = vadd.f32 %v326, %v575
  %577 = vmatmul.bf16.gmra.mxu0 %v414
  %v578 = vpop.f32.mrf.mxu0
  %v579 = vadd.f32 %v326, %v578
  %v580 = vpop.f32.mrf.mxu0
  %v581 = vadd.f32 %v326, %v580
  %582 = vmatmul.bf16.gmra.mxu0 %v417
  %v583 = vpop.f32.mrf.mxu0
  %v584 = vadd.f32 %v326, %v583
  %v585 = vpop.f32.mrf.mxu0
  %v586 = vadd.f32 %v326, %v585
  %587 = vmatmul.bf16.gmra.mxu0 %v420
  %v588 = vpop.f32.mrf.mxu0
  %v589 = vadd.f32 %v326, %v588
  %v590 = vpop.f32.mrf.mxu0
  %v591 = vadd.f32 %v326, %v590
  %592 = vmatmul.bf16.gmra.mxu0 %v423
  %v593 = vpop.f32.mrf.mxu0
  %v594 = vadd.f32 %v326, %v593
  %v595 = vpop.f32.mrf.mxu0
  %v596 = vadd.f32 %v326, %v595
  %597 = vdwg.mxu0
  %v598 = vld [vmem:[%s5] sm:$0x1]
  %v600 = vperm.slane %v598, 0
  %v602 = vmul.f32 %v439, %v600
  %v603 = vmul.f32 %v441, %v600
  %v604 = vmul.f32 %v444, %v600
  %v605 = vmul.f32 %v446, %v600
  %v606 = vmul.f32 %v449, %v600
  %v607 = vmul.f32 %v451, %v600
  %v608 = vmul.f32 %v454, %v600
  %v609 = vmul.f32 %v456, %v600
  %v610 = vmul.f32 %v459, %v600
  %v611 = vmul.f32 %v461, %v600
  %v612 = vmul.f32 %v464, %v600
  %v613 = vmul.f32 %v466, %v600
  %v614 = vmul.f32 %v469, %v600
  %v615 = vmul.f32 %v471, %v600
  %v616 = vmul.f32 %v474, %v600
  %v617 = vmul.f32 %v476, %v600
  %v618 = vmul.f32 %v479, %v600
  %v619 = vmul.f32 %v481, %v600
  %v620 = vmul.f32 %v484, %v600
  %v621 = vmul.f32 %v486, %v600
  %v622 = vmul.f32 %v489, %v600
  %v623 = vmul.f32 %v491, %v600
  %v624 = vmul.f32 %v494, %v600
  %v625 = vmul.f32 %v496, %v600
  %v626 = vmul.f32 %v499, %v600
  %v627 = vmul.f32 %v501, %v600
  %v628 = vmul.f32 %v504, %v600
  %v629 = vmul.f32 %v506, %v600
  %v630 = vmul.f32 %v509, %v600
  %v631 = vmul.f32 %v511, %v600
  %v632 = vmul.f32 %v514, %v600
  %v633 = vmul.f32 %v516, %v600
  %v634 = vmul.f32 %v519, %v600
  %v635 = vmul.f32 %v521, %v600
  %v636 = vmul.f32 %v524, %v600
  %v637 = vmul.f32 %v526, %v600
  %v638 = vmul.f32 %v529, %v600
  %v639 = vmul.f32 %v531, %v600
  %v640 = vmul.f32 %v534, %v600
  %v641 = vmul.f32 %v536, %v600
  %v642 = vmul.f32 %v539, %v600
  %v643 = vmul.f32 %v541, %v600
  %v644 = vmul.f32 %v544, %v600
  %v645 = vmul.f32 %v546, %v600
  %v646 = vmul.f32 %v549, %v600
  %v647 = vmul.f32 %v551, %v600
  %v648 = vmul.f32 %v554, %v600
  %v649 = vmul.f32 %v556, %v600
  %v650 = vmul.f32 %v559, %v600
  %v651 = vmul.f32 %v561, %v600
  %v652 = vmul.f32 %v564, %v600
  %v653 = vmul.f32 %v566, %v600
  %v654 = vmul.f32 %v569, %v600
  %v655 = vmul.f32 %v571, %v600
  %v656 = vmul.f32 %v574, %v600
  %v657 = vmul.f32 %v576, %v600
  %v658 = vmul.f32 %v579, %v600
  %v659 = vmul.f32 %v581, %v600
  %v660 = vmul.f32 %v584, %v600
  %v661 = vmul.f32 %v586, %v600
  %v662 = vmul.f32 %v589, %v600
  %v663 = vmul.f32 %v591, %v600
  %v664 = vmul.f32 %v594, %v600
  %v665 = vmul.f32 %v596, %v600
  %v666 = vld [vmem:[%s6] sm:$0x1]
  %v668 = vperm.slane %v666, 0
  %v670 = vadd.f32 %v602, %v668
  %v671 = vadd.f32 %v603, %v668
  %v672 = vadd.f32 %v604, %v668
  %v673 = vadd.f32 %v605, %v668
  %v674 = vadd.f32 %v606, %v668
  %v675 = vadd.f32 %v607, %v668
  %v676 = vadd.f32 %v608, %v668
  %v677 = vadd.f32 %v609, %v668
  %v678 = vadd.f32 %v610, %v668
  %v679 = vadd.f32 %v611, %v668
  %v680 = vadd.f32 %v612, %v668
  %v681 = vadd.f32 %v613, %v668
  %v682 = vadd.f32 %v614, %v668
  %v683 = vadd.f32 %v615, %v668
  %v684 = vadd.f32 %v616, %v668
  %v685 = vadd.f32 %v617, %v668
  %v686 = vadd.f32 %v618, %v668
  %v687 = vadd.f32 %v619, %v668
  %v688 = vadd.f32 %v620, %v668
  %v689 = vadd.f32 %v621, %v668
  %v690 = vadd.f32 %v622, %v668
  %v691 = vadd.f32 %v623, %v668
  %v692 = vadd.f32 %v624, %v668
  %v693 = vadd.f32 %v625, %v668
  %v694 = vadd.f32 %v626, %v668
  %v695 = vadd.f32 %v627, %v668
  %v696 = vadd.f32 %v628, %v668
  %v697 = vadd.f32 %v629, %v668
  %v698 = vadd.f32 %v630, %v668
  %v699 = vadd.f32 %v631, %v668
  %v700 = vadd.f32 %v632, %v668
  %v701 = vadd.f32 %v633, %v668
  %v702 = vadd.f32 %v634, %v668
  %v703 = vadd.f32 %v635, %v668
  %v704 = vadd.f32 %v636, %v668
  %v705 = vadd.f32 %v637, %v668
  %v706 = vadd.f32 %v638, %v668
  %v707 = vadd.f32 %v639, %v668
  %v708 = vadd.f32 %v640, %v668
  %v709 = vadd.f32 %v641, %v668
  %v710 = vadd.f32 %v642, %v668
  %v711 = vadd.f32 %v643, %v668
  %v712 = vadd.f32 %v644, %v668
  %v713 = vadd.f32 %v645, %v668
  %v714 = vadd.f32 %v646, %v668
  %v715 = vadd.f32 %v647, %v668
  %v716 = vadd.f32 %v648, %v668
  %v717 = vadd.f32 %v649, %v668
  %v718 = vadd.f32 %v650, %v668
  %v719 = vadd.f32 %v651, %v668
  %v720 = vadd.f32 %v652, %v668
  %v721 = vadd.f32 %v653, %v668
  %v722 = vadd.f32 %v654, %v668
  %v723 = vadd.f32 %v655, %v668
  %v724 = vadd.f32 %v656, %v668
  %v725 = vadd.f32 %v657, %v668
  %v726 = vadd.f32 %v658, %v668
  %v727 = vadd.f32 %v659, %v668
  %v728 = vadd.f32 %v660, %v668
  %v729 = vadd.f32 %v661, %v668
  %v730 = vadd.f32 %v662, %v668
  %v731 = vadd.f32 %v663, %v668
  %v732 = vadd.f32 %v664, %v668
  %v733 = vadd.f32 %v665, %v668
  %v734 = vmax.f32 %v670, 0.0
  %v735 = vmax.f32 %v671, 0.0
  %v736 = vmax.f32 %v672, 0.0
  %v737 = vmax.f32 %v673, 0.0
  %v738 = vmax.f32 %v674, 0.0
  %v739 = vmax.f32 %v675, 0.0
  %v740 = vmax.f32 %v676, 0.0
  %v741 = vmax.f32 %v677, 0.0
  %v742 = vmax.f32 %v678, 0.0
  %v743 = vmax.f32 %v679, 0.0
  %v744 = vmax.f32 %v680, 0.0
  %v745 = vmax.f32 %v681, 0.0
  %v746 = vmax.f32 %v682, 0.0
  %v747 = vmax.f32 %v683, 0.0
  %v748 = vmax.f32 %v684, 0.0
  %v749 = vmax.f32 %v685, 0.0
  %v750 = vmax.f32 %v686, 0.0
  %v751 = vmax.f32 %v687, 0.0
  %v752 = vmax.f32 %v688, 0.0
  %v753 = vmax.f32 %v689, 0.0
  %v754 = vmax.f32 %v690, 0.0
  %v755 = vmax.f32 %v691, 0.0
  %v756 = vmax.f32 %v692, 0.0
  %v757 = vmax.f32 %v693, 0.0
  %v758 = vmax.f32 %v694, 0.0
  %v759 = vmax.f32 %v695, 0.0
  %v760 = vmax.f32 %v696, 0.0
  %v761 = vmax.f32 %v697, 0.0
  %v762 = vmax.f32 %v698, 0.0
  %v763 = vmax.f32 %v699, 0.0
  %v764 = vmax.f32 %v700, 0.0
  %v765 = vmax.f32 %v701, 0.0
  %v766 = vmax.f32 %v702, 0.0
  %v767 = vmax.f32 %v703, 0.0
  %v768 = vmax.f32 %v704, 0.0
  %v769 = vmax.f32 %v705, 0.0
  %v770 = vmax.f32 %v706, 0.0
  %v771 = vmax.f32 %v707, 0.0
  %v772 = vmax.f32 %v708, 0.0
  %v773 = vmax.f32 %v709, 0.0
  %v774 = vmax.f32 %v710, 0.0
  %v775 = vmax.f32 %v711, 0.0
  %v776 = vmax.f32 %v712, 0.0
  %v777 = vmax.f32 %v713, 0.0
  %v778 = vmax.f32 %v714, 0.0
  %v779 = vmax.f32 %v715, 0.0
  %v780 = vmax.f32 %v716, 0.0
  %v781 = vmax.f32 %v717, 0.0
  %v782 = vmax.f32 %v718, 0.0
  %v783 = vmax.f32 %v719, 0.0
  %v784 = vmax.f32 %v720, 0.0
  %v785 = vmax.f32 %v721, 0.0
  %v786 = vmax.f32 %v722, 0.0
  %v787 = vmax.f32 %v723, 0.0
  %v788 = vmax.f32 %v724, 0.0
  %v789 = vmax.f32 %v725, 0.0
  %v790 = vmax.f32 %v726, 0.0
  %v791 = vmax.f32 %v727, 0.0
  %v792 = vmax.f32 %v728, 0.0
  %v793 = vmax.f32 %v729, 0.0
  %v794 = vmax.f32 %v730, 0.0
  %v795 = vmax.f32 %v731, 0.0
  %v796 = vmax.f32 %v732, 0.0
  %v797 = vmax.f32 %v733, 0.0
  %v798 = vpack.c.bf16 %v734, %v734
  %v799 = vpack.c.bf16 %v735, %v735
  %v800 = vpack.c.bf16 %v736, %v736
  %v801 = vpack.c.bf16 %v737, %v737
  %v802 = vpack.c.bf16 %v738, %v738
  %v803 = vpack.c.bf16 %v739, %v739
  %v804 = vpack.c.bf16 %v740, %v740
  %v805 = vpack.c.bf16 %v741, %v741
  %v806 = vpack.c.bf16 %v742, %v742
  %v807 = vpack.c.bf16 %v743, %v743
  %v808 = vpack.c.bf16 %v744, %v744
  %v809 = vpack.c.bf16 %v745, %v745
  %v810 = vpack.c.bf16 %v746, %v746
  %v811 = vpack.c.bf16 %v747, %v747
  %v812 = vpack.c.bf16 %v748, %v748
  %v813 = vpack.c.bf16 %v749, %v749
  %v814 = vpack.c.bf16 %v750, %v750
  %v815 = vpack.c.bf16 %v751, %v751
  %v816 = vpack.c.bf16 %v752, %v752
  %v817 = vpack.c.bf16 %v753, %v753
  %v818 = vpack.c.bf16 %v754, %v754
  %v819 = vpack.c.bf16 %v755, %v755
  %v820 = vpack.c.bf16 %v756, %v756
  %v821 = vpack.c.bf16 %v757, %v757
  %v822 = vpack.c.bf16 %v758, %v758
  %v823 = vpack.c.bf16 %v759, %v759
  %v824 = vpack.c.bf16 %v760, %v760
  %v825 = vpack.c.bf16 %v761, %v761
  %v826 = vpack.c.bf16 %v762, %v762
  %v827 = vpack.c.bf16 %v763, %v763
  %v828 = vpack.c.bf16 %v764, %v764
  %v829 = vpack.c.bf16 %v765, %v765
  %v830 = vpack.c.bf16 %v766, %v766
  %v831 = vpack.c.bf16 %v767, %v767
  %v832 = vpack.c.bf16 %v768, %v768
  %v833 = vpack.c.bf16 %v769, %v769
  %v834 = vpack.c.bf16 %v770, %v770
  %v835 = vpack.c.bf16 %v771, %v771
  %v836 = vpack.c.bf16 %v772, %v772
  %v837 = vpack.c.bf16 %v773, %v773
  %v838 = vpack.c.bf16 %v774, %v774
  %v839 = vpack.c.bf16 %v775, %v775
  %v840 = vpack.c.bf16 %v776, %v776
  %v841 = vpack.c.bf16 %v777, %v777
  %v842 = vpack.c.bf16 %v778, %v778
  %v843 = vpack.c.bf16 %v779, %v779
  %v844 = vpack.c.bf16 %v780, %v780
  %v845 = vpack.c.bf16 %v781, %v781
  %v846 = vpack.c.bf16 %v782, %v782
  %v847 = vpack.c.bf16 %v783, %v783
  %v848 = vpack.c.bf16 %v784, %v784
  %v849 = vpack.c.bf16 %v785, %v785
  %v850 = vpack.c.bf16 %v786, %v786
  %v851 = vpack.c.bf16 %v787, %v787
  %v852 = vpack.c.bf16 %v788, %v788
  %v853 = vpack.c.bf16 %v789, %v789
  %v854 = vpack.c.bf16 %v790, %v790
  %v855 = vpack.c.bf16 %v791, %v791
  %v856 = vpack.c.bf16 %v792, %v792
  %v857 = vpack.c.bf16 %v793, %v793
  %v858 = vpack.c.bf16 %v794, %v794
  %v859 = vpack.c.bf16 %v795, %v795
  %v860 = vpack.c.bf16 %v796, %v796
  %v861 = vpack.c.bf16 %v797, %v797
  %vm862 = vcmask 125952
  %863 = vst.msk [vmem:[%s7] sm:$0xf] %vm862, %v798
  %864 = vst.msk [vmem:[%s7 + $0x4] sm:$0xf] %vm862, %v799
  %865 = vst.msk [vmem:[%s7 + $0x8] sm:$0xf] %vm862, %v800
  %866 = vst.msk [vmem:[%s7 + $0xc] sm:$0xf] %vm862, %v801
  %867 = vst.msk [vmem:[%s7 + $0x10] sm:$0xf] %vm862, %v802
  %868 = vst.msk [vmem:[%s7 + $0x14] sm:$0xf] %vm862, %v803
  %869 = vst.msk [vmem:[%s7 + $0x18] sm:$0xf] %vm862, %v804
  %870 = vst.msk [vmem:[%s7 + $0x1c] sm:$0xf] %vm862, %v805
  %871 = vst.msk [vmem:[%s7 + $0x20] sm:$0xf] %vm862, %v806
  %872 = vst.msk [vmem:[%s7 + $0x24] sm:$0xf] %vm862, %v807
  %873 = vst.msk [vmem:[%s7 + $0x28] sm:$0xf] %vm862, %v808
  %874 = vst.msk [vmem:[%s7 + $0x2c] sm:$0xf] %vm862, %v809
  %875 = vst.msk [vmem:[%s7 + $0x30] sm:$0xf] %vm862, %v810
  %876 = vst.msk [vmem:[%s7 + $0x34] sm:$0xf] %vm862, %v811
  %877 = vst.msk [vmem:[%s7 + $0x38] sm:$0xf] %vm862, %v812
  %878 = vst.msk [vmem:[%s7 + $0x3c] sm:$0xf] %vm862, %v813
  %879 = vst.msk [vmem:[%s7 + $0x40] sm:$0xf] %vm862, %v814
  %880 = vst.msk [vmem:[%s7 + $0x44] sm:$0xf] %vm862, %v815
  %881 = vst.msk [vmem:[%s7 + $0x48] sm:$0xf] %vm862, %v816
  %882 = vst.msk [vmem:[%s7 + $0x4c] sm:$0xf] %vm862, %v817
  %883 = vst.msk [vmem:[%s7 + $0x50] sm:$0xf] %vm862, %v818
  %884 = vst.msk [vmem:[%s7 + $0x54] sm:$0xf] %vm862, %v819
  %885 = vst.msk [vmem:[%s7 + $0x58] sm:$0xf] %vm862, %v820
  %886 = vst.msk [vmem:[%s7 + $0x5c] sm:$0xf] %vm862, %v821
  %887 = vst.msk [vmem:[%s7 + $0x60] sm:$0xf] %vm862, %v822
  %888 = vst.msk [vmem:[%s7 + $0x64] sm:$0xf] %vm862, %v823
  %889 = vst.msk [vmem:[%s7 + $0x68] sm:$0xf] %vm862, %v824
  %890 = vst.msk [vmem:[%s7 + $0x6c] sm:$0xf] %vm862, %v825
  %891 = vst.msk [vmem:[%s7 + $0x70] sm:$0xf] %vm862, %v826
  %892 = vst.msk [vmem:[%s7 + $0x74] sm:$0xf] %vm862, %v827
  %893 = vst.msk [vmem:[%s7 + $0x78] sm:$0xf] %vm862, %v828
  %894 = vst.msk [vmem:[%s7 + $0x7c] sm:$0xf] %vm862, %v829
  %895 = vst.msk [vmem:[%s7 + $0x80] sm:$0xf] %vm862, %v830
  %896 = vst.msk [vmem:[%s7 + $0x84] sm:$0xf] %vm862, %v831
  %897 = vst.msk [vmem:[%s7 + $0x88] sm:$0xf] %vm862, %v832
  %898 = vst.msk [vmem:[%s7 + $0x8c] sm:$0xf] %vm862, %v833
  %899 = vst.msk [vmem:[%s7 + $0x90] sm:$0xf] %vm862, %v834
  %900 = vst.msk [vmem:[%s7 + $0x94] sm:$0xf] %vm862, %v835
  %901 = vst.msk [vmem:[%s7 + $0x98] sm:$0xf] %vm862, %v836
  %902 = vst.msk [vmem:[%s7 + $0x9c] sm:$0xf] %vm862, %v837
  %903 = vst.msk [vmem:[%s7 + $0xa0] sm:$0xf] %vm862, %v838
  %904 = vst.msk [vmem:[%s7 + $0xa4] sm:$0xf] %vm862, %v839
  %905 = vst.msk [vmem:[%s7 + $0xa8] sm:$0xf] %vm862, %v840
  %906 = vst.msk [vmem:[%s7 + $0xac] sm:$0xf] %vm862, %v841
  %907 = vst.msk [vmem:[%s7 + $0xb0] sm:$0xf] %vm862, %v842
  %908 = vst.msk [vmem:[%s7 + $0xb4] sm:$0xf] %vm862, %v843
  %909 = vst.msk [vmem:[%s7 + $0xb8] sm:$0xf] %vm862, %v844
  %910 = vst.msk [vmem:[%s7 + $0xbc] sm:$0xf] %vm862, %v845
  %911 = vst.msk [vmem:[%s7 + $0xc0] sm:$0xf] %vm862, %v846
  %912 = vst.msk [vmem:[%s7 + $0xc4] sm:$0xf] %vm862, %v847
  %913 = vst.msk [vmem:[%s7 + $0xc8] sm:$0xf] %vm862, %v848
  %914 = vst.msk [vmem:[%s7 + $0xcc] sm:$0xf] %vm862, %v849
  %915 = vst.msk [vmem:[%s7 + $0xd0] sm:$0xf] %vm862, %v850
  %916 = vst.msk [vmem:[%s7 + $0xd4] sm:$0xf] %vm862, %v851
  %917 = vst.msk [vmem:[%s7 + $0xd8] sm:$0xf] %vm862, %v852
  %918 = vst.msk [vmem:[%s7 + $0xdc] sm:$0xf] %vm862, %v853
  %919 = vst.msk [vmem:[%s7 + $0xe0] sm:$0xf] %vm862, %v854
  %920 = vst.msk [vmem:[%s7 + $0xe4] sm:$0xf] %vm862, %v855
  %921 = vst.msk [vmem:[%s7 + $0xe8] sm:$0xf] %vm862, %v856
  %922 = vst.msk [vmem:[%s7 + $0xec] sm:$0xf] %vm862, %v857
  %923 = vst.msk [vmem:[%s7 + $0xf0] sm:$0xf] %vm862, %v858
  %924 = vst.msk [vmem:[%s7 + $0xf4] sm:$0xf] %vm862, %v859
  %925 = vst.msk [vmem:[%s7 + $0xf8] sm:$0xf] %vm862, %v860
  %926 = vst.msk [vmem:[%s7 + $0xfc] sm:$0xf] %vm862, %v861
  // Predicated region
  $region30: #{dense_block_forward.8} parent=0 // pred_check
    _
  $region31: #{dense_block_forward.8} parent=0 // pred_check_branch
    %928 = sbr.rel (0) target = $region33
  $region32: #{dense_block_forward.8} parent=0 // pred_region
    _
  $region33: #{dense_block_forward.8} parent=0 // pred_fallthru
    _
  // Predicated region
  $region34: #{dense_block_forward.8} parent=0 // pred_check
    _
  $region35: #{dense_block_forward.8} parent=0 // pred_check_branch
    %930 = sbr.rel (0) target = $region37
  $region36: #{dense_block_forward.8} parent=0 // pred_region
    _
  $region37: #{dense_block_forward.8} parent=0 // pred_fallthru
    _

// kernel: dense_block_forward.7
$region0: #{dense_block_forward.7}
  #allocation0 [shape = 'u32[]', space=smem, size = 0x4, offset = 0x4, fixed_abs, tag = 'smem constant byte address 0x4 - core index']
  #allocation1 [shape = 'u32[72,128]{1,0:T(1,128)}', space=vmem, size = 0x9000, scoped, tag = 'internal scratch']
  %s0 = inlined_call_operand.vmem [shape: bf16[2,32,18,16], index: 0, kind: input, shape index: {}, may-alias: {0,1}]
  %s1 = inlined_call_operand.vmem [shape: bf16[2,32,18,16], index: 1, kind: input, shape index: {}, may-alias: {0,1}]
  %s2 = inlined_call_operand.vmem [shape: bf16[144,4], index: 2, kind: input, shape index: {}]
  %s3 = inlined_call_operand.vmem [shape: f32[1,4], index: 3, kind: input, shape index: {}]
  %s4 = inlined_call_operand.vmem [shape: f32[2,16,16,4], index: 4, kind: output, shape index: {}]
  %s5 = sld [smem:[#allocation0]]
  $region49: #{dense_block_forward.7} parent=0
    _
  %s7 = ssub.s32 1, %s5
  %s8 = scalar_select 0, %s7, %s5
  loop: start=0, step=1, limit=4
  $region2: #{dense_block_forward.7} parent=0 // loop_pre_header
    _
  $region3: #{dense_block_forward.7} parent=0 // loop_header
    %s10 = sphi 0, %s14
    %p11 = scmp.ge.s32.totalorder %s10, 4
    %s17 = sphi 0, %s29
    %s18 = sphi 0, %s25
    %s19 = sphi 0, %s17
    %s20 = sphi 0, %s18
    %s21 = sphi 0, %s19
    %s22 = sphi 0, %s20
    %s34 = sphi 0, %s36
    %s37 = sphi 0, %s34
    %s38 = sphi 0, %s37
    %s54 = sphi 0, %s38
    %s64 = sphi 0, %s66
    %s67 = sphi 0, %s64
    %s68 = sphi 0, %s67
    %s84 = sphi 0, %s68
    %s88 = sphi 0, %s88
    %s90 = sphi 0, %s88
    %s91 = sphi 0, %s90
    %s105 = sphi 0, %s91
    %s109 = sphi 0, %s109
    %s111 = sphi 0, %s109
    %s112 = sphi 0, %s111
    %s126 = sphi 0, %s112
    %s134 = sphi 0, %s136
    %s137 = sphi 0, %s134
    %s138 = sphi 0, %s137
    %s154 = sphi 0, %s138
  $region4: #{dense_block_forward.7} parent=0 // loop_header_branch
    %13 = sbr.rel (%p11) target = $region8
  $region5: #{dense_block_forward.7} parent=0 // loop_body
    %s15 = ssub.s32 %s10, 1
    %s16 = ssub.s32 %s10, 2
    %s23 = sadd.s32 1, %s18
    %p24 = scmp.ge.s32.totalorder %s23, 1
    %s25 = scalar_select %p24, 0, %s23
    %s26 = sadd.s32 1, %s17
    %s27 = scalar_select %p24, %s26, %s17
    %p28 = scmp.ge.s32.totalorder %s27, 2
    %s29 = scalar_select %p28, 0, %s27
    %s30 = ssub.s32 %s17, %s29
    %s31 = ssub.s32 %s18, %s25
    %s32 = sor.u32 %s30, %s31
    %p33 = scmp.eq.s32.totalorder %s32, 0
    %s35 = sadd.s32 %s34, 1
    %s36 = scalar_select %p33, %s34, %s35
    %p39 = pneg %p33
    %p40 = scmp.eq.s32.totalorder %s10, 1
    %p41 = por %p39, %p40
    %p42 = scmp.ne.s32.totalorder %s34, %s37
    %p43 = scmp.eq.s32.totalorder %s10, 0
    %p44 = por %p42, %p43
    %p45 = scmp.ne.s32.totalorder %s34, %s37
    %p46 = scmp.eq.s32.totalorder %s15, 1
    %p47 = por %p45, %p46
    %p48 = scmp.ne.s32.totalorder %s37, %s38
    %p49 = scmp.eq.s32.totalorder %s15, 0
    %p50 = por %p48, %p49
    %p51 = scmp.ne.s32.totalorder %s37, %s38
    %p52 = scmp.eq.s32.totalorder %s16, 1
    %p53 = por %p51, %p52
    %p55 = scmp.ne.s32.totalorder %s38, %s54
    %p56 = scmp.eq.s32.totalorder %s16, 0
    %p57 = por %p55, %p56
    %s58 = sadd.s32 %s18, 1
    %s59 = sadd.s32 %s25, 1
    %s60 = ssub.s32 %s17, %s29
    %s61 = ssub.s32 %s58, %s59
    %s62 = sor.u32 %s60, %s61
    %p63 = scmp.eq.s32.totalorder %s62, 0
    %s65 = sadd.s32 %s64, 1
    %s66 = scalar_select %p63, %s64, %s65
    %p69 = pneg %p63
    %p70 = scmp.eq.s32.totalorder %s10, 1
    %p71 = por %p69, %p70
    %p72 = scmp.ne.s32.totalorder %s64, %s67
    %p73 = scmp.eq.s32.totalorder %s10, 0
    %p74 = por %p72, %p73
    %p75 = scmp.ne.s32.totalorder %s64, %s67
    %p76 = scmp.eq.s32.totalorder %s15, 1
    %p77 = por %p75, %p76
    %p78 = scmp.ne.s32.totalorder %s67, %s68
    %p79 = scmp.eq.s32.totalorder %s15, 0
    %p80 = por %p78, %p79
    %p81 = scmp.ne.s32.totalorder %s67, %s68
    %p82 = scmp.eq.s32.totalorder %s16, 1
    %p83 = por %p81, %p82
    %p85 = scmp.ne.s32.totalorder %s68, %s84
    %p86 = scmp.eq.s32.totalorder %s16, 0
    %p87 = por %p85, %p86
    %s89 = sadd.s32 %s88, 1
    %p92 = scmp.eq.s32.totalorder %s10, 1
    %p93 = scmp.ne.s32.totalorder %s88, %s90
    %p94 = scmp.eq.s32.totalorder %s10, 0
    %p95 = por %p93, %p94
    %p96 = scmp.ne.s32.totalorder %s88, %s90
    %p97 = scmp.eq.s32.totalorder %s15, 1
    %p98 = por %p96, %p97
    %p99 = scmp.ne.s32.totalorder %s90, %s91
    %p100 = scmp.eq.s32.totalorder %s15, 0
    %p101 = por %p99, %p100
    %p102 = scmp.ne.s32.totalorder %s90, %s91
    %p103 = scmp.eq.s32.totalorder %s16, 1
    %p104 = por %p102, %p103
    %p106 = scmp.ne.s32.totalorder %s91, %s105
    %p107 = scmp.eq.s32.totalorder %s16, 0
    %p108 = por %p106, %p107
    %s110 = sadd.s32 %s109, 1
    %p113 = scmp.eq.s32.totalorder %s10, 1
    %p114 = scmp.ne.s32.totalorder %s109, %s111
    %p115 = scmp.eq.s32.totalorder %s10, 0
    %p116 = por %p114, %p115
    %p117 = scmp.ne.s32.totalorder %s109, %s111
    %p118 = scmp.eq.s32.totalorder %s15, 1
    %p119 = por %p117, %p118
    %p120 = scmp.ne.s32.totalorder %s111, %s112
    %p121 = scmp.eq.s32.totalorder %s15, 0
    %p122 = por %p120, %p121
    %p123 = scmp.ne.s32.totalorder %s111, %s112
    %p124 = scmp.eq.s32.totalorder %s16, 1
    %p125 = por %p123, %p124
    %p127 = scmp.ne.s32.totalorder %s112, %s126
    %p128 = scmp.eq.s32.totalorder %s16, 0
    %p129 = por %p127, %p128
    %s130 = ssub.s32 %s17, %s29
    %s131 = ssub.s32 %s18, %s25
    %s132 = sor.u32 %s130, %s131
    %p133 = scmp.eq.s32.totalorder %s132, 0
    %s135 = sadd.s32 %s134, 1
    %s136 = scalar_select %p133, %s134, %s135
    %p139 = pneg %p133
    %p140 = scmp.eq.s32.totalorder %s10, 1
    %p141 = por %p139, %p140
    %p142 = scmp.ne.s32.totalorder %s134, %s137
    %p143 = scmp.eq.s32.totalorder %s10, 0
    %p144 = por %p142, %p143
    %p145 = scmp.ne.s32.totalorder %s134, %s137
    %p146 = scmp.eq.s32.totalorder %s15, 1
    %p147 = por %p145, %p146
    %p148 = scmp.ne.s32.totalorder %s137, %s138
    %p149 = scmp.eq.s32.totalorder %s15, 0
    %p150 = por %p148, %p149
    %p151 = scmp.ne.s32.totalorder %s137, %s138
    %p152 = scmp.eq.s32.totalorder %s16, 1
    %p153 = por %p151, %p152
    %p155 = scmp.ne.s32.totalorder %s138, %s154
    %p156 = scmp.eq.s32.totalorder %s16, 0
    %p157 = por %p155, %p156
    %p158 = scmp.le.s32.totalorder 1, %s10
    %p159 = scmp.lt.s32.totalorder %s10, 3
    %p160 = pnand %p158, %p159
    %p161 = pneg %p160
    // Predicated region
    $region9: #{dense_block_forward.7} parent=5 // pred_check
      _
    $region10: #{dense_block_forward.7} parent=5 // pred_check_branch
      %163 = sbr.rel (%p160) target = $region12
    $region11: #{dense_block_forward.7} parent=5 // pred_region
      %s164 = ssub.s32 %s10, 1
      // Predicated region
      $region13: #{dense_block_forward.7} parent=11 // pred_check
        %p165 = pneg %p101
      $region14: #{dense_block_forward.7} parent=11 // pred_check_branch
        %167 = sbr.rel (%p165) target = $region16
      $region15: #{dense_block_forward.7} parent=11 // pred_region
        _
      $region16: #{dense_block_forward.7} parent=11 // pred_fallthru
        _
      // Predicated region
      $region17: #{dense_block_forward.7} parent=11 // pred_check
        %p168 = pneg %p122
      $region18: #{dense_block_forward.7} parent=11 // pred_check_branch
        %170 = sbr.rel (%p168) target = $region20
      $region19: #{dense_block_forward.7} parent=11 // pred_region
        _
      $region20: #{dense_block_forward.7} parent=11 // pred_fallthru
        _
    $region12: #{dense_block_forward.7} parent=5 // pred_fallthru
      _
    %p171 = scmp.lt.s32.totalorder %s10, 2
    // Predicated region
    $region21: #{dense_block_forward.7} parent=5 // pred_check
      %p172 = pneg %p171
    $region22: #{dense_block_forward.7} parent=5 // pred_check_branch
      %174 = sbr.rel (%p172) target = $region24
    $region23: #{dense_block_forward.7} parent=5 // pred_region
      // Predicated region
      $region25: #{dense_block_forward.7} parent=23 // pred_check
        %p175 = pneg %p44
      $region26: #{dense_block_forward.7} parent=23 // pred_check_branch
        %177 = sbr.rel (%p175) target = $region28
      $region27: #{dense_block_forward.7} parent=23 // pred_region
        %s178 = smul.u32 16, %s18
        %p179 = scmp.lt.s32.totalorder %s17, 1
        %s180 = scalar_select %p179, %s17, 1
        %p181 = scmp.lt.s32.totalorder %s178, 31
        %s182 = scalar_select %p181, %s178, 31
        %s183 = smul.addr %s182, 3
        %s184 = smul.addr %s180, 96
        %s185 = sadd.s32 %s183, %s184
        %s186 = smul.addr %s185, 4
        %s187 = scalar_lea.vmem %s0, %s186
        %s188 = smul.u32 16, %s18
      $region28: #{dense_block_forward.7} parent=23 // pred_fallthru
        _
      // Predicated region
      $region29: #{dense_block_forward.7} parent=23 // pred_check
        %p189 = pneg %p74
      $region30: #{dense_block_forward.7} parent=23 // pred_check_branch
        %191 = sbr.rel (%p189) target = $region32
      $region31: #{dense_block_forward.7} parent=23 // pred_region
        %s192 = sadd.s32 %s18, 1
        %s193 = smul.u32 16, %s192
        %p194 = scmp.lt.s32.totalorder %s17, 1
        %s195 = scalar_select %p194, %s17, 1
        %p196 = scmp.lt.s32.totalorder %s193, 31
        %s197 = scalar_select %p196, %s193, 31
        %s198 = smul.addr %s197, 3
        %s199 = smul.addr %s195, 96
        %s200 = sadd.s32 %s198, %s199
        %s201 = smul.addr %s200, 4
        %s202 = scalar_lea.vmem %s1, %s201
        %s203 = sadd.s32 %s18, 1
        %s204 = smul.u32 16, %s203
      $region32: #{dense_block_forward.7} parent=23 // pred_fallthru
        _
    $region24: #{dense_block_forward.7} parent=5 // pred_fallthru
      _
    %p205 = scmp.le.s32.totalorder 1, %s10
    %p206 = scmp.lt.s32.totalorder %s10, 3
    %p207 = pnand %p205, %p206
    %p208 = pneg %p207
    // Predicated region
    $region33: #{dense_block_forward.7} parent=5 // pred_check
      _
    $region34: #{dense_block_forward.7} parent=5 // pred_check_branch
      %210 = sbr.rel (%p207) target = $region36
    $region35: #{dense_block_forward.7} parent=5 // pred_region
      %s211 = ssub.s32 %s10, 1
      %s212 = smul.u32 16, %s20
      %p213 = scmp.lt.s32.totalorder %s19, 1
      %s214 = scalar_select %p213, %s19, 1
      %p215 = scmp.lt.s32.totalorder %s212, 31
      %s216 = scalar_select %p215, %s212, 31
      %s217 = smul.addr %s216, 3
      %s218 = smul.addr %s214, 96
      %s219 = sadd.s32 %s217, %s218
      %s220 = smul.addr %s219, 4
      %s221 = scalar_lea.vmem %s0, %s220
      %p222 = pneg %p50
      %p223 = pneg %p47
      %s224 = sadd.s32 %s20, 1
      %s225 = smul.u32 16, %s224
      %p226 = scmp.lt.s32.totalorder %s19, 1
      %s227 = scalar_select %p226, %s19, 1
      %p228 = scmp.lt.s32.totalorder %s225, 31
      %s229 = scalar_select %p228, %s225, 31
      %s230 = smul.addr %s229, 3
      %s231 = smul.addr %s227, 96
      %s232 = sadd.s32 %s230, %s231
      %s233 = smul.addr %s232, 4
      %s234 = scalar_lea.vmem %s1, %s233
      %p235 = pneg %p80
      %p236 = pneg %p77
      %p237 = pneg %p101
      %p238 = pneg %p98
      %p239 = pneg %p122
      %p240 = pneg %p119
      %p241 = pneg %p150
      %p242 = pneg %p147
      %s243 = smul.u32 16, %s20
      %p244 = scmp.lt.s32.totalorder %s19, 1
      %s245 = scalar_select %p244, %s19, 1
      %p246 = scmp.lt.s32.totalorder %s243, 15
      %s247 = scalar_select %p246, %s243, 15
      %s248 = smul.addr %s247, 2
      %s249 = smul.addr %s245, 32
      %s250 = sadd.s32 %s248, %s249
      %s251 = smul.addr %s250, 8
      %s252 = scalar_lea.vmem %s4, %s251
      %s253 = smul.u32 16, %s20
      %p254 = scmp.lt.s32.totalorder %s19, 1
      %s255 = scalar_select %p254, %s19, 1
      %p256 = scmp.lt.s32.totalorder %s253, 31
      %s257 = scalar_select %p256, %s253, 31
      %s258 = smul.addr %s257, 3
      %s259 = smul.addr %s255, 96
      %s260 = sadd.s32 %s258, %s259
      %s261 = smul.addr %s260, 4
      %s262 = scalar_lea.vmem %s0, %s261
      %s263 = smul.u32 16, %s20
      %s264 = sadd.s32 %s20, 1
      %s265 = smul.u32 16, %s264
      %p266 = scmp.lt.s32.totalorder %s19, 1
      %s267 = scalar_select %p266, %s19, 1
      %p268 = scmp.lt.s32.totalorder %s265, 31
      %s269 = scalar_select %p268, %s265, 31
      %s270 = smul.addr %s269, 3
      %s271 = smul.addr %s267, 96
      %s272 = sadd.s32 %s270, %s271
      %s273 = smul.addr %s272, 4
      %s274 = scalar_lea.vmem %s1, %s273
      %s275 = sadd.s32 %s20, 1
      %s276 = smul.u32 16, %s275
      %s277 = smul.u32 16, %s20
      %p278 = scmp.lt.s32.totalorder %s19, 1
      %s279 = scalar_select %p278, %s19, 1
      %p280 = scmp.lt.s32.totalorder %s277, 15
      %s281 = scalar_select %p280, %s277, 15
      %s282 = smul.addr %s281, 2
      %s283 = smul.addr %s279, 32
      %s284 = sadd.s32 %s282, %s283
      %s285 = smul.addr %s284, 8
      %s286 = scalar_lea.vmem %s4, %s285
      %s287 = smul.u32 16, %s20
      %v289 = vld [vmem:[%s262] sm:$0xf]
      %v290 = vld [vmem:[%s262 + $0x4] sm:$0xf]
      %v291 = vld [vmem:[%s262 + $0x8] sm:$0x1]
      %v292 = vld [vmem:[%s262 + $0xc] sm:$0xf]
      %v293 = vld [vmem:[%s262 + $0x10] sm:$0xf]
      %v294 = vld [vmem:[%s262 + $0x14] sm:$0x1]
      %v295 = vld [vmem:[%s262 + $0x18] sm:$0xf]
      %v296 = vld [vmem:[%s262 + $0x1c] sm:$0xf]
      %v297 = vld [vmem:[%s262 + $0x20] sm:$0x1]
      %v298 = vld [vmem:[%s262 + $0x24] sm:$0xf]
      %v299 = vld [vmem:[%s262 + $0x28] sm:$0xf]
      %v300 = vld [vmem:[%s262 + $0x2c] sm:$0x1]
      %v301 = vld [vmem:[%s262 + $0x30] sm:$0xf]
      %v302 = vld [vmem:[%s262 + $0x34] sm:$0xf]
      %v303 = vld [vmem:[%s262 + $0x38] sm:$0x1]
      %v304 = vld [vmem:[%s262 + $0x3c] sm:$0xf]
      %v305 = vld [vmem:[%s262 + $0x40] sm:$0xf]
      %v306 = vld [vmem:[%s262 + $0x44] sm:$0x1]
      %v307 = vld [vmem:[%s262 + $0x48] sm:$0xf]
      %v308 = vld [vmem:[%s262 + $0x4c] sm:$0xf]
      %v309 = vld [vmem:[%s262 + $0x50] sm:$0x1]
      %v310 = vld [vmem:[%s262 + $0x54] sm:$0xf]
      %v311 = vld [vmem:[%s262 + $0x58] sm:$0xf]
      %v312 = vld [vmem:[%s262 + $0x5c] sm:$0x1]
      %v313 = vld [vmem:[%s262 + $0x60] sm:$0xf]
      %v314 = vld [vmem:[%s262 + $0x64] sm:$0xf]
      %v315 = vld [vmem:[%s262 + $0x68] sm:$0x1]
      %v316 = vld [vmem:[%s262 + $0x6c] sm:$0xf]
      %v317 = vld [vmem:[%s262 + $0x70] sm:$0xf]
      %v318 = vld [vmem:[%s262 + $0x74] sm:$0x1]
      %v319 = vld [vmem:[%s262 + $0x78] sm:$0xf]
      %v320 = vld [vmem:[%s262 + $0x7c] sm:$0xf]
      %v321 = vld [vmem:[%s262 + $0x80] sm:$0x1]
      %v322 = vld [vmem:[%s262 + $0x84] sm:$0xf]
      %v323 = vld [vmem:[%s262 + $0x88] sm:$0xf]
      %v324 = vld [vmem:[%s262 + $0x8c] sm:$0x1]
      %v325 = vld [vmem:[%s262 + $0x90] sm:$0xf]
      %v326 = vld [vmem:[%s262 + $0x94] sm:$0xf]
      %v327 = vld [vmem:[%s262 + $0x98] sm:$0x1]
      %v328 = vld [vmem:[%s262 + $0x9c] sm:$0xf]
      %v329 = vld [vmem:[%s262 + $0xa0] sm:$0xf]
      %v330 = vld [vmem:[%s262 + $0xa4] sm:$0x1]
      %v331 = vld [vmem:[%s262 + $0xa8] sm:$0xf]
      %v332 = vld [vmem:[%s262 + $0xac] sm:$0xf]
      %v333 = vld [vmem:[%s262 + $0xb0] sm:$0x1]
      %v334 = vld [vmem:[%s262 + $0xb4] sm:$0xf]
      %v335 = vld [vmem:[%s262 + $0xb8] sm:$0xf]
      %v336 = vld [vmem:[%s262 + $0xbc] sm:$0x1]
      %v337 = vld [vmem:[%s274] sm:$0xf]
      %v338 = vld [vmem:[%s274 + $0x4] sm:$0xf]
      %v339 = vld [vmem:[%s274 + $0x8] sm:$0x1]
      %v340 = vld [vmem:[%s274 + $0xc] sm:$0xf]
      %v341 = vld [vmem:[%s274 + $0x10] sm:$0xf]
      %v342 = vld [vmem:[%s274 + $0x14] sm:$0x1]
      %vm343 = vsmask.f32 3328
      %vm344 = vsmask.f32 7440
      %vm345 = vmor %vm343, %vm344
      %v347 = vshrl.u32 %v289, 16
      %v349 = vrot.slane %v347, 4
      %v350 = vshll.u32 %v289, 16
      %v352 = vrot.slane %v350, 5
      %v353 = vor.u32 %v349, %v352
      %v354 = vrot.slane %v353, 4
      %v356 = vshll.u32 %v290, 16
      %v358 = vrot.slane %v356, 5
      %v359 = vsel %vm345, %v354, %v358
      %v360 = vshrl.u32 %v290, 16
      %v362 = vrot.slane %v360, 4
      %v363 = vor.u32 %v362, %v358
      %v364 = vrot.slane %v363, 4
      %v366 = vshll.u32 %v291, 16
      %v368 = vrot.slane %v366, 5
      %v369 = vsel %vm345, %v364, %v368
      %v371 = vshrl.u32 %v292, 16
      %v373 = vrot.slane %v371, 4
      %v374 = vshll.u32 %v292, 16
      %v376 = vrot.slane %v374, 5
      %v377 = vor.u32 %v373, %v376
      %v378 = vrot.slane %v377, 4
      %v380 = vshll.u32 %v293, 16
      %v382 = vrot.slane %v380, 5
      %v383 = vsel %vm345, %v378, %v382
      %v384 = vshrl.u32 %v293, 16
      %v386 = vrot.slane %v384, 4
      %v387 = vor.u32 %v386, %v382
      %v388 = vrot.slane %v387, 4
      %v390 = vshll.u32 %v294, 16
      %v392 = vrot.slane %v390, 5
      %v393 = vsel %vm345, %v388, %v392
      %v395 = vshrl.u32 %v295, 16
      %v397 = vrot.slane %v395, 4
      %v398 = vshll.u32 %v295, 16
      %v400 = vrot.slane %v398, 5
      %v401 = vor.u32 %v397, %v400
      %v402 = vrot.slane %v401, 4
      %v404 = vshll.u32 %v296, 16
      %v406 = vrot.slane %v404, 5
      %v407 = vsel %vm345, %v402, %v406
      %v408 = vshrl.u32 %v296, 16
      %v410 = vrot.slane %v408, 4
      %v411 = vor.u32 %v410, %v406
      %v412 = vrot.slane %v411, 4
      %v414 = vshll.u32 %v297, 16
      %v416 = vrot.slane %v414, 5
      %v417 = vsel %vm345, %v412, %v416
      %v419 = vshrl.u32 %v298, 16
      %v421 = vrot.slane %v419, 4
      %v422 = vshll.u32 %v298, 16
      %v424 = vrot.slane %v422, 5
      %v425 = vor.u32 %v421, %v424
      %v426 = vrot.slane %v425, 4
      %v428 = vshll.u32 %v299, 16
      %v430 = vrot.slane %v428, 5
      %v431 = vsel %vm345, %v426, %v430
      %v432 = vshrl.u32 %v299, 16
      %v434 = vrot.slane %v432, 4
      %v435 = vor.u32 %v434, %v430
      %v436 = vrot.slane %v435, 4
      %v438 = vshll.u32 %v300, 16
      %v440 = vrot.slane %v438, 5
      %v441 = vsel %vm345, %v436, %v440
      %v443 = vshrl.u32 %v301, 16
      %v445 = vrot.slane %v443, 4
      %v446 = vshll.u32 %v301, 16
      %v448 = vrot.slane %v446, 5
      %v449 = vor.u32 %v445, %v448
      %v450 = vrot.slane %v449, 4
      %v452 = vshll.u32 %v302, 16
      %v454 = vrot.slane %v452, 5
      %v455 = vsel %vm345, %v450, %v454
      %v456 = vshrl.u32 %v302, 16
      %v458 = vrot.slane %v456, 4
      %v459 = vor.u32 %v458, %v454
      %v460 = vrot.slane %v459, 4
      %v462 = vshll.u32 %v303, 16
      %v464 = vrot.slane %v462, 5
      %v465 = vsel %vm345, %v460, %v464
      %v467 = vshrl.u32 %v304, 16
      %v469 = vrot.slane %v467, 4
      %v470 = vshll.u32 %v304, 16
      %v472 = vrot.slane %v470, 5
      %v473 = vor.u32 %v469, %v472
      %v474 = vrot.slane %v473, 4
      %v476 = vshll.u32 %v305, 16
      %v478 = vrot.slane %v476, 5
      %v479 = vsel %vm345, %v474, %v478
      %v480 = vshrl.u32 %v305, 16
      %v482 = vrot.slane %v480, 4
      %v483 = vor.u32 %v482, %v478
      %v484 = vrot.slane %v483, 4
      %v486 = vshll.u32 %v306, 16
      %v488 = vrot.slane %v486, 5
      %v489 = vsel %vm345, %v484, %v488
      %v491 = vshrl.u32 %v307, 16
      %v493 = vrot.slane %v491, 4
      %v494 = vshll.u32 %v307, 16
      %v496 = vrot.slane %v494, 5
      %v497 = vor.u32 %v493, %v496
      %v498 = vrot.slane %v497, 4
      %v500 = vshll.u32 %v308, 16
      %v502 = vrot.slane %v500, 5
      %v503 = vsel %vm345, %v498, %v502
      %v504 = vshrl.u32 %v308, 16
      %v506 = vrot.slane %v504, 4
      %v507 = vor.u32 %v506, %v502
      %v508 = vrot.slane %v507, 4
      %v510 = vshll.u32 %v309, 16
      %v512 = vrot.slane %v510, 5
      %v513 = vsel %vm345, %v508, %v512
      %v515 = vshrl.u32 %v310, 16
      %v517 = vrot.slane %v515, 4
      %v518 = vshll.u32 %v310, 16
      %v520 = vrot.slane %v518, 5
      %v521 = vor.u32 %v517, %v520
      %v522 = vrot.slane %v521, 4
      %v524 = vshll.u32 %v311, 16
      %v526 = vrot.slane %v524, 5
      %v527 = vsel %vm345, %v522, %v526
      %v528 = vshrl.u32 %v311, 16
      %v530 = vrot.slane %v528, 4
      %v531 = vor.u32 %v530, %v526
      %v532 = vrot.slane %v531, 4
      %v534 = vshll.u32 %v312, 16
      %v536 = vrot.slane %v534, 5
      %v537 = vsel %vm345, %v532, %v536
      %v539 = vshrl.u32 %v313, 16
      %v541 = vrot.slane %v539, 4
      %v542 = vshll.u32 %v313, 16
      %v544 = vrot.slane %v542, 5
      %v545 = vor.u32 %v541, %v544
      %v546 = vrot.slane %v545, 4
      %v548 = vshll.u32 %v314, 16
      %v550 = vrot.slane %v548, 5
      %v551 = vsel %vm345, %v546, %v550
      %v552 = vshrl.u32 %v314, 16
      %v554 = vrot.slane %v552, 4
      %v555 = vor.u32 %v554, %v550
      %v556 = vrot.slane %v555, 4
      %v558 = vshll.u32 %v315, 16
      %v560 = vrot.slane %v558, 5
      %v561 = vsel %vm345, %v556, %v560
      %v563 = vshrl.u32 %v316, 16
      %v565 = vrot.slane %v563, 4
      %v566 = vshll.u32 %v316, 16
      %v568 = vrot.slane %v566, 5
      %v569 = vor.u32 %v565, %v568
      %v570 = vrot.slane %v569, 4
      %v572 = vshll.u32 %v317, 16
      %v574 = vrot.slane %v572, 5
      %v575 = vsel %vm345, %v570, %v574
      %v576 = vshrl.u32 %v317, 16
      %v578 = vrot.slane %v576, 4
      %v579 = vor.u32 %v578, %v574
      %v580 = vrot.slane %v579, 4
      %v582 = vshll.u32 %v318, 16
      %v584 = vrot.slane %v582, 5
      %v585 = vsel %vm345, %v580, %v584
      %v587 = vshrl.u32 %v319, 16
      %v589 = vrot.slane %v587, 4
      %v590 = vshll.u32 %v319, 16
      %v592 = vrot.slane %v590, 5
      %v593 = vor.u32 %v589, %v592
      %v594 = vrot.slane %v593, 4
      %v596 = vshll.u32 %v320, 16
      %v598 = vrot.slane %v596, 5
      %v599 = vsel %vm345, %v594, %v598
      %v600 = vshrl.u32 %v320, 16
      %v602 = vrot.slane %v600, 4
      %v603 = vor.u32 %v602, %v598
      %v604 = vrot.slane %v603, 4
      %v606 = vshll.u32 %v321, 16
      %v608 = vrot.slane %v606, 5
      %v609 = vsel %vm345, %v604, %v608
      %v611 = vshrl.u32 %v322, 16
      %v613 = vrot.slane %v611, 4
      %v614 = vshll.u32 %v322, 16
      %v616 = vrot.slane %v614, 5
      %v617 = vor.u32 %v613, %v616
      %v618 = vrot.slane %v617, 4
      %v620 = vshll.u32 %v323, 16
      %v622 = vrot.slane %v620, 5
      %v623 = vsel %vm345, %v618, %v622
      %v624 = vshrl.u32 %v323, 16
      %v626 = vrot.slane %v624, 4
      %v627 = vor.u32 %v626, %v622
      %v628 = vrot.slane %v627, 4
      %v630 = vshll.u32 %v324, 16
      %v632 = vrot.slane %v630, 5
      %v633 = vsel %vm345, %v628, %v632
      %v635 = vshrl.u32 %v325, 16
      %v637 = vrot.slane %v635, 4
      %v638 = vshll.u32 %v325, 16
      %v640 = vrot.slane %v638, 5
      %v641 = vor.u32 %v637, %v640
      %v642 = vrot.slane %v641, 4
      %v644 = vshll.u32 %v326, 16
      %v646 = vrot.slane %v644, 5
      %v647 = vsel %vm345, %v642, %v646
      %v648 = vshrl.u32 %v326, 16
      %v650 = vrot.slane %v648, 4
      %v651 = vor.u32 %v650, %v646
      %v652 = vrot.slane %v651, 4
      %v654 = vshll.u32 %v327, 16
      %v656 = vrot.slane %v654, 5
      %v657 = vsel %vm345, %v652, %v656
      %v659 = vshrl.u32 %v328, 16
      %v661 = vrot.slane %v659, 4
      %v662 = vshll.u32 %v328, 16
      %v664 = vrot.slane %v662, 5
      %v665 = vor.u32 %v661, %v664
      %v666 = vrot.slane %v665, 4
      %v668 = vshll.u32 %v329, 16
      %v670 = vrot.slane %v668, 5
      %v671 = vsel %vm345, %v666, %v670
      %v672 = vshrl.u32 %v329, 16
      %v674 = vrot.slane %v672, 4
      %v675 = vor.u32 %v674, %v670
      %v676 = vrot.slane %v675, 4
      %v678 = vshll.u32 %v330, 16
      %v680 = vrot.slane %v678, 5
      %v681 = vsel %vm345, %v676, %v680
      %v683 = vshrl.u32 %v331, 16
      %v685 = vrot.slane %v683, 4
      %v686 = vshll.u32 %v331, 16
      %v688 = vrot.slane %v686, 5
      %v689 = vor.u32 %v685, %v688
      %v690 = vrot.slane %v689, 4
      %v692 = vshll.u32 %v332, 16
      %v694 = vrot.slane %v692, 5
      %v695 = vsel %vm345, %v690, %v694
      %v696 = vshrl.u32 %v332, 16
      %v698 = vrot.slane %v696, 4
      %v699 = vor.u32 %v698, %v694
      %v700 = vrot.slane %v699, 4
      %v702 = vshll.u32 %v333, 16
      %v704 = vrot.slane %v702, 5
      %v705 = vsel %vm345, %v700, %v704
      %v707 = vshrl.u32 %v334, 16
      %v709 = vrot.slane %v707, 4
      %v710 = vshll.u32 %v334, 16
      %v712 = vrot.slane %v710, 5
      %v713 = vor.u32 %v709, %v712
      %v714 = vrot.slane %v713, 4
      %v716 = vshll.u32 %v335, 16
      %v718 = vrot.slane %v716, 5
      %v719 = vsel %vm345, %v714, %v718
      %v720 = vshrl.u32 %v335, 16
      %v722 = vrot.slane %v720, 4
      %v723 = vor.u32 %v722, %v718
      %v724 = vrot.slane %v723, 4
      %v726 = vshll.u32 %v336, 16
      %v728 = vrot.slane %v726, 5
      %v729 = vsel %vm345, %v724, %v728
      %vm778 = vcmask 1042432
      %vm779 = vcmask 1046532
      %vm780 = vmor %vm778, %vm779
      %v781 = vrot.slane %v289, 5
      %v782 = vrot.slane %v781, 4
      %v783 = vrot.slane %v290, 5
      %v784 = vsel %vm780, %v782, %v783
      %v785 = vrot.slane %v783, 4
      %v786 = vrot.slane %v291, 5
      %v787 = vsel %vm780, %v785, %v786
      %v788 = vrot.slane %v292, 5
      %v789 = vrot.slane %v788, 4
      %v790 = vrot.slane %v293, 5
      %v791 = vsel %vm780, %v789, %v790
      %v792 = vrot.slane %v790, 4
      %v793 = vrot.slane %v294, 5
      %v794 = vsel %vm780, %v792, %v793
      %v795 = vrot.slane %v295, 5
      %v796 = vrot.slane %v795, 4
      %v797 = vrot.slane %v296, 5
      %v798 = vsel %vm780, %v796, %v797
      %v799 = vrot.slane %v797, 4
      %v800 = vrot.slane %v297, 5
      %v801 = vsel %vm780, %v799, %v800
      %v802 = vrot.slane %v298, 5
      %v803 = vrot.slane %v802, 4
      %v804 = vrot.slane %v299, 5
      %v805 = vsel %vm780, %v803, %v804
      %v806 = vrot.slane %v804, 4
      %v807 = vrot.slane %v300, 5
      %v808 = vsel %vm780, %v806, %v807
      %v809 = vrot.slane %v301, 5
      %v810 = vrot.slane %v809, 4
      %v811 = vrot.slane %v302, 5
      %v812 = vsel %vm780, %v810, %v811
      %v813 = vrot.slane %v811, 4
      %v814 = vrot.slane %v303, 5
      %v815 = vsel %vm780, %v813, %v814
      %v816 = vrot.slane %v304, 5
      %v817 = vrot.slane %v816, 4
      %v818 = vrot.slane %v305, 5
      %v819 = vsel %vm780, %v817, %v818
      %v820 = vrot.slane %v818, 4
      %v821 = vrot.slane %v306, 5
      %v822 = vsel %vm780, %v820, %v821
      %v823 = vrot.slane %v307, 5
      %v824 = vrot.slane %v823, 4
      %v825 = vrot.slane %v308, 5
      %v826 = vsel %vm780, %v824, %v825
      %v827 = vrot.slane %v825, 4
      %v828 = vrot.slane %v309, 5
      %v829 = vsel %vm780, %v827, %v828
      %v830 = vrot.slane %v310, 5
      %v831 = vrot.slane %v830, 4
      %v832 = vrot.slane %v311, 5
      %v833 = vsel %vm780, %v831, %v832
      %v834 = vrot.slane %v832, 4
      %v835 = vrot.slane %v312, 5
      %v836 = vsel %vm780, %v834, %v835
      %v837 = vrot.slane %v313, 5
      %v838 = vrot.slane %v837, 4
      %v839 = vrot.slane %v314, 5
      %v840 = vsel %vm780, %v838, %v839
      %v841 = vrot.slane %v839, 4
      %v842 = vrot.slane %v315, 5
      %v843 = vsel %vm780, %v841, %v842
      %v844 = vrot.slane %v316, 5
      %v845 = vrot.slane %v844, 4
      %v846 = vrot.slane %v317, 5
      %v847 = vsel %vm780, %v845, %v846
      %v848 = vrot.slane %v846, 4
      %v849 = vrot.slane %v318, 5
      %v850 = vsel %vm780, %v848, %v849
      %v851 = vrot.slane %v319, 5
      %v852 = vrot.slane %v851, 4
      %v853 = vrot.slane %v320, 5
      %v854 = vsel %vm780, %v852, %v853
      %v855 = vrot.slane %v853, 4
      %v856 = vrot.slane %v321, 5
      %v857 = vsel %vm780, %v855, %v856
      %v858 = vrot.slane %v322, 5
      %v859 = vrot.slane %v858, 4
      %v860 = vrot.slane %v323, 5
      %v861 = vsel %vm780, %v859, %v860
      %v862 = vrot.slane %v860, 4
      %v863 = vrot.slane %v324, 5
      %v864 = vsel %vm780, %v862, %v863
      %v865 = vrot.slane %v325, 5
      %v866 = vrot.slane %v865, 4
      %v867 = vrot.slane %v326, 5
      %v868 = vsel %vm780, %v866, %v867
      %v869 = vrot.slane %v867, 4
      %v870 = vrot.slane %v327, 5
      %v871 = vsel %vm780, %v869, %v870
      %v872 = vrot.slane %v328, 5
      %v873 = vrot.slane %v872, 4
      %v874 = vrot.slane %v329, 5
      %v875 = vsel %vm780, %v873, %v874
      %v876 = vrot.slane %v874, 4
      %v877 = vrot.slane %v330, 5
      %v878 = vsel %vm780, %v876, %v877
      %v879 = vrot.slane %v331, 5
      %v880 = vrot.slane %v879, 4
      %v881 = vrot.slane %v332, 5
      %v882 = vsel %vm780, %v880, %v881
      %v883 = vrot.slane %v881, 4
      %v884 = vrot.slane %v333, 5
      %v885 = vsel %vm780, %v883, %v884
      %v886 = vrot.slane %v334, 5
      %v887 = vrot.slane %v886, 4
      %v888 = vrot.slane %v335, 5
      %v889 = vsel %vm780, %v887, %v888
      %v890 = vrot.slane %v888, 4
      %v891 = vrot.slane %v336, 5
      %v892 = vsel %vm780, %v890, %v891
      %v894 = vshrl.u32 %v337, 16
      %v896 = vrot.slane %v894, 4
      %v897 = vshll.u32 %v337, 16
      %v899 = vrot.slane %v897, 5
      %v900 = vor.u32 %v896, %v899
      %v901 = vrot.slane %v900, 4
      %v903 = vshll.u32 %v338, 16
      %v905 = vrot.slane %v903, 5
      %v906 = vsel %vm345, %v901, %v905
      %v907 = vshrl.u32 %v338, 16
      %v909 = vrot.slane %v907, 4
      %v910 = vor.u32 %v909, %v905
      %v911 = vrot.slane %v910, 4
      %v913 = vshll.u32 %v339, 16
      %v915 = vrot.slane %v913, 5
      %v916 = vsel %vm345, %v911, %v915
      %v920 = vrot.slane %v337, 5
      %v921 = vrot.slane %v920, 4
      %v922 = vrot.slane %v338, 5
      %v923 = vsel %vm780, %v921, %v922
      %v924 = vrot.slane %v922, 4
      %v925 = vrot.slane %v339, 5
      %v926 = vsel %vm780, %v924, %v925
      %v928 = vshrl.u32 %v340, 16
      %v930 = vrot.slane %v928, 4
      %v931 = vshll.u32 %v340, 16
      %v933 = vrot.slane %v931, 5
      %v934 = vor.u32 %v930, %v933
      %v935 = vrot.slane %v934, 4
      %v937 = vshll.u32 %v341, 16
      %v939 = vrot.slane %v937, 5
      %v940 = vsel %vm345, %v935, %v939
      %v941 = vshrl.u32 %v341, 16
      %v943 = vrot.slane %v941, 4
      %v944 = vor.u32 %v943, %v939
      %v945 = vrot.slane %v944, 4
      %v947 = vshll.u32 %v342, 16
      %v949 = vrot.slane %v947, 5
      %v950 = vsel %vm345, %v945, %v949
      %v954 = vrot.slane %v340, 5
      %v955 = vrot.slane %v954, 4
      %v956 = vrot.slane %v341, 5
      %v957 = vsel %vm780, %v955, %v956
      %v958 = vrot.slane %v956, 4
      %v959 = vrot.slane %v342, 5
      %v960 = vsel %vm780, %v958, %v959
      %v961 = vunpack.c.l.b16 %v289
      %v962 = vunpack.c.l.b16 %v290
      %v963 = vunpack.c.l.b16 %v292
      %v964 = vunpack.c.l.b16 %v293
      %v965 = vunpack.c.l.b16 %v295
      %v966 = vunpack.c.l.b16 %v296
      %v967 = vunpack.c.l.b16 %v298
      %v968 = vunpack.c.l.b16 %v299
      %v969 = vunpack.c.l.b16 %v301
      %v970 = vunpack.c.l.b16 %v302
      %v971 = vunpack.c.l.b16 %v304
      %v972 = vunpack.c.l.b16 %v305
      %v973 = vunpack.c.l.b16 %v307
      %v974 = vunpack.c.l.b16 %v308
      %v975 = vunpack.c.l.b16 %v310
      %v976 = vunpack.c.l.b16 %v311
      %v977 = vunpack.c.l.b16 %v313
      %v978 = vunpack.c.l.b16 %v314
      %v979 = vunpack.c.l.b16 %v316
      %v980 = vunpack.c.l.b16 %v317
      %v981 = vunpack.c.l.b16 %v319
      %v982 = vunpack.c.l.b16 %v320
      %v983 = vunpack.c.l.b16 %v322
      %v984 = vunpack.c.l.b16 %v323
      %v985 = vunpack.c.l.b16 %v325
      %v986 = vunpack.c.l.b16 %v326
      %v987 = vunpack.c.l.b16 %v328
      %v988 = vunpack.c.l.b16 %v329
      %v989 = vunpack.c.l.b16 %v331
      %v990 = vunpack.c.l.b16 %v332
      %v991 = vunpack.c.l.b16 %v334
      %v992 = vunpack.c.l.b16 %v335
      %v993 = vpack.c.b16 %v962, %v961
      %v994 = vpack.c.b16 %v964, %v963
      %v995 = vpack.c.b16 %v966, %v965
      %v996 = vpack.c.b16 %v968, %v967
      %v997 = vpack.c.b16 %v970, %v969
      %v998 = vpack.c.b16 %v972, %v971
      %v999 = vpack.c.b16 %v974, %v973
      %v1000 = vpack.c.b16 %v976, %v975
      %v1001 = vpack.c.b16 %v978, %v977
      %v1002 = vpack.c.b16 %v980, %v979
      %v1003 = vpack.c.b16 %v982, %v981
      %v1004 = vpack.c.b16 %v984, %v983
      %v1005 = vpack.c.b16 %v986, %v985
      %v1006 = vpack.c.b16 %v988, %v987
      %v1007 = vpack.c.b16 %v990, %v989
      %v1008 = vpack.c.b16 %v992, %v991
      %v1009 = vunpack.c.l.b16 %v359
      %v1010 = vunpack.c.l.b16 %v369
      %v1011 = vunpack.c.l.b16 %v383
      %v1012 = vunpack.c.l.b16 %v393
      %v1013 = vunpack.c.l.b16 %v407
      %v1014 = vunpack.c.l.b16 %v417
      %v1015 = vunpack.c.l.b16 %v431
      %v1016 = vunpack.c.l.b16 %v441
      %v1017 = vunpack.c.l.b16 %v455
      %v1018 = vunpack.c.l.b16 %v465
      %v1019 = vunpack.c.l.b16 %v479
      %v1020 = vunpack.c.l.b16 %v489
      %v1021 = vunpack.c.l.b16 %v503
      %v1022 = vunpack.c.l.b16 %v513
      %v1023 = vunpack.c.l.b16 %v527
      %v1024 = vunpack.c.l.b16 %v537
      %v1025 = vunpack.c.l.b16 %v551
      %v1026 = vunpack.c.l.b16 %v561
      %v1027 = vunpack.c.l.b16 %v575
      %v1028 = vunpack.c.l.b16 %v585
      %v1029 = vunpack.c.l.b16 %v599
      %v1030 = vunpack.c.l.b16 %v609
      %v1031 = vunpack.c.l.b16 %v623
      %v1032 = vunpack.c.l.b16 %v633
      %v1033 = vunpack.c.l.b16 %v647
      %v1034 = vunpack.c.l.b16 %v657
      %v1035 = vunpack.c.l.b16 %v671
      %v1036 = vunpack.c.l.b16 %v681
      %v1037 = vunpack.c.l.b16 %v695
      %v1038 = vunpack.c.l.b16 %v705
      %v1039 = vunpack.c.l.b16 %v719
      %v1040 = vunpack.c.l.b16 %v729
      %v1041 = vpack.c.b16 %v1010, %v1009
      %v1042 = vpack.c.b16 %v1012, %v1011
      %v1043 = vpack.c.b16 %v1014, %v1013
      %v1044 = vpack.c.b16 %v1016, %v1015
      %v1045 = vpack.c.b16 %v1018, %v1017
      %v1046 = vpack.c.b16 %v1020, %v1019
      %v1047 = vpack.c.b16 %v1022, %v1021
      %v1048 = vpack.c.b16 %v1024, %v1023
      %v1049 = vpack.c.b16 %v1026, %v1025
      %v1050 = vpack.c.b16 %v1028, %v1027
      %v1051 = vpack.c.b16 %v1030, %v1029
      %v1052 = vpack.c.b16 %v1032, %v1031
      %v1053 = vpack.c.b16 %v1034, %v1033
      %v1054 = vpack.c.b16 %v1036, %v1035
      %v1055 = vpack.c.b16 %v1038, %v1037
      %v1056 = vpack.c.b16 %v1040, %v1039
      %1057 = vrot.lane.b32.xlu0 %v1041, 16
      %v1058 = vpop.permute.xlu0 %1057
      %1059 = vrot.lane.b32.xlu0 %v1042, 16
      %v1060 = vpop.permute.xlu0 %1059
      %1061 = vrot.lane.b32.xlu0 %v1043, 16
      %v1062 = vpop.permute.xlu0 %1061
      %1063 = vrot.lane.b32.xlu0 %v1044, 16
      %v1064 = vpop.permute.xlu0 %1063
      %1065 = vrot.lane.b32.xlu0 %v1045, 16
      %v1066 = vpop.permute.xlu0 %1065
      %1067 = vrot.lane.b32.xlu0 %v1046, 16
      %v1068 = vpop.permute.xlu0 %1067
      %1069 = vrot.lane.b32.xlu0 %v1047, 16
      %v1070 = vpop.permute.xlu0 %1069
      %1071 = vrot.lane.b32.xlu0 %v1048, 16
      %v1072 = vpop.permute.xlu0 %1071
      %1073 = vrot.lane.b32.xlu0 %v1049, 16
      %v1074 = vpop.permute.xlu0 %1073
      %1075 = vrot.lane.b32.xlu0 %v1050, 16
      %v1076 = vpop.permute.xlu0 %1075
      %1077 = vrot.lane.b32.xlu0 %v1051, 16
      %v1078 = vpop.permute.xlu0 %1077
      %1079 = vrot.lane.b32.xlu0 %v1052, 16
      %v1080 = vpop.permute.xlu0 %1079
      %1081 = vrot.lane.b32.xlu0 %v1053, 16
      %v1082 = vpop.permute.xlu0 %1081
      %1083 = vrot.lane.b32.xlu0 %v1054, 16
      %v1084 = vpop.permute.xlu0 %1083
      %1085 = vrot.lane.b32.xlu0 %v1055, 16
      %v1086 = vpop.permute.xlu0 %1085
      %1087 = vrot.lane.b32.xlu0 %v1056, 16
      %v1088 = vpop.permute.xlu0 %1087
      %v1089 = vunpack.c.l.b16 %v784
      %v1090 = vunpack.c.l.b16 %v787
      %v1091 = vunpack.c.l.b16 %v791
      %v1092 = vunpack.c.l.b16 %v794
      %v1093 = vunpack.c.l.b16 %v798
      %v1094 = vunpack.c.l.b16 %v801
      %v1095 = vunpack.c.l.b16 %v805
      %v1096 = vunpack.c.l.b16 %v808
      %v1097 = vunpack.c.l.b16 %v812
      %v1098 = vunpack.c.l.b16 %v815
      %v1099 = vunpack.c.l.b16 %v819
      %v1100 = vunpack.c.l.b16 %v822
      %v1101 = vunpack.c.l.b16 %v826
      %v1102 = vunpack.c.l.b16 %v829
      %v1103 = vunpack.c.l.b16 %v833
      %v1104 = vunpack.c.l.b16 %v836
      %v1105 = vunpack.c.l.b16 %v840
      %v1106 = vunpack.c.l.b16 %v843
      %v1107 = vunpack.c.l.b16 %v847
      %v1108 = vunpack.c.l.b16 %v850
      %v1109 = vunpack.c.l.b16 %v854
      %v1110 = vunpack.c.l.b16 %v857
      %v1111 = vunpack.c.l.b16 %v861
      %v1112 = vunpack.c.l.b16 %v864
      %v1113 = vunpack.c.l.b16 %v868
      %v1114 = vunpack.c.l.b16 %v871
      %v1115 = vunpack.c.l.b16 %v875
      %v1116 = vunpack.c.l.b16 %v878
      %v1117 = vunpack.c.l.b16 %v882
      %v1118 = vunpack.c.l.b16 %v885
      %v1119 = vunpack.c.l.b16 %v889
      %v1120 = vunpack.c.l.b16 %v892
      %v1121 = vpack.c.b16 %v1090, %v1089
      %v1122 = vpack.c.b16 %v1092, %v1091
      %v1123 = vpack.c.b16 %v1094, %v1093
      %v1124 = vpack.c.b16 %v1096, %v1095
      %v1125 = vpack.c.b16 %v1098, %v1097
      %v1126 = vpack.c.b16 %v1100, %v1099
      %v1127 = vpack.c.b16 %v1102, %v1101
      %v1128 = vpack.c.b16 %v1104, %v1103
      %v1129 = vpack.c.b16 %v1106, %v1105
      %v1130 = vpack.c.b16 %v1108, %v1107
      %v1131 = vpack.c.b16 %v1110, %v1109
      %v1132 = vpack.c.b16 %v1112, %v1111
      %v1133 = vpack.c.b16 %v1114, %v1113
      %v1134 = vpack.c.b16 %v1116, %v1115
      %v1135 = vpack.c.b16 %v1118, %v1117
      %v1136 = vpack.c.b16 %v1120, %v1119
      %1137 = vrot.lane.b32.xlu0 %v1121, 32
      %v1138 = vpop.permute.xlu0 %1137
      %1139 = vrot.lane.b32.xlu0 %v1122, 32
      %v1140 = vpop.permute.xlu0 %1139
      %1141 = vrot.lane.b32.xlu0 %v1123, 32
      %v1142 = vpop.permute.xlu0 %1141
      %1143 = vrot.lane.b32.xlu0 %v1124, 32
      %v1144 = vpop.permute.xlu0 %1143
      %1145 = vrot.lane.b32.xlu0 %v1125, 32
      %v1146 = vpop.permute.xlu0 %1145
      %1147 = vrot.lane.b32.xlu0 %v1126, 32
      %v1148 = vpop.permute.xlu0 %1147
      %1149 = vrot.lane.b32.xlu0 %v1127, 32
      %v1150 = vpop.permute.xlu0 %1149
      %1151 = vrot.lane.b32.xlu0 %v1128, 32
      %v1152 = vpop.permute.xlu0 %1151
      %1153 = vrot.lane.b32.xlu0 %v1129, 32
      %v1154 = vpop.permute.xlu0 %1153
      %1155 = vrot.lane.b32.xlu0 %v1130, 32
      %v1156 = vpop.permute.xlu0 %1155
      %1157 = vrot.lane.b32.xlu0 %v1131, 32
      %v1158 = vpop.permute.xlu0 %1157
      %1159 = vrot.lane.b32.xlu0 %v1132, 32
      %v1160 = vpop.permute.xlu0 %1159
      %1161 = vrot.lane.b32.xlu0 %v1133, 32
      %v1162 = vpop.permute.xlu0 %1161
      %1163 = vrot.lane.b32.xlu0 %v1134, 32
      %v1164 = vpop.permute.xlu0 %1163
      %1165 = vrot.lane.b32.xlu0 %v1135, 32
      %v1166 = vpop.permute.xlu0 %1165
      %1167 = vrot.lane.b32.xlu0 %v1136, 32
      %v1168 = vpop.permute.xlu0 %1167
      %v1169 = vunpack.c.l.b16 %v337
      %v1170 = vunpack.c.l.b16 %v338
      %v1171 = vpack.c.b16 %v1170, %v1169
      %1172 = vrot.lane.b32.xlu0 %v994, 48
      %v1173 = vpop.permute.xlu0 %1172
      %1174 = vrot.lane.b32.xlu0 %v995, 48
      %v1175 = vpop.permute.xlu0 %1174
      %1176 = vrot.lane.b32.xlu0 %v996, 48
      %v1177 = vpop.permute.xlu0 %1176
      %1178 = vrot.lane.b32.xlu0 %v997, 48
      %v1179 = vpop.permute.xlu0 %1178
      %1180 = vrot.lane.b32.xlu0 %v998, 48
      %v1181 = vpop.permute.xlu0 %1180
      %1182 = vrot.lane.b32.xlu0 %v999, 48
      %v1183 = vpop.permute.xlu0 %1182
      %1184 = vrot.lane.b32.xlu0 %v1000, 48
      %v1185 = vpop.permute.xlu0 %1184
      %1186 = vrot.lane.b32.xlu0 %v1001, 48
      %v1187 = vpop.permute.xlu0 %1186
      %1188 = vrot.lane.b32.xlu0 %v1002, 48
      %v1189 = vpop.permute.xlu0 %1188
      %1190 = vrot.lane.b32.xlu0 %v1003, 48
      %v1191 = vpop.permute.xlu0 %1190
      %1192 = vrot.lane.b32.xlu0 %v1004, 48
      %v1193 = vpop.permute.xlu0 %1192
      %1194 = vrot.lane.b32.xlu0 %v1005, 48
      %v1195 = vpop.permute.xlu0 %1194
      %1196 = vrot.lane.b32.xlu0 %v1006, 48
      %v1197 = vpop.permute.xlu0 %1196
      %1198 = vrot.lane.b32.xlu0 %v1007, 48
      %v1199 = vpop.permute.xlu0 %1198
      %1200 = vrot.lane.b32.xlu0 %v1008, 48
      %v1201 = vpop.permute.xlu0 %1200
      %1202 = vrot.lane.b32.xlu0 %v1171, 48
      %v1203 = vpop.permute.xlu0 %1202
      %v1204 = vunpack.c.l.b16 %v906
      %v1205 = vunpack.c.l.b16 %v916
      %v1206 = vpack.c.b16 %v1205, %v1204
      %1207 = vrot.lane.b32.xlu0 %v1042, 64
      %v1208 = vpop.permute.xlu0 %1207
      %1209 = vrot.lane.b32.xlu0 %v1043, 64
      %v1210 = vpop.permute.xlu0 %1209
      %1211 = vrot.lane.b32.xlu0 %v1044, 64
      %v1212 = vpop.permute.xlu0 %1211
      %1213 = vrot.lane.b32.xlu0 %v1045, 64
      %v1214 = vpop.permute.xlu0 %1213
      %1215 = vrot.lane.b32.xlu0 %v1046, 64
      %v1216 = vpop.permute.xlu0 %1215
      %1217 = vrot.lane.b32.xlu0 %v1047, 64
      %v1218 = vpop.permute.xlu0 %1217
      %1219 = vrot.lane.b32.xlu0 %v1048, 64
      %v1220 = vpop.permute.xlu0 %1219
      %1221 = vrot.lane.b32.xlu0 %v1049, 64
      %v1222 = vpop.permute.xlu0 %1221
      %1223 = vrot.lane.b32.xlu0 %v1050, 64
      %v1224 = vpop.permute.xlu0 %1223
      %1225 = vrot.lane.b32.xlu0 %v1051, 64
      %v1226 = vpop.permute.xlu0 %1225
      %1227 = vrot.lane.b32.xlu0 %v1052, 64
      %v1228 = vpop.permute.xlu0 %1227
      %1229 = vrot.lane.b32.xlu0 %v1053, 64
      %v1230 = vpop.permute.xlu0 %1229
      %1231 = vrot.lane.b32.xlu0 %v1054, 64
      %v1232 = vpop.permute.xlu0 %1231
      %1233 = vrot.lane.b32.xlu0 %v1055, 64
      %v1234 = vpop.permute.xlu0 %1233
      %1235 = vrot.lane.b32.xlu0 %v1056, 64
      %v1236 = vpop.permute.xlu0 %1235
      %1237 = vrot.lane.b32.xlu0 %v1206, 64
      %v1238 = vpop.permute.xlu0 %1237
      %v1239 = vunpack.c.l.b16 %v923
      %v1240 = vunpack.c.l.b16 %v926
      %v1241 = vpack.c.b16 %v1240, %v1239
      %1242 = vrot.lane.b32.xlu0 %v1122, 80
      %v1243 = vpop.permute.xlu0 %1242
      %1244 = vrot.lane.b32.xlu0 %v1123, 80
      %v1245 = vpop.permute.xlu0 %1244
      %1246 = vrot.lane.b32.xlu0 %v1124, 80
      %v1247 = vpop.permute.xlu0 %1246
      %1248 = vrot.lane.b32.xlu0 %v1125, 80
      %v1249 = vpop.permute.xlu0 %1248
      %1250 = vrot.lane.b32.xlu0 %v1126, 80
      %v1251 = vpop.permute.xlu0 %1250
      %1252 = vrot.lane.b32.xlu0 %v1127, 80
      %v1253 = vpop.permute.xlu0 %1252
      %1254 = vrot.lane.b32.xlu0 %v1128, 80
      %v1255 = vpop.permute.xlu0 %1254
      %1256 = vrot.lane.b32.xlu0 %v1129, 80
      %v1257 = vpop.permute.xlu0 %1256
      %1258 = vrot.lane.b32.xlu0 %v1130, 80
      %v1259 = vpop.permute.xlu0 %1258
      %1260 = vrot.lane.b32.xlu0 %v1131, 80
      %v1261 = vpop.permute.xlu0 %1260
      %1262 = vrot.lane.b32.xlu0 %v1132, 80
      %v1263 = vpop.permute.xlu0 %1262
      %1264 = vrot.lane.b32.xlu0 %v1133, 80
      %v1265 = vpop.permute.xlu0 %1264
      %1266 = vrot.lane.b32.xlu0 %v1134, 80
      %v1267 = vpop.permute.xlu0 %1266
      %1268 = vrot.lane.b32.xlu0 %v1135, 80
      %v1269 = vpop.permute.xlu0 %1268
      %1270 = vrot.lane.b32.xlu0 %v1136, 80
      %v1271 = vpop.permute.xlu0 %1270
      %1272 = vrot.lane.b32.xlu0 %v1241, 80
      %v1273 = vpop.permute.xlu0 %1272
      %v1274 = vunpack.c.l.b16 %v340
      %v1275 = vunpack.c.l.b16 %v341
      %v1276 = vpack.c.b16 %v1275, %v1274
      %1277 = vrot.lane.b32.xlu0 %v995, 96
      %v1278 = vpop.permute.xlu0 %1277
      %1279 = vrot.lane.b32.xlu0 %v996, 96
      %v1280 = vpop.permute.xlu0 %1279
      %1281 = vrot.lane.b32.xlu0 %v997, 96
      %v1282 = vpop.permute.xlu0 %1281
      %1283 = vrot.lane.b32.xlu0 %v998, 96
      %v1284 = vpop.permute.xlu0 %1283
      %1285 = vrot.lane.b32.xlu0 %v999, 96
      %v1286 = vpop.permute.xlu0 %1285
      %1287 = vrot.lane.b32.xlu0 %v1000, 96
      %v1288 = vpop.permute.xlu0 %1287
      %1289 = vrot.lane.b32.xlu0 %v1001, 96
      %v1290 = vpop.permute.xlu0 %1289
      %1291 = vrot.lane.b32.xlu0 %v1002, 96
      %v1292 = vpop.permute.xlu0 %1291
      %1293 = vrot.lane.b32.xlu0 %v1003, 96
      %v1294 = vpop.permute.xlu0 %1293
      %1295 = vrot.lane.b32.xlu0 %v1004, 96
      %v1296 = vpop.permute.xlu0 %1295
      %1297 = vrot.lane.b32.xlu0 %v1005, 96
      %v1298 = vpop.permute.xlu0 %1297
      %1299 = vrot.lane.b32.xlu0 %v1006, 96
      %v1300 = vpop.permute.xlu0 %1299
      %1301 = vrot.lane.b32.xlu0 %v1007, 96
      %v1302 = vpop.permute.xlu0 %1301
      %1303 = vrot.lane.b32.xlu0 %v1008, 96
      %v1304 = vpop.permute.xlu0 %1303
      %1305 = vrot.lane.b32.xlu0 %v1171, 96
      %v1306 = vpop.permute.xlu0 %1305
      %1307 = vrot.lane.b32.xlu0 %v1276, 96
      %v1308 = vpop.permute.xlu0 %1307
      %v1309 = vunpack.c.l.b16 %v940
      %v1310 = vunpack.c.l.b16 %v950
      %v1311 = vpack.c.b16 %v1310, %v1309
      %1312 = vrot.lane.b32.xlu0 %v1043, 112
      %v1313 = vpop.permute.xlu0 %1312
      %1314 = vrot.lane.b32.xlu0 %v1044, 112
      %v1315 = vpop.permute.xlu0 %1314
      %1316 = vrot.lane.b32.xlu0 %v1045, 112
      %v1317 = vpop.permute.xlu0 %1316
      %1318 = vrot.lane.b32.xlu0 %v1046, 112
      %v1319 = vpop.permute.xlu0 %1318
      %1320 = vrot.lane.b32.xlu0 %v1047, 112
      %v1321 = vpop.permute.xlu0 %1320
      %1322 = vrot.lane.b32.xlu0 %v1048, 112
      %v1323 = vpop.permute.xlu0 %1322
      %1324 = vrot.lane.b32.xlu0 %v1049, 112
      %v1325 = vpop.permute.xlu0 %1324
      %1326 = vrot.lane.b32.xlu0 %v1050, 112
      %v1327 = vpop.permute.xlu0 %1326
      %1328 = vrot.lane.b32.xlu0 %v1051, 112
      %v1329 = vpop.permute.xlu0 %1328
      %1330 = vrot.lane.b32.xlu0 %v1052, 112
      %v1331 = vpop.permute.xlu0 %1330
      %1332 = vrot.lane.b32.xlu0 %v1053, 112
      %v1333 = vpop.permute.xlu0 %1332
      %1334 = vrot.lane.b32.xlu0 %v1054, 112
      %v1335 = vpop.permute.xlu0 %1334
      %1336 = vrot.lane.b32.xlu0 %v1055, 112
      %v1337 = vpop.permute.xlu0 %1336
      %1338 = vrot.lane.b32.xlu0 %v1056, 112
      %v1339 = vpop.permute.xlu0 %1338
      %1340 = vrot.lane.b32.xlu0 %v1206, 112
      %v1341 = vpop.permute.xlu0 %1340
      %1342 = vrot.lane.b32.xlu0 %v1311, 112
      %v1343 = vpop.permute.xlu0 %1342
      %v1344 = vunpack.c.l.b16 %v957
      %v1345 = vunpack.c.l.b16 %v960
      %v1346 = vpack.c.b16 %v1345, %v1344
      %vm1347 = vcmask 130048
      %v1350 = vsel %vm1347, %v993, %v1058
      %v1353 = vsel %vm1347, %v994, %v1060
      %v1356 = vsel %vm1347, %v995, %v1062
      %v1359 = vsel %vm1347, %v996, %v1064
      %v1362 = vsel %vm1347, %v997, %v1066
      %v1365 = vsel %vm1347, %v998, %v1068
      %v1368 = vsel %vm1347, %v999, %v1070
      %v1371 = vsel %vm1347, %v1000, %v1072
      %v1374 = vsel %vm1347, %v1001, %v1074
      %v1377 = vsel %vm1347, %v1002, %v1076
      %v1380 = vsel %vm1347, %v1003, %v1078
      %v1383 = vsel %vm1347, %v1004, %v1080
      %v1386 = vsel %vm1347, %v1005, %v1082
      %v1389 = vsel %vm1347, %v1006, %v1084
      %v1392 = vsel %vm1347, %v1007, %v1086
      %v1395 = vsel %vm1347, %v1008, %v1088
      %vm1396 = vcmask 261120
      %v1398 = vsel %vm1396, %v1350, %v1138
      %v1400 = vsel %vm1396, %v1353, %v1140
      %v1402 = vsel %vm1396, %v1356, %v1142
      %v1404 = vsel %vm1396, %v1359, %v1144
      %v1406 = vsel %vm1396, %v1362, %v1146
      %v1408 = vsel %vm1396, %v1365, %v1148
      %v1410 = vsel %vm1396, %v1368, %v1150
      %v1412 = vsel %vm1396, %v1371, %v1152
      %v1414 = vsel %vm1396, %v1374, %v1154
      %v1416 = vsel %vm1396, %v1377, %v1156
      %v1418 = vsel %vm1396, %v1380, %v1158
      %v1420 = vsel %vm1396, %v1383, %v1160
      %v1422 = vsel %vm1396, %v1386, %v1162
      %v1424 = vsel %vm1396, %v1389, %v1164
      %v1426 = vsel %vm1396, %v1392, %v1166
      %v1428 = vsel %vm1396, %v1395, %v1168
      %vm1429 = vcmask 392192
      %v1431 = vsel %vm1429, %v1398, %v1173
      %v1433 = vsel %vm1429, %v1400, %v1175
      %v1435 = vsel %vm1429, %v1402, %v1177
      %v1437 = vsel %vm1429, %v1404, %v1179
      %v1439 = vsel %vm1429, %v1406, %v1181
      %v1441 = vsel %vm1429, %v1408, %v1183
      %v1443 = vsel %vm1429, %v1410, %v1185
      %v1445 = vsel %vm1429, %v1412, %v1187
      %v1447 = vsel %vm1429, %v1414, %v1189
      %v1449 = vsel %vm1429, %v1416, %v1191
      %v1451 = vsel %vm1429, %v1418, %v1193
      %v1453 = vsel %vm1429, %v1420, %v1195
      %v1455 = vsel %vm1429, %v1422, %v1197
      %v1457 = vsel %vm1429, %v1424, %v1199
      %v1459 = vsel %vm1429, %v1426, %v1201
      %v1461 = vsel %vm1429, %v1428, %v1203
      %vm1462 = vcmask 523264
      %v1464 = vsel %vm1462, %v1431, %v1208
      %v1466 = vsel %vm1462, %v1433, %v1210
      %v1468 = vsel %vm1462, %v1435, %v1212
      %v1470 = vsel %vm1462, %v1437, %v1214
      %v1472 = vsel %vm1462, %v1439, %v1216
      %v1474 = vsel %vm1462, %v1441, %v1218
      %v1476 = vsel %vm1462, %v1443, %v1220
      %v1478 = vsel %vm1462, %v1445, %v1222
      %v1480 = vsel %vm1462, %v1447, %v1224
      %v1482 = vsel %vm1462, %v1449, %v1226
      %v1484 = vsel %vm1462, %v1451, %v1228
      %v1486 = vsel %vm1462, %v1453, %v1230
      %v1488 = vsel %vm1462, %v1455, %v1232
      %v1490 = vsel %vm1462, %v1457, %v1234
      %v1492 = vsel %vm1462, %v1459, %v1236
      %v1494 = vsel %vm1462, %v1461, %v1238
      %vm1495 = vcmask 654336
      %v1497 = vsel %vm1495, %v1464, %v1243
      %v1499 = vsel %vm1495, %v1466, %v1245
      %v1501 = vsel %vm1495, %v1468, %v1247
      %v1503 = vsel %vm1495, %v1470, %v1249
      %v1505 = vsel %vm1495, %v1472, %v1251
      %v1507 = vsel %vm1495, %v1474, %v1253
      %v1509 = vsel %vm1495, %v1476, %v1255
      %v1511 = vsel %vm1495, %v1478, %v1257
      %v1513 = vsel %vm1495, %v1480, %v1259
      %v1515 = vsel %vm1495, %v1482, %v1261
      %v1517 = vsel %vm1495, %v1484, %v1263
      %v1519 = vsel %vm1495, %v1486, %v1265
      %v1521 = vsel %vm1495, %v1488, %v1267
      %v1523 = vsel %vm1495, %v1490, %v1269
      %v1525 = vsel %vm1495, %v1492, %v1271
      %v1527 = vsel %vm1495, %v1494, %v1273
      %vm1528 = vcmask 785408
      %v1530 = vsel %vm1528, %v1497, %v1278
      %v1532 = vsel %vm1528, %v1499, %v1280
      %v1534 = vsel %vm1528, %v1501, %v1282
      %v1536 = vsel %vm1528, %v1503, %v1284
      %v1538 = vsel %vm1528, %v1505, %v1286
      %v1540 = vsel %vm1528, %v1507, %v1288
      %v1542 = vsel %vm1528, %v1509, %v1290
      %v1544 = vsel %vm1528, %v1511, %v1292
      %v1546 = vsel %vm1528, %v1513, %v1294
      %v1548 = vsel %vm1528, %v1515, %v1296
      %v1550 = vsel %vm1528, %v1517, %v1298
      %v1552 = vsel %vm1528, %v1519, %v1300
      %v1554 = vsel %vm1528, %v1521, %v1302
      %v1556 = vsel %vm1528, %v1523, %v1304
      %v1558 = vsel %vm1528, %v1525, %v1306
      %v1560 = vsel %vm1528, %v1527, %v1308
      %vm1561 = vcmask 916480
      %v1563 = vsel %vm1561, %v1530, %v1313
      %v1566 = vsel %vm1561, %v1532, %v1315
      %v1569 = vsel %vm1561, %v1534, %v1317
      %v1572 = vsel %vm1561, %v1536, %v1319
      %v1575 = vsel %vm1561, %v1538, %v1321
      %v1578 = vsel %vm1561, %v1540, %v1323
      %v1581 = vsel %vm1561, %v1542, %v1325
      %v1584 = vsel %vm1561, %v1544, %v1327
      %v1587 = vsel %vm1561, %v1546, %v1329
      %v1590 = vsel %vm1561, %v1548, %v1331
      %v1593 = vsel %vm1561, %v1550, %v1333
      %v1596 = vsel %vm1561, %v1552, %v1335
      %v1599 = vsel %vm1561, %v1554, %v1337
      %v1602 = vsel %vm1561, %v1556, %v1339
      %v1605 = vsel %vm1561, %v1558, %v1341
      %v1608 = vsel %vm1561, %v1560, %v1343
      %v1610 = vld [vmem:[%s2] sm:$0xf]
      %v1611 = vld [vmem:[%s2 + $0x4] sm:$0xf]
      %v1612 = vld [vmem:[%s2 + $0x8] sm:$0xf]
      %v1613 = vld [vmem:[%s2 + $0xc] sm:$0xf]
      %v1614 = vld [vmem:[%s2 + $0x10] sm:$0xf]
      %v1615 = vld [vmem:[%s2 + $0x14] sm:$0xf]
      %v1616 = vld [vmem:[%s2 + $0x18] sm:$0xf]
      %v1617 = vld [vmem:[%s2 + $0x1c] sm:$0xf]
      %v1618 = vld [vmem:[%s2 + $0x20] sm:$0xf]
      %v1619 = vld [vmem:[%s2 + $0x24] sm:$0xf]
      %v1620 = vld [vmem:[%s2 + $0x28] sm:$0xf]
      %v1621 = vld [vmem:[%s2 + $0x2c] sm:$0xf]
      %v1622 = vld [vmem:[%s2 + $0x30] sm:$0xf]
      %v1623 = vld [vmem:[%s2 + $0x34] sm:$0xf]
      %v1624 = vld [vmem:[%s2 + $0x38] sm:$0xf]
      %v1625 = vld [vmem:[%s2 + $0x3c] sm:$0xf]
      %v1626 = vld [vmem:[%s2 + $0x40] sm:$0xf]
      %v1627 = vld [vmem:[%s2 + $0x44] sm:$0xf]
      %v1628 = vld [vmem:[%s3] sm:$0x1]
      %v1630 = vperm.slane %v1628, 0
      %v1650 = vunpack.c.l.b16 %v1610
      %v1651 = vunpack.c.l.b16 %v1611
      %v1652 = vunpack.c.l.b16 %v1612
      %v1653 = vunpack.c.l.b16 %v1613
      %v1654 = vunpack.c.l.b16 %v1614
      %v1655 = vunpack.c.l.b16 %v1615
      %v1656 = vunpack.c.l.b16 %v1616
      %v1657 = vunpack.c.l.b16 %v1617
      %v1658 = vunpack.c.l.b16 %v1618
      %v1659 = vunpack.c.l.b16 %v1619
      %v1660 = vunpack.c.l.b16 %v1620
      %v1661 = vunpack.c.l.b16 %v1621
      %v1662 = vunpack.c.l.b16 %v1622
      %v1663 = vunpack.c.l.b16 %v1623
      %v1664 = vunpack.c.l.b16 %v1624
      %v1665 = vunpack.c.l.b16 %v1625
      %v1666 = vunpack.c.l.b16 %v1626
      %v1667 = vunpack.c.l.b16 %v1627
      %v1668 = vpack.c.b16 %v1651, %v1650
      %v1669 = vpack.c.b16 %v1653, %v1652
      %v1670 = vpack.c.b16 %v1655, %v1654
      %v1671 = vpack.c.b16 %v1657, %v1656
      %v1672 = vpack.c.b16 %v1659, %v1658
      %v1673 = vpack.c.b16 %v1661, %v1660
      %v1674 = vpack.c.b16 %v1663, %v1662
      %v1675 = vpack.c.b16 %v1665, %v1664
      %v1676 = vpack.c.b16 %v1667, %v1666
      %v1687 = vsel %vm1347, %v1123, 0
      %v1690 = vsel %vm1347, %v1124, 0
      %v1693 = vsel %vm1347, %v1125, 0
      %v1696 = vsel %vm1347, %v1126, 0
      %v1699 = vsel %vm1347, %v1127, 0
      %v1702 = vsel %vm1347, %v1128, 0
      %v1705 = vsel %vm1347, %v1129, 0
      %v1708 = vsel %vm1347, %v1130, 0
      %v1711 = vsel %vm1347, %v1131, 0
      %v1714 = vsel %vm1347, %v1132, 0
      %v1717 = vsel %vm1347, %v1133, 0
      %v1720 = vsel %vm1347, %v1134, 0
      %v1723 = vsel %vm1347, %v1135, 0
      %v1726 = vsel %vm1347, %v1136, 0
      %v1729 = vsel %vm1347, %v1241, 0
      %v1732 = vsel %vm1347, %v1346, 0
      %1734 = vmatpush.bf16.msra.mxu0 %v1675
      %1735 = vmatpush.bf16.msra.mxu0 %v1674
      %1736 = vmatpush.bf16.msra.mxu0 %v1673
      %1737 = vmatpush.bf16.msra.mxu0 %v1672
      %1738 = vmatpush.bf16.msra.mxu0 %v1671
      %1739 = vmatpush.bf16.msra.mxu0 %v1670
      %1740 = vmatpush.bf16.msra.mxu0 %v1669
      %1741 = vmatpush.bf16.msra.mxu0 %v1668
      %1742 = vmatmul.bf16.gmra.mxu0 %v1563
      %v1743 = vpop.f32.mrf.mxu0
      %v1744 = vadd.f32 %v1630, %v1743
      %v1745 = vpop.f32.mrf.mxu0
      %v1746 = vadd.f32 %v1630, %v1745
      %1747 = vmatmul.bf16.gmra.mxu0 %v1566
      %v1748 = vpop.f32.mrf.mxu0
      %v1749 = vadd.f32 %v1630, %v1748
      %v1750 = vpop.f32.mrf.mxu0
      %v1751 = vadd.f32 %v1630, %v1750
      %1752 = vmatmul.bf16.gmra.mxu0 %v1569
      %v1753 = vpop.f32.mrf.mxu0
      %v1754 = vadd.f32 %v1630, %v1753
      %v1755 = vpop.f32.mrf.mxu0
      %v1756 = vadd.f32 %v1630, %v1755
      %1757 = vmatmul.bf16.gmra.mxu0 %v1572
      %v1758 = vpop.f32.mrf.mxu0
      %v1759 = vadd.f32 %v1630, %v1758
      %v1760 = vpop.f32.mrf.mxu0
      %v1761 = vadd.f32 %v1630, %v1760
      %1762 = vmatmul.bf16.gmra.mxu0 %v1575
      %v1763 = vpop.f32.mrf.mxu0
      %v1764 = vadd.f32 %v1630, %v1763
      %v1765 = vpop.f32.mrf.mxu0
      %v1766 = vadd.f32 %v1630, %v1765
      %1767 = vmatmul.bf16.gmra.mxu0 %v1578
      %v1768 = vpop.f32.mrf.mxu0
      %v1769 = vadd.f32 %v1630, %v1768
      %v1770 = vpop.f32.mrf.mxu0
      %v1771 = vadd.f32 %v1630, %v1770
      %1772 = vmatmul.bf16.gmra.mxu0 %v1581
      %v1773 = vpop.f32.mrf.mxu0
      %v1774 = vadd.f32 %v1630, %v1773
      %v1775 = vpop.f32.mrf.mxu0
      %v1776 = vadd.f32 %v1630, %v1775
      %1777 = vmatmul.bf16.gmra.mxu0 %v1584
      %v1778 = vpop.f32.mrf.mxu0
      %v1779 = vadd.f32 %v1630, %v1778
      %v1780 = vpop.f32.mrf.mxu0
      %v1781 = vadd.f32 %v1630, %v1780
      %1782 = vmatmul.bf16.gmra.mxu0 %v1587
      %v1783 = vpop.f32.mrf.mxu0
      %v1784 = vadd.f32 %v1630, %v1783
      %v1785 = vpop.f32.mrf.mxu0
      %v1786 = vadd.f32 %v1630, %v1785
      %1787 = vmatmul.bf16.gmra.mxu0 %v1590
      %v1788 = vpop.f32.mrf.mxu0
      %v1789 = vadd.f32 %v1630, %v1788
      %v1790 = vpop.f32.mrf.mxu0
      %v1791 = vadd.f32 %v1630, %v1790
      %1792 = vmatmul.bf16.gmra.mxu0 %v1593
      %v1793 = vpop.f32.mrf.mxu0
      %v1794 = vadd.f32 %v1630, %v1793
      %v1795 = vpop.f32.mrf.mxu0
      %v1796 = vadd.f32 %v1630, %v1795
      %1797 = vmatmul.bf16.gmra.mxu0 %v1596
      %v1798 = vpop.f32.mrf.mxu0
      %v1799 = vadd.f32 %v1630, %v1798
      %v1800 = vpop.f32.mrf.mxu0
      %v1801 = vadd.f32 %v1630, %v1800
      %1802 = vmatmul.bf16.gmra.mxu0 %v1599
      %v1803 = vpop.f32.mrf.mxu0
      %v1804 = vadd.f32 %v1630, %v1803
      %v1805 = vpop.f32.mrf.mxu0
      %v1806 = vadd.f32 %v1630, %v1805
      %1807 = vmatmul.bf16.gmra.mxu0 %v1602
      %v1808 = vpop.f32.mrf.mxu0
      %v1809 = vadd.f32 %v1630, %v1808
      %v1810 = vpop.f32.mrf.mxu0
      %v1811 = vadd.f32 %v1630, %v1810
      %1812 = vmatmul.bf16.gmra.mxu0 %v1605
      %v1813 = vpop.f32.mrf.mxu0
      %v1814 = vadd.f32 %v1630, %v1813
      %v1815 = vpop.f32.mrf.mxu0
      %v1816 = vadd.f32 %v1630, %v1815
      %1817 = vmatmul.bf16.gmra.mxu0 %v1608
      %v1818 = vpop.f32.mrf.mxu0
      %v1819 = vadd.f32 %v1630, %v1818
      %v1820 = vpop.f32.mrf.mxu0
      %v1821 = vadd.f32 %v1630, %v1820
      %1822 = vdwg.mxu0
      %1823 = vmatpush.bf16.msra.mxu0 0
      %1824 = vmatpush.bf16.msra.mxu0 0
      %1825 = vmatpush.bf16.msra.mxu0 0
      %1826 = vmatpush.bf16.msra.mxu0 0
      %1827 = vmatpush.bf16.msra.mxu0 0
      %1828 = vmatpush.bf16.msra.mxu0 0
      %1829 = vmatpush.bf16.msra.mxu0 0
      %1830 = vmatpush.bf16.msra.mxu0 %v1676
      %1831 = vmatmul.bf16.gmra.mxu0 %v1687
      %v1832 = vpop.f32.mrf.mxu0
      %v1833 = vadd.f32 %v1744, %v1832
      %v1834 = vpop.f32.mrf.mxu0
      %v1835 = vadd.f32 %v1746, %v1834
      %1836 = vmatmul.bf16.gmra.mxu0 %v1690
      %v1837 = vpop.f32.mrf.mxu0
      %v1838 = vadd.f32 %v1749, %v1837
      %v1839 = vpop.f32.mrf.mxu0
      %v1840 = vadd.f32 %v1751, %v1839
      %1841 = vmatmul.bf16.gmra.mxu0 %v1693
      %v1842 = vpop.f32.mrf.mxu0
      %v1843 = vadd.f32 %v1754, %v1842
      %v1844 = vpop.f32.mrf.mxu0
      %v1845 = vadd.f32 %v1756, %v1844
      %1846 = vmatmul.bf16.gmra.mxu0 %v1696
      %v1847 = vpop.f32.mrf.mxu0
      %v1848 = vadd.f32 %v1759, %v1847
      %v1849 = vpop.f32.mrf.mxu0
      %v1850 = vadd.f32 %v1761, %v1849
      %1851 = vmatmul.bf16.gmra.mxu0 %v1699
      %v1852 = vpop.f32.mrf.mxu0
      %v1853 = vadd.f32 %v1764, %v1852
      %v1854 = vpop.f32.mrf.mxu0
      %v1855 = vadd.f32 %v1766, %v1854
      %1856 = vmatmul.bf16.gmra.mxu0 %v1702
      %v1857 = vpop.f32.mrf.mxu0
      %v1858 = vadd.f32 %v1769, %v1857
      %v1859 = vpop.f32.mrf.mxu0
      %v1860 = vadd.f32 %v1771, %v1859
      %1861 = vmatmul.bf16.gmra.mxu0 %v1705
      %v1862 = vpop.f32.mrf.mxu0
      %v1863 = vadd.f32 %v1774, %v1862
      %v1864 = vpop.f32.mrf.mxu0
      %v1865 = vadd.f32 %v1776, %v1864
      %1866 = vmatmul.bf16.gmra.mxu0 %v1708
      %v1867 = vpop.f32.mrf.mxu0
      %v1868 = vadd.f32 %v1779, %v1867
      %v1869 = vpop.f32.mrf.mxu0
      %v1870 = vadd.f32 %v1781, %v1869
      %1871 = vmatmul.bf16.gmra.mxu0 %v1711
      %v1872 = vpop.f32.mrf.mxu0
      %v1873 = vadd.f32 %v1784, %v1872
      %v1874 = vpop.f32.mrf.mxu0
      %v1875 = vadd.f32 %v1786, %v1874
      %1876 = vmatmul.bf16.gmra.mxu0 %v1714
      %v1877 = vpop.f32.mrf.mxu0
      %v1878 = vadd.f32 %v1789, %v1877
      %v1879 = vpop.f32.mrf.mxu0
      %v1880 = vadd.f32 %v1791, %v1879
      %1881 = vmatmul.bf16.gmra.mxu0 %v1717
      %v1882 = vpop.f32.mrf.mxu0
      %v1883 = vadd.f32 %v1794, %v1882
      %v1884 = vpop.f32.mrf.mxu0
      %v1885 = vadd.f32 %v1796, %v1884
      %1886 = vmatmul.bf16.gmra.mxu0 %v1720
      %v1887 = vpop.f32.mrf.mxu0
      %v1888 = vadd.f32 %v1799, %v1887
      %v1889 = vpop.f32.mrf.mxu0
      %v1890 = vadd.f32 %v1801, %v1889
      %1891 = vmatmul.bf16.gmra.mxu0 %v1723
      %v1892 = vpop.f32.mrf.mxu0
      %v1893 = vadd.f32 %v1804, %v1892
      %v1894 = vpop.f32.mrf.mxu0
      %v1895 = vadd.f32 %v1806, %v1894
      %1896 = vmatmul.bf16.gmra.mxu0 %v1726
      %v1897 = vpop.f32.mrf.mxu0
      %v1898 = vadd.f32 %v1809, %v1897
      %v1899 = vpop.f32.mrf.mxu0
      %v1900 = vadd.f32 %v1811, %v1899
      %1901 = vmatmul.bf16.gmra.mxu0 %v1729
      %v1902 = vpop.f32.mrf.mxu0
      %v1903 = vadd.f32 %v1814, %v1902
      %v1904 = vpop.f32.mrf.mxu0
      %v1905 = vadd.f32 %v1816, %v1904
      %1906 = vmatmul.bf16.gmra.mxu0 %v1732
      %v1907 = vpop.f32.mrf.mxu0
      %v1908 = vadd.f32 %v1819, %v1907
      %v1909 = vpop.f32.mrf.mxu0
      %v1910 = vadd.f32 %v1821, %v1909
      %1911 = vdwg.mxu0
      %vm1912 = vcmask 31744
      %1913 = vst.msk [vmem:[%s286] sm:$0xff] %vm1912, %v1833
      %1914 = vst.msk [vmem:[%s286 + $0x8] sm:$0xff] %vm1912, %v1835
      %1915 = vst.msk [vmem:[%s286 + $0x10] sm:$0xff] %vm1912, %v1838
      %1916 = vst.msk [vmem:[%s286 + $0x18] sm:$0xff] %vm1912, %v1840
      %1917 = vst.msk [vmem:[%s286 + $0x20] sm:$0xff] %vm1912, %v1843
      %1918 = vst.msk [vmem:[%s286 + $0x28] sm:$0xff] %vm1912, %v1845
      %1919 = vst.msk [vmem:[%s286 + $0x30] sm:$0xff] %vm1912, %v1848
      %1920 = vst.msk [vmem:[%s286 + $0x38] sm:$0xff] %vm1912, %v1850
      %1921 = vst.msk [vmem:[%s286 + $0x40] sm:$0xff] %vm1912, %v1853
      %1922 = vst.msk [vmem:[%s286 + $0x48] sm:$0xff] %vm1912, %v1855
      %1923 = vst.msk [vmem:[%s286 + $0x50] sm:$0xff] %vm1912, %v1858
      %1924 = vst.msk [vmem:[%s286 + $0x58] sm:$0xff] %vm1912, %v1860
      %1925 = vst.msk [vmem:[%s286 + $0x60] sm:$0xff] %vm1912, %v1863
      %1926 = vst.msk [vmem:[%s286 + $0x68] sm:$0xff] %vm1912, %v1865
      %1927 = vst.msk [vmem:[%s286 + $0x70] sm:$0xff] %vm1912, %v1868
      %1928 = vst.msk [vmem:[%s286 + $0x78] sm:$0xff] %vm1912, %v1870
      %1929 = vst.msk [vmem:[%s286 + $0x80] sm:$0xff] %vm1912, %v1873
      %1930 = vst.msk [vmem:[%s286 + $0x88] sm:$0xff] %vm1912, %v1875
      %1931 = vst.msk [vmem:[%s286 + $0x90] sm:$0xff] %vm1912, %v1878
      %1932 = vst.msk [vmem:[%s286 + $0x98] sm:$0xff] %vm1912, %v1880
      %1933 = vst.msk [vmem:[%s286 + $0xa0] sm:$0xff] %vm1912, %v1883
      %1934 = vst.msk [vmem:[%s286 + $0xa8] sm:$0xff] %vm1912, %v1885
      %1935 = vst.msk [vmem:[%s286 + $0xb0] sm:$0xff] %vm1912, %v1888
      %1936 = vst.msk [vmem:[%s286 + $0xb8] sm:$0xff] %vm1912, %v1890
      %1937 = vst.msk [vmem:[%s286 + $0xc0] sm:$0xff] %vm1912, %v1893
      %1938 = vst.msk [vmem:[%s286 + $0xc8] sm:$0xff] %vm1912, %v1895
      %1939 = vst.msk [vmem:[%s286 + $0xd0] sm:$0xff] %vm1912, %v1898
      %1940 = vst.msk [vmem:[%s286 + $0xd8] sm:$0xff] %vm1912, %v1900
      %1941 = vst.msk [vmem:[%s286 + $0xe0] sm:$0xff] %vm1912, %v1903
      %1942 = vst.msk [vmem:[%s286 + $0xe8] sm:$0xff] %vm1912, %v1905
      %1943 = vst.msk [vmem:[%s286 + $0xf0] sm:$0xff] %vm1912, %v1908
      %1944 = vst.msk [vmem:[%s286 + $0xf8] sm:$0xff] %vm1912, %v1910
      %s1945 = smul.u32 16, %s20
      %p1946 = scmp.lt.s32.totalorder %s19, 1
      %s1947 = scalar_select %p1946, %s19, 1
      %p1948 = scmp.lt.s32.totalorder %s1945, 15
      %s1949 = scalar_select %p1948, %s1945, 15
      %s1950 = smul.addr %s1949, 2
      %s1951 = smul.addr %s1947, 32
      %s1952 = sadd.s32 %s1950, %s1951
      %s1953 = smul.addr %s1952, 8
      %s1954 = scalar_lea.vmem %s4, %s1953
      // Predicated region
      $region37: #{dense_block_forward.7} parent=35 // pred_check
        %p1955 = pneg %p147
      $region38: #{dense_block_forward.7} parent=35 // pred_check_branch
        %1957 = sbr.rel (%p1955) target = $region40
      $region39: #{dense_block_forward.7} parent=35 // pred_region
        %s1958 = smul.u32 16, %s20
      $region40: #{dense_block_forward.7} parent=35 // pred_fallthru
        _
    $region36: #{dense_block_forward.7} parent=5 // pred_fallthru
      _
    %p1959 = scmp.le.s32.totalorder 2, %s10
    // Predicated region
    $region41: #{dense_block_forward.7} parent=5 // pred_check
      %p1960 = pneg %p1959
    $region42: #{dense_block_forward.7} parent=5 // pred_check_branch
      %1962 = sbr.rel (%p1960) target = $region44
    $region43: #{dense_block_forward.7} parent=5 // pred_region
      %s1963 = ssub.s32 %s10, 2
      // Predicated region
      $region45: #{dense_block_forward.7} parent=43 // pred_check
        %p1964 = pneg %p153
      $region46: #{dense_block_forward.7} parent=43 // pred_check_branch
        %1966 = sbr.rel (%p1964) target = $region48
      $region47: #{dense_block_forward.7} parent=43 // pred_region
        %s1967 = smul.u32 16, %s22
        %p1968 = scmp.lt.s32.totalorder %s21, 1
        %s1969 = scalar_select %p1968, %s21, 1
        %p1970 = scmp.lt.s32.totalorder %s1967, 15
        %s1971 = scalar_select %p1970, %s1967, 15
        %s1972 = smul.addr %s1971, 2
        %s1973 = smul.addr %s1969, 32
        %s1974 = sadd.s32 %s1972, %s1973
        %s1975 = smul.addr %s1974, 8
        %s1976 = scalar_lea.vmem %s4, %s1975
      $region48: #{dense_block_forward.7} parent=43 // pred_fallthru
        _
    $region44: #{dense_block_forward.7} parent=5 // pred_fallthru
      _
  $region6: #{dense_block_forward.7} parent=0 // loop_footer
    %s14 = sadd.s32 1, %s10
  $region7: #{dense_block_forward.7} parent=0 // loop_footer_branch
    %9 = sbr.rel target = $region3
  $region8: #{dense_block_forward.7} parent=0 // loop_exit
    _

// kernel: dense_block_forward.10
$region0: #{dense_block_forward.10}
  #allocation0 [shape = 'u32[]', space=smem, size = 0x4, offset = 0x4, fixed_abs, tag = 'smem constant byte address 0x4 - core index']
  #allocation1 [shape = 'u32[72,128]{1,0:T(1,128)}', space=vmem, size = 0x9000, scoped, tag = 'internal scratch']
  %s0 = inlined_call_operand.vmem [shape: f32[512,12], index: 0, kind: input, shape index: {}]
  %s1 = inlined_call_operand.vmem [shape: f32[1,12], index: 1, kind: input, shape index: {}]
  %s2 = inlined_call_operand.vmem [shape: f32[1,12], index: 2, kind: input, shape index: {}]
  %s3 = inlined_call_operand.vmem [shape: bf16[12,16], index: 3, kind: input, shape index: {}]
  %s4 = inlined_call_operand.vmem [shape: f32[1,16], index: 4, kind: input, shape index: {}]
  %s5 = inlined_call_operand.vmem [shape: f32[1,16], index: 5, kind: input, shape index: {}]
  %s6 = inlined_call_operand.vmem [shape: f32[1,16], index: 6, kind: input, shape index: {}]
  %s7 = inlined_call_operand.vmem [shape: bf16[512,16], index: 7, kind: output, shape index: {}]
  %s8 = sld [smem:[#allocation0]]
  $region38: #{dense_block_forward.10} parent=0
    _
  %s10 = ssub.s32 1, %s8
  %s11 = scalar_select 0, %s10, %s8
  // Predicated region
  $region2: #{dense_block_forward.10} parent=0 // pred_check
    _
  $region3: #{dense_block_forward.10} parent=0 // pred_check_branch
    %13 = sbr.rel (0) target = $region5
  $region4: #{dense_block_forward.10} parent=0 // pred_region
    _
  $region5: #{dense_block_forward.10} parent=0 // pred_fallthru
    _
  // Predicated region
  $region6: #{dense_block_forward.10} parent=0 // pred_check
    _
  $region7: #{dense_block_forward.10} parent=0 // pred_check_branch
    %15 = sbr.rel (0) target = $region9
  $region8: #{dense_block_forward.10} parent=0 // pred_region
    _
  $region9: #{dense_block_forward.10} parent=0 // pred_fallthru
    _
  // Predicated region
  $region10: #{dense_block_forward.10} parent=0 // pred_check
    _
  $region11: #{dense_block_forward.10} parent=0 // pred_check_branch
    %17 = sbr.rel (0) target = $region13
  $region12: #{dense_block_forward.10} parent=0 // pred_region
    _
  $region13: #{dense_block_forward.10} parent=0 // pred_fallthru
    _
  // Predicated region
  $region14: #{dense_block_forward.10} parent=0 // pred_check
    _
  $region15: #{dense_block_forward.10} parent=0 // pred_check_branch
    %19 = sbr.rel (0) target = $region17
  $region16: #{dense_block_forward.10} parent=0 // pred_region
    _
  $region17: #{dense_block_forward.10} parent=0 // pred_fallthru
    _
  // Predicated region
  $region18: #{dense_block_forward.10} parent=0 // pred_check
    _
  $region19: #{dense_block_forward.10} parent=0 // pred_check_branch
    %21 = sbr.rel (0) target = $region21
  $region20: #{dense_block_forward.10} parent=0 // pred_region
    _
  $region21: #{dense_block_forward.10} parent=0 // pred_fallthru
    _
  // Predicated region
  $region22: #{dense_block_forward.10} parent=0 // pred_check
    _
  $region23: #{dense_block_forward.10} parent=0 // pred_check_branch
    %23 = sbr.rel (0) target = $region25
  $region24: #{dense_block_forward.10} parent=0 // pred_region
    _
  $region25: #{dense_block_forward.10} parent=0 // pred_fallthru
    _
  // Predicated region
  $region26: #{dense_block_forward.10} parent=0 // pred_check
    _
  $region27: #{dense_block_forward.10} parent=0 // pred_check_branch
    %25 = sbr.rel (0) target = $region29
  $region28: #{dense_block_forward.10} parent=0 // pred_region
    _
  $region29: #{dense_block_forward.10} parent=0 // pred_fallthru
    _
  %v27 = vld [vmem:[%s0] sm:$0xff]
  %v28 = vld [vmem:[%s0 + $0x8] sm:$0xff]
  %v29 = vld [vmem:[%s0 + $0x10] sm:$0xff]
  %v30 = vld [vmem:[%s0 + $0x18] sm:$0xff]
  %v31 = vld [vmem:[%s0 + $0x20] sm:$0xff]
  %v32 = vld [vmem:[%s0 + $0x28] sm:$0xff]
  %v33 = vld [vmem:[%s0 + $0x30] sm:$0xff]
  %v34 = vld [vmem:[%s0 + $0x38] sm:$0xff]
  %v35 = vld [vmem:[%s0 + $0x40] sm:$0xff]
  %v36 = vld [vmem:[%s0 + $0x48] sm:$0xff]
  %v37 = vld [vmem:[%s0 + $0x50] sm:$0xff]
  %v38 = vld [vmem:[%s0 + $0x58] sm:$0xff]
  %v39 = vld [vmem:[%s0 + $0x60] sm:$0xff]
  %v40 = vld [vmem:[%s0 + $0x68] sm:$0xff]
  %v41 = vld [vmem:[%s0 + $0x70] sm:$0xff]
  %v42 = vld [vmem:[%s0 + $0x78] sm:$0xff]
  %v43 = vld [vmem:[%s0 + $0x80] sm:$0xff]
  %v44 = vld [vmem:[%s0 + $0x88] sm:$0xff]
  %v45 = vld [vmem:[%s0 + $0x90] sm:$0xff]
  %v46 = vld [vmem:[%s0 + $0x98] sm:$0xff]
  %v47 = vld [vmem:[%s0 + $0xa0] sm:$0xff]
  %v48 = vld [vmem:[%s0 + $0xa8] sm:$0xff]
  %v49 = vld [vmem:[%s0 + $0xb0] sm:$0xff]
  %v50 = vld [vmem:[%s0 + $0xb8] sm:$0xff]
  %v51 = vld [vmem:[%s0 + $0xc0] sm:$0xff]
  %v52 = vld [vmem:[%s0 + $0xc8] sm:$0xff]
  %v53 = vld [vmem:[%s0 + $0xd0] sm:$0xff]
  %v54 = vld [vmem:[%s0 + $0xd8] sm:$0xff]
  %v55 = vld [vmem:[%s0 + $0xe0] sm:$0xff]
  %v56 = vld [vmem:[%s0 + $0xe8] sm:$0xff]
  %v57 = vld [vmem:[%s0 + $0xf0] sm:$0xff]
  %v58 = vld [vmem:[%s0 + $0xf8] sm:$0xff]
  %v59 = vld [vmem:[%s0 + $0x100] sm:$0xff]
  %v60 = vld [vmem:[%s0 + $0x108] sm:$0xff]
  %v61 = vld [vmem:[%s0 + $0x110] sm:$0xff]
  %v62 = vld [vmem:[%s0 + $0x118] sm:$0xff]
  %v63 = vld [vmem:[%s0 + $0x120] sm:$0xff]
  %v64 = vld [vmem:[%s0 + $0x128] sm:$0xff]
  %v65 = vld [vmem:[%s0 + $0x130] sm:$0xff]
  %v66 = vld [vmem:[%s0 + $0x138] sm:$0xff]
  %v67 = vld [vmem:[%s0 + $0x140] sm:$0xff]
  %v68 = vld [vmem:[%s0 + $0x148] sm:$0xff]
  %v69 = vld [vmem:[%s0 + $0x150] sm:$0xff]
  %v70 = vld [vmem:[%s0 + $0x158] sm:$0xff]
  %v71 = vld [vmem:[%s0 + $0x160] sm:$0xff]
  %v72 = vld [vmem:[%s0 + $0x168] sm:$0xff]
  %v73 = vld [vmem:[%s0 + $0x170] sm:$0xff]
  %v74 = vld [vmem:[%s0 + $0x178] sm:$0xff]
  %v75 = vld [vmem:[%s0 + $0x180] sm:$0xff]
  %v76 = vld [vmem:[%s0 + $0x188] sm:$0xff]
  %v77 = vld [vmem:[%s0 + $0x190] sm:$0xff]
  %v78 = vld [vmem:[%s0 + $0x198] sm:$0xff]
  %v79 = vld [vmem:[%s0 + $0x1a0] sm:$0xff]
  %v80 = vld [vmem:[%s0 + $0x1a8] sm:$0xff]
  %v81 = vld [vmem:[%s0 + $0x1b0] sm:$0xff]
  %v82 = vld [vmem:[%s0 + $0x1b8] sm:$0xff]
  %v83 = vld [vmem:[%s0 + $0x1c0] sm:$0xff]
  %v84 = vld [vmem:[%s0 + $0x1c8] sm:$0xff]
  %v85 = vld [vmem:[%s0 + $0x1d0] sm:$0xff]
  %v86 = vld [vmem:[%s0 + $0x1d8] sm:$0xff]
  %v87 = vld [vmem:[%s0 + $0x1e0] sm:$0xff]
  %v88 = vld [vmem:[%s0 + $0x1e8] sm:$0xff]
  %v89 = vld [vmem:[%s0 + $0x1f0] sm:$0xff]
  %v90 = vld [vmem:[%s0 + $0x1f8] sm:$0xff]
  %v91 = vld [vmem:[%s1] sm:$0x1]
  %v93 = vperm.slane %v91, 0
  %v95 = vmul.f32 %v27, %v93
  %v96 = vmul.f32 %v28, %v93
  %v97 = vmul.f32 %v29, %v93
  %v98 = vmul.f32 %v30, %v93
  %v99 = vmul.f32 %v31, %v93
  %v100 = vmul.f32 %v32, %v93
  %v101 = vmul.f32 %v33, %v93
  %v102 = vmul.f32 %v34, %v93
  %v103 = vmul.f32 %v35, %v93
  %v104 = vmul.f32 %v36, %v93
  %v105 = vmul.f32 %v37, %v93
  %v106 = vmul.f32 %v38, %v93
  %v107 = vmul.f32 %v39, %v93
  %v108 = vmul.f32 %v40, %v93
  %v109 = vmul.f32 %v41, %v93
  %v110 = vmul.f32 %v42, %v93
  %v111 = vmul.f32 %v43, %v93
  %v112 = vmul.f32 %v44, %v93
  %v113 = vmul.f32 %v45, %v93
  %v114 = vmul.f32 %v46, %v93
  %v115 = vmul.f32 %v47, %v93
  %v116 = vmul.f32 %v48, %v93
  %v117 = vmul.f32 %v49, %v93
  %v118 = vmul.f32 %v50, %v93
  %v119 = vmul.f32 %v51, %v93
  %v120 = vmul.f32 %v52, %v93
  %v121 = vmul.f32 %v53, %v93
  %v122 = vmul.f32 %v54, %v93
  %v123 = vmul.f32 %v55, %v93
  %v124 = vmul.f32 %v56, %v93
  %v125 = vmul.f32 %v57, %v93
  %v126 = vmul.f32 %v58, %v93
  %v127 = vmul.f32 %v59, %v93
  %v128 = vmul.f32 %v60, %v93
  %v129 = vmul.f32 %v61, %v93
  %v130 = vmul.f32 %v62, %v93
  %v131 = vmul.f32 %v63, %v93
  %v132 = vmul.f32 %v64, %v93
  %v133 = vmul.f32 %v65, %v93
  %v134 = vmul.f32 %v66, %v93
  %v135 = vmul.f32 %v67, %v93
  %v136 = vmul.f32 %v68, %v93
  %v137 = vmul.f32 %v69, %v93
  %v138 = vmul.f32 %v70, %v93
  %v139 = vmul.f32 %v71, %v93
  %v140 = vmul.f32 %v72, %v93
  %v141 = vmul.f32 %v73, %v93
  %v142 = vmul.f32 %v74, %v93
  %v143 = vmul.f32 %v75, %v93
  %v144 = vmul.f32 %v76, %v93
  %v145 = vmul.f32 %v77, %v93
  %v146 = vmul.f32 %v78, %v93
  %v147 = vmul.f32 %v79, %v93
  %v148 = vmul.f32 %v80, %v93
  %v149 = vmul.f32 %v81, %v93
  %v150 = vmul.f32 %v82, %v93
  %v151 = vmul.f32 %v83, %v93
  %v152 = vmul.f32 %v84, %v93
  %v153 = vmul.f32 %v85, %v93
  %v154 = vmul.f32 %v86, %v93
  %v155 = vmul.f32 %v87, %v93
  %v156 = vmul.f32 %v88, %v93
  %v157 = vmul.f32 %v89, %v93
  %v158 = vmul.f32 %v90, %v93
  %v159 = vld [vmem:[%s2] sm:$0x1]
  %v161 = vperm.slane %v159, 0
  %v163 = vadd.f32 %v95, %v161
  %v164 = vadd.f32 %v96, %v161
  %v165 = vadd.f32 %v97, %v161
  %v166 = vadd.f32 %v98, %v161
  %v167 = vadd.f32 %v99, %v161
  %v168 = vadd.f32 %v100, %v161
  %v169 = vadd.f32 %v101, %v161
  %v170 = vadd.f32 %v102, %v161
  %v171 = vadd.f32 %v103, %v161
  %v172 = vadd.f32 %v104, %v161
  %v173 = vadd.f32 %v105, %v161
  %v174 = vadd.f32 %v106, %v161
  %v175 = vadd.f32 %v107, %v161
  %v176 = vadd.f32 %v108, %v161
  %v177 = vadd.f32 %v109, %v161
  %v178 = vadd.f32 %v110, %v161
  %v179 = vadd.f32 %v111, %v161
  %v180 = vadd.f32 %v112, %v161
  %v181 = vadd.f32 %v113, %v161
  %v182 = vadd.f32 %v114, %v161
  %v183 = vadd.f32 %v115, %v161
  %v184 = vadd.f32 %v116, %v161
  %v185 = vadd.f32 %v117, %v161
  %v186 = vadd.f32 %v118, %v161
  %v187 = vadd.f32 %v119, %v161
  %v188 = vadd.f32 %v120, %v161
  %v189 = vadd.f32 %v121, %v161
  %v190 = vadd.f32 %v122, %v161
  %v191 = vadd.f32 %v123, %v161
  %v192 = vadd.f32 %v124, %v161
  %v193 = vadd.f32 %v125, %v161
  %v194 = vadd.f32 %v126, %v161
  %v195 = vadd.f32 %v127, %v161
  %v196 = vadd.f32 %v128, %v161
  %v197 = vadd.f32 %v129, %v161
  %v198 = vadd.f32 %v130, %v161
  %v199 = vadd.f32 %v131, %v161
  %v200 = vadd.f32 %v132, %v161
  %v201 = vadd.f32 %v133, %v161
  %v202 = vadd.f32 %v134, %v161
  %v203 = vadd.f32 %v135, %v161
  %v204 = vadd.f32 %v136, %v161
  %v205 = vadd.f32 %v137, %v161
  %v206 = vadd.f32 %v138, %v161
  %v207 = vadd.f32 %v139, %v161
  %v208 = vadd.f32 %v140, %v161
  %v209 = vadd.f32 %v141, %v161
  %v210 = vadd.f32 %v142, %v161
  %v211 = vadd.f32 %v143, %v161
  %v212 = vadd.f32 %v144, %v161
  %v213 = vadd.f32 %v145, %v161
  %v214 = vadd.f32 %v146, %v161
  %v215 = vadd.f32 %v147, %v161
  %v216 = vadd.f32 %v148, %v161
  %v217 = vadd.f32 %v149, %v161
  %v218 = vadd.f32 %v150, %v161
  %v219 = vadd.f32 %v151, %v161
  %v220 = vadd.f32 %v152, %v161
  %v221 = vadd.f32 %v153, %v161
  %v222 = vadd.f32 %v154, %v161
  %v223 = vadd.f32 %v155, %v161
  %v224 = vadd.f32 %v156, %v161
  %v225 = vadd.f32 %v157, %v161
  %v226 = vadd.f32 %v158, %v161
  %v227 = vmax.f32 %v163, 0.0
  %v228 = vmax.f32 %v164, 0.0
  %v229 = vmax.f32 %v165, 0.0
  %v230 = vmax.f32 %v166, 0.0
  %v231 = vmax.f32 %v167, 0.0
  %v232 = vmax.f32 %v168, 0.0
  %v233 = vmax.f32 %v169, 0.0
  %v234 = vmax.f32 %v170, 0.0
  %v235 = vmax.f32 %v171, 0.0
  %v236 = vmax.f32 %v172, 0.0
  %v237 = vmax.f32 %v173, 0.0
  %v238 = vmax.f32 %v174, 0.0
  %v239 = vmax.f32 %v175, 0.0
  %v240 = vmax.f32 %v176, 0.0
  %v241 = vmax.f32 %v177, 0.0
  %v242 = vmax.f32 %v178, 0.0
  %v243 = vmax.f32 %v179, 0.0
  %v244 = vmax.f32 %v180, 0.0
  %v245 = vmax.f32 %v181, 0.0
  %v246 = vmax.f32 %v182, 0.0
  %v247 = vmax.f32 %v183, 0.0
  %v248 = vmax.f32 %v184, 0.0
  %v249 = vmax.f32 %v185, 0.0
  %v250 = vmax.f32 %v186, 0.0
  %v251 = vmax.f32 %v187, 0.0
  %v252 = vmax.f32 %v188, 0.0
  %v253 = vmax.f32 %v189, 0.0
  %v254 = vmax.f32 %v190, 0.0
  %v255 = vmax.f32 %v191, 0.0
  %v256 = vmax.f32 %v192, 0.0
  %v257 = vmax.f32 %v193, 0.0
  %v258 = vmax.f32 %v194, 0.0
  %v259 = vmax.f32 %v195, 0.0
  %v260 = vmax.f32 %v196, 0.0
  %v261 = vmax.f32 %v197, 0.0
  %v262 = vmax.f32 %v198, 0.0
  %v263 = vmax.f32 %v199, 0.0
  %v264 = vmax.f32 %v200, 0.0
  %v265 = vmax.f32 %v201, 0.0
  %v266 = vmax.f32 %v202, 0.0
  %v267 = vmax.f32 %v203, 0.0
  %v268 = vmax.f32 %v204, 0.0
  %v269 = vmax.f32 %v205, 0.0
  %v270 = vmax.f32 %v206, 0.0
  %v271 = vmax.f32 %v207, 0.0
  %v272 = vmax.f32 %v208, 0.0
  %v273 = vmax.f32 %v209, 0.0
  %v274 = vmax.f32 %v210, 0.0
  %v275 = vmax.f32 %v211, 0.0
  %v276 = vmax.f32 %v212, 0.0
  %v277 = vmax.f32 %v213, 0.0
  %v278 = vmax.f32 %v214, 0.0
  %v279 = vmax.f32 %v215, 0.0
  %v280 = vmax.f32 %v216, 0.0
  %v281 = vmax.f32 %v217, 0.0
  %v282 = vmax.f32 %v218, 0.0
  %v283 = vmax.f32 %v219, 0.0
  %v284 = vmax.f32 %v220, 0.0
  %v285 = vmax.f32 %v221, 0.0
  %v286 = vmax.f32 %v222, 0.0
  %v287 = vmax.f32 %v223, 0.0
  %v288 = vmax.f32 %v224, 0.0
  %v289 = vmax.f32 %v225, 0.0
  %v290 = vmax.f32 %v226, 0.0
  %v291 = vpack.c.bf16 %v228, %v227
  %v292 = vpack.c.bf16 %v230, %v229
  %v293 = vpack.c.bf16 %v232, %v231
  %v294 = vpack.c.bf16 %v234, %v233
  %v295 = vpack.c.bf16 %v236, %v235
  %v296 = vpack.c.bf16 %v238, %v237
  %v297 = vpack.c.bf16 %v240, %v239
  %v298 = vpack.c.bf16 %v242, %v241
  %v299 = vpack.c.bf16 %v244, %v243
  %v300 = vpack.c.bf16 %v246, %v245
  %v301 = vpack.c.bf16 %v248, %v247
  %v302 = vpack.c.bf16 %v250, %v249
  %v303 = vpack.c.bf16 %v252, %v251
  %v304 = vpack.c.bf16 %v254, %v253
  %v305 = vpack.c.bf16 %v256, %v255
  %v306 = vpack.c.bf16 %v258, %v257
  %v307 = vpack.c.bf16 %v260, %v259
  %v308 = vpack.c.bf16 %v262, %v261
  %v309 = vpack.c.bf16 %v264, %v263
  %v310 = vpack.c.bf16 %v266, %v265
  %v311 = vpack.c.bf16 %v268, %v267
  %v312 = vpack.c.bf16 %v270, %v269
  %v313 = vpack.c.bf16 %v272, %v271
  %v314 = vpack.c.bf16 %v274, %v273
  %v315 = vpack.c.bf16 %v276, %v275
  %v316 = vpack.c.bf16 %v278, %v277
  %v317 = vpack.c.bf16 %v280, %v279
  %v318 = vpack.c.bf16 %v282, %v281
  %v319 = vpack.c.bf16 %v284, %v283
  %v320 = vpack.c.bf16 %v286, %v285
  %v321 = vpack.c.bf16 %v288, %v287
  %v322 = vpack.c.bf16 %v290, %v289
  %v323 = vld [vmem:[%s3] sm:$0xf]
  %v324 = vld [vmem:[%s3 + $0x4] sm:$0x3]
  %v325 = vld [vmem:[%s4] sm:$0x1]
  %v327 = vperm.slane %v325, 0
  %v331 = vunpack.c.l.b16 %v323
  %v332 = vunpack.c.l.b16 %v324
  %v333 = vpack.c.b16 %v332, %v331
  %vm334 = vcmask 97280
  %v336 = vsel %vm334, %v291, 0
  %v339 = vsel %vm334, %v292, 0
  %v342 = vsel %vm334, %v293, 0
  %v345 = vsel %vm334, %v294, 0
  %v348 = vsel %vm334, %v295, 0
  %v351 = vsel %vm334, %v296, 0
  %v354 = vsel %vm334, %v297, 0
  %v357 = vsel %vm334, %v298, 0
  %v360 = vsel %vm334, %v299, 0
  %v363 = vsel %vm334, %v300, 0
  %v366 = vsel %vm334, %v301, 0
  %v369 = vsel %vm334, %v302, 0
  %v372 = vsel %vm334, %v303, 0
  %v375 = vsel %vm334, %v304, 0
  %v378 = vsel %vm334, %v305, 0
  %v381 = vsel %vm334, %v306, 0
  %v384 = vsel %vm334, %v307, 0
  %v387 = vsel %vm334, %v308, 0
  %v390 = vsel %vm334, %v309, 0
  %v393 = vsel %vm334, %v310, 0
  %v396 = vsel %vm334, %v311, 0
  %v399 = vsel %vm334, %v312, 0
  %v402 = vsel %vm334, %v313, 0
  %v405 = vsel %vm334, %v314, 0
  %v408 = vsel %vm334, %v315, 0
  %v411 = vsel %vm334, %v316, 0
  %v414 = vsel %vm334, %v317, 0
  %v417 = vsel %vm334, %v318, 0
  %v420 = vsel %vm334, %v319, 0
  %v423 = vsel %vm334, %v320, 0
  %v426 = vsel %vm334, %v321, 0
  %v429 = vsel %vm334, %v322, 0
  %vm431 = vcmask 1045504
  %v433 = vsel %vm431, %v333, 0
  %435 = vmatpush.bf16.msra.mxu0 0
  %436 = vmatpush.bf16.msra.mxu0 0
  %437 = vmatpush.bf16.msra.mxu0 0
  %438 = vmatpush.bf16.msra.mxu0 0
  %439 = vmatpush.bf16.msra.mxu0 0
  %440 = vmatpush.bf16.msra.mxu0 0
  %441 = vmatpush.bf16.msra.mxu0 0
  %442 = vmatpush.bf16.msra.mxu0 %v433
  %443 = vmatmul.bf16.gmra.mxu0 %v336
  %v444 = vpop.f32.mrf.mxu0
  %v445 = vadd.f32 %v327, %v444
  %v446 = vpop.f32.mrf.mxu0
  %v447 = vadd.f32 %v327, %v446
  %448 = vmatmul.bf16.gmra.mxu0 %v339
  %v449 = vpop.f32.mrf.mxu0
  %v450 = vadd.f32 %v327, %v449
  %v451 = vpop.f32.mrf.mxu0
  %v452 = vadd.f32 %v327, %v451
  %453 = vmatmul.bf16.gmra.mxu0 %v342
  %v454 = vpop.f32.mrf.mxu0
  %v455 = vadd.f32 %v327, %v454
  %v456 = vpop.f32.mrf.mxu0
  %v457 = vadd.f32 %v327, %v456
  %458 = vmatmul.bf16.gmra.mxu0 %v345
  %v459 = vpop.f32.mrf.mxu0
  %v460 = vadd.f32 %v327, %v459
  %v461 = vpop.f32.mrf.mxu0
  %v462 = vadd.f32 %v327, %v461
  %463 = vmatmul.bf16.gmra.mxu0 %v348
  %v464 = vpop.f32.mrf.mxu0
  %v465 = vadd.f32 %v327, %v464
  %v466 = vpop.f32.mrf.mxu0
  %v467 = vadd.f32 %v327, %v466
  %468 = vmatmul.bf16.gmra.mxu0 %v351
  %v469 = vpop.f32.mrf.mxu0
  %v470 = vadd.f32 %v327, %v469
  %v471 = vpop.f32.mrf.mxu0
  %v472 = vadd.f32 %v327, %v471
  %473 = vmatmul.bf16.gmra.mxu0 %v354
  %v474 = vpop.f32.mrf.mxu0
  %v475 = vadd.f32 %v327, %v474
  %v476 = vpop.f32.mrf.mxu0
  %v477 = vadd.f32 %v327, %v476
  %478 = vmatmul.bf16.gmra.mxu0 %v357
  %v479 = vpop.f32.mrf.mxu0
  %v480 = vadd.f32 %v327, %v479
  %v481 = vpop.f32.mrf.mxu0
  %v482 = vadd.f32 %v327, %v481
  %483 = vmatmul.bf16.gmra.mxu0 %v360
  %v484 = vpop.f32.mrf.mxu0
  %v485 = vadd.f32 %v327, %v484
  %v486 = vpop.f32.mrf.mxu0
  %v487 = vadd.f32 %v327, %v486
  %488 = vmatmul.bf16.gmra.mxu0 %v363
  %v489 = vpop.f32.mrf.mxu0
  %v490 = vadd.f32 %v327, %v489
  %v491 = vpop.f32.mrf.mxu0
  %v492 = vadd.f32 %v327, %v491
  %493 = vmatmul.bf16.gmra.mxu0 %v366
  %v494 = vpop.f32.mrf.mxu0
  %v495 = vadd.f32 %v327, %v494
  %v496 = vpop.f32.mrf.mxu0
  %v497 = vadd.f32 %v327, %v496
  %498 = vmatmul.bf16.gmra.mxu0 %v369
  %v499 = vpop.f32.mrf.mxu0
  %v500 = vadd.f32 %v327, %v499
  %v501 = vpop.f32.mrf.mxu0
  %v502 = vadd.f32 %v327, %v501
  %503 = vmatmul.bf16.gmra.mxu0 %v372
  %v504 = vpop.f32.mrf.mxu0
  %v505 = vadd.f32 %v327, %v504
  %v506 = vpop.f32.mrf.mxu0
  %v507 = vadd.f32 %v327, %v506
  %508 = vmatmul.bf16.gmra.mxu0 %v375
  %v509 = vpop.f32.mrf.mxu0
  %v510 = vadd.f32 %v327, %v509
  %v511 = vpop.f32.mrf.mxu0
  %v512 = vadd.f32 %v327, %v511
  %513 = vmatmul.bf16.gmra.mxu0 %v378
  %v514 = vpop.f32.mrf.mxu0
  %v515 = vadd.f32 %v327, %v514
  %v516 = vpop.f32.mrf.mxu0
  %v517 = vadd.f32 %v327, %v516
  %518 = vmatmul.bf16.gmra.mxu0 %v381
  %v519 = vpop.f32.mrf.mxu0
  %v520 = vadd.f32 %v327, %v519
  %v521 = vpop.f32.mrf.mxu0
  %v522 = vadd.f32 %v327, %v521
  %523 = vmatmul.bf16.gmra.mxu0 %v384
  %v524 = vpop.f32.mrf.mxu0
  %v525 = vadd.f32 %v327, %v524
  %v526 = vpop.f32.mrf.mxu0
  %v527 = vadd.f32 %v327, %v526
  %528 = vmatmul.bf16.gmra.mxu0 %v387
  %v529 = vpop.f32.mrf.mxu0
  %v530 = vadd.f32 %v327, %v529
  %v531 = vpop.f32.mrf.mxu0
  %v532 = vadd.f32 %v327, %v531
  %533 = vmatmul.bf16.gmra.mxu0 %v390
  %v534 = vpop.f32.mrf.mxu0
  %v535 = vadd.f32 %v327, %v534
  %v536 = vpop.f32.mrf.mxu0
  %v537 = vadd.f32 %v327, %v536
  %538 = vmatmul.bf16.gmra.mxu0 %v393
  %v539 = vpop.f32.mrf.mxu0
  %v540 = vadd.f32 %v327, %v539
  %v541 = vpop.f32.mrf.mxu0
  %v542 = vadd.f32 %v327, %v541
  %543 = vmatmul.bf16.gmra.mxu0 %v396
  %v544 = vpop.f32.mrf.mxu0
  %v545 = vadd.f32 %v327, %v544
  %v546 = vpop.f32.mrf.mxu0
  %v547 = vadd.f32 %v327, %v546
  %548 = vmatmul.bf16.gmra.mxu0 %v399
  %v549 = vpop.f32.mrf.mxu0
  %v550 = vadd.f32 %v327, %v549
  %v551 = vpop.f32.mrf.mxu0
  %v552 = vadd.f32 %v327, %v551
  %553 = vmatmul.bf16.gmra.mxu0 %v402
  %v554 = vpop.f32.mrf.mxu0
  %v555 = vadd.f32 %v327, %v554
  %v556 = vpop.f32.mrf.mxu0
  %v557 = vadd.f32 %v327, %v556
  %558 = vmatmul.bf16.gmra.mxu0 %v405
  %v559 = vpop.f32.mrf.mxu0
  %v560 = vadd.f32 %v327, %v559
  %v561 = vpop.f32.mrf.mxu0
  %v562 = vadd.f32 %v327, %v561
  %563 = vmatmul.bf16.gmra.mxu0 %v408
  %v564 = vpop.f32.mrf.mxu0
  %v565 = vadd.f32 %v327, %v564
  %v566 = vpop.f32.mrf.mxu0
  %v567 = vadd.f32 %v327, %v566
  %568 = vmatmul.bf16.gmra.mxu0 %v411
  %v569 = vpop.f32.mrf.mxu0
  %v570 = vadd.f32 %v327, %v569
  %v571 = vpop.f32.mrf.mxu0
  %v572 = vadd.f32 %v327, %v571
  %573 = vmatmul.bf16.gmra.mxu0 %v414
  %v574 = vpop.f32.mrf.mxu0
  %v575 = vadd.f32 %v327, %v574
  %v576 = vpop.f32.mrf.mxu0
  %v577 = vadd.f32 %v327, %v576
  %578 = vmatmul.bf16.gmra.mxu0 %v417
  %v579 = vpop.f32.mrf.mxu0
  %v580 = vadd.f32 %v327, %v579
  %v581 = vpop.f32.mrf.mxu0
  %v582 = vadd.f32 %v327, %v581
  %583 = vmatmul.bf16.gmra.mxu0 %v420
  %v584 = vpop.f32.mrf.mxu0
  %v585 = vadd.f32 %v327, %v584
  %v586 = vpop.f32.mrf.mxu0
  %v587 = vadd.f32 %v327, %v586
  %588 = vmatmul.bf16.gmra.mxu0 %v423
  %v589 = vpop.f32.mrf.mxu0
  %v590 = vadd.f32 %v327, %v589
  %v591 = vpop.f32.mrf.mxu0
  %v592 = vadd.f32 %v327, %v591
  %593 = vmatmul.bf16.gmra.mxu0 %v426
  %v594 = vpop.f32.mrf.mxu0
  %v595 = vadd.f32 %v327, %v594
  %v596 = vpop.f32.mrf.mxu0
  %v597 = vadd.f32 %v327, %v596
  %598 = vmatmul.bf16.gmra.mxu0 %v429
  %v599 = vpop.f32.mrf.mxu0
  %v600 = vadd.f32 %v327, %v599
  %v601 = vpop.f32.mrf.mxu0
  %v602 = vadd.f32 %v327, %v601
  %603 = vdwg.mxu0
  %v604 = vld [vmem:[%s5] sm:$0x1]
  %v606 = vperm.slane %v604, 0
  %v608 = vmul.f32 %v445, %v606
  %v609 = vmul.f32 %v447, %v606
  %v610 = vmul.f32 %v450, %v606
  %v611 = vmul.f32 %v452, %v606
  %v612 = vmul.f32 %v455, %v606
  %v613 = vmul.f32 %v457, %v606
  %v614 = vmul.f32 %v460, %v606
  %v615 = vmul.f32 %v462, %v606
  %v616 = vmul.f32 %v465, %v606
  %v617 = vmul.f32 %v467, %v606
  %v618 = vmul.f32 %v470, %v606
  %v619 = vmul.f32 %v472, %v606
  %v620 = vmul.f32 %v475, %v606
  %v621 = vmul.f32 %v477, %v606
  %v622 = vmul.f32 %v480, %v606
  %v623 = vmul.f32 %v482, %v606
  %v624 = vmul.f32 %v485, %v606
  %v625 = vmul.f32 %v487, %v606
  %v626 = vmul.f32 %v490, %v606
  %v627 = vmul.f32 %v492, %v606
  %v628 = vmul.f32 %v495, %v606
  %v629 = vmul.f32 %v497, %v606
  %v630 = vmul.f32 %v500, %v606
  %v631 = vmul.f32 %v502, %v606
  %v632 = vmul.f32 %v505, %v606
  %v633 = vmul.f32 %v507, %v606
  %v634 = vmul.f32 %v510, %v606
  %v635 = vmul.f32 %v512, %v606
  %v636 = vmul.f32 %v515, %v606
  %v637 = vmul.f32 %v517, %v606
  %v638 = vmul.f32 %v520, %v606
  %v639 = vmul.f32 %v522, %v606
  %v640 = vmul.f32 %v525, %v606
  %v641 = vmul.f32 %v527, %v606
  %v642 = vmul.f32 %v530, %v606
  %v643 = vmul.f32 %v532, %v606
  %v644 = vmul.f32 %v535, %v606
  %v645 = vmul.f32 %v537, %v606
  %v646 = vmul.f32 %v540, %v606
  %v647 = vmul.f32 %v542, %v606
  %v648 = vmul.f32 %v545, %v606
  %v649 = vmul.f32 %v547, %v606
  %v650 = vmul.f32 %v550, %v606
  %v651 = vmul.f32 %v552, %v606
  %v652 = vmul.f32 %v555, %v606
  %v653 = vmul.f32 %v557, %v606
  %v654 = vmul.f32 %v560, %v606
  %v655 = vmul.f32 %v562, %v606
  %v656 = vmul.f32 %v565, %v606
  %v657 = vmul.f32 %v567, %v606
  %v658 = vmul.f32 %v570, %v606
  %v659 = vmul.f32 %v572, %v606
  %v660 = vmul.f32 %v575, %v606
  %v661 = vmul.f32 %v577, %v606
  %v662 = vmul.f32 %v580, %v606
  %v663 = vmul.f32 %v582, %v606
  %v664 = vmul.f32 %v585, %v606
  %v665 = vmul.f32 %v587, %v606
  %v666 = vmul.f32 %v590, %v606
  %v667 = vmul.f32 %v592, %v606
  %v668 = vmul.f32 %v595, %v606
  %v669 = vmul.f32 %v597, %v606
  %v670 = vmul.f32 %v600, %v606
  %v671 = vmul.f32 %v602, %v606
  %v672 = vld [vmem:[%s6] sm:$0x1]
  %v674 = vperm.slane %v672, 0
  %v676 = vadd.f32 %v608, %v674
  %v677 = vadd.f32 %v609, %v674
  %v678 = vadd.f32 %v610, %v674
  %v679 = vadd.f32 %v611, %v674
  %v680 = vadd.f32 %v612, %v674
  %v681 = vadd.f32 %v613, %v674
  %v682 = vadd.f32 %v614, %v674
  %v683 = vadd.f32 %v615, %v674
  %v684 = vadd.f32 %v616, %v674
  %v685 = vadd.f32 %v617, %v674
  %v686 = vadd.f32 %v618, %v674
  %v687 = vadd.f32 %v619, %v674
  %v688 = vadd.f32 %v620, %v674
  %v689 = vadd.f32 %v621, %v674
  %v690 = vadd.f32 %v622, %v674
  %v691 = vadd.f32 %v623, %v674
  %v692 = vadd.f32 %v624, %v674
  %v693 = vadd.f32 %v625, %v674
  %v694 = vadd.f32 %v626, %v674
  %v695 = vadd.f32 %v627, %v674
  %v696 = vadd.f32 %v628, %v674
  %v697 = vadd.f32 %v629, %v674
  %v698 = vadd.f32 %v630, %v674
  %v699 = vadd.f32 %v631, %v674
  %v700 = vadd.f32 %v632, %v674
  %v701 = vadd.f32 %v633, %v674
  %v702 = vadd.f32 %v634, %v674
  %v703 = vadd.f32 %v635, %v674
  %v704 = vadd.f32 %v636, %v674
  %v705 = vadd.f32 %v637, %v674
  %v706 = vadd.f32 %v638, %v674
  %v707 = vadd.f32 %v639, %v674
  %v708 = vadd.f32 %v640, %v674
  %v709 = vadd.f32 %v641, %v674
  %v710 = vadd.f32 %v642, %v674
  %v711 = vadd.f32 %v643, %v674
  %v712 = vadd.f32 %v644, %v674
  %v713 = vadd.f32 %v645, %v674
  %v714 = vadd.f32 %v646, %v674
  %v715 = vadd.f32 %v647, %v674
  %v716 = vadd.f32 %v648, %v674
  %v717 = vadd.f32 %v649, %v674
  %v718 = vadd.f32 %v650, %v674
  %v719 = vadd.f32 %v651, %v674
  %v720 = vadd.f32 %v652, %v674
  %v721 = vadd.f32 %v653, %v674
  %v722 = vadd.f32 %v654, %v674
  %v723 = vadd.f32 %v655, %v674
  %v724 = vadd.f32 %v656, %v674
  %v725 = vadd.f32 %v657, %v674
  %v726 = vadd.f32 %v658, %v674
  %v727 = vadd.f32 %v659, %v674
  %v728 = vadd.f32 %v660, %v674
  %v729 = vadd.f32 %v661, %v674
  %v730 = vadd.f32 %v662, %v674
  %v731 = vadd.f32 %v663, %v674
  %v732 = vadd.f32 %v664, %v674
  %v733 = vadd.f32 %v665, %v674
  %v734 = vadd.f32 %v666, %v674
  %v735 = vadd.f32 %v667, %v674
  %v736 = vadd.f32 %v668, %v674
  %v737 = vadd.f32 %v669, %v674
  %v738 = vadd.f32 %v670, %v674
  %v739 = vadd.f32 %v671, %v674
  %v740 = vmax.f32 %v676, 0.0
  %v741 = vmax.f32 %v677, 0.0
  %v742 = vmax.f32 %v678, 0.0
  %v743 = vmax.f32 %v679, 0.0
  %v744 = vmax.f32 %v680, 0.0
  %v745 = vmax.f32 %v681, 0.0
  %v746 = vmax.f32 %v682, 0.0
  %v747 = vmax.f32 %v683, 0.0
  %v748 = vmax.f32 %v684, 0.0
  %v749 = vmax.f32 %v685, 0.0
  %v750 = vmax.f32 %v686, 0.0
  %v751 = vmax.f32 %v687, 0.0
  %v752 = vmax.f32 %v688, 0.0
  %v753 = vmax.f32 %v689, 0.0
  %v754 = vmax.f32 %v690, 0.0
  %v755 = vmax.f32 %v691, 0.0
  %v756 = vmax.f32 %v692, 0.0
  %v757 = vmax.f32 %v693, 0.0
  %v758 = vmax.f32 %v694, 0.0
  %v759 = vmax.f32 %v695, 0.0
  %v760 = vmax.f32 %v696, 0.0
  %v761 = vmax.f32 %v697, 0.0
  %v762 = vmax.f32 %v698, 0.0
  %v763 = vmax.f32 %v699, 0.0
  %v764 = vmax.f32 %v700, 0.0
  %v765 = vmax.f32 %v701, 0.0
  %v766 = vmax.f32 %v702, 0.0
  %v767 = vmax.f32 %v703, 0.0
  %v768 = vmax.f32 %v704, 0.0
  %v769 = vmax.f32 %v705, 0.0
  %v770 = vmax.f32 %v706, 0.0
  %v771 = vmax.f32 %v707, 0.0
  %v772 = vmax.f32 %v708, 0.0
  %v773 = vmax.f32 %v709, 0.0
  %v774 = vmax.f32 %v710, 0.0
  %v775 = vmax.f32 %v711, 0.0
  %v776 = vmax.f32 %v712, 0.0
  %v777 = vmax.f32 %v713, 0.0
  %v778 = vmax.f32 %v714, 0.0
  %v779 = vmax.f32 %v715, 0.0
  %v780 = vmax.f32 %v716, 0.0
  %v781 = vmax.f32 %v717, 0.0
  %v782 = vmax.f32 %v718, 0.0
  %v783 = vmax.f32 %v719, 0.0
  %v784 = vmax.f32 %v720, 0.0
  %v785 = vmax.f32 %v721, 0.0
  %v786 = vmax.f32 %v722, 0.0
  %v787 = vmax.f32 %v723, 0.0
  %v788 = vmax.f32 %v724, 0.0
  %v789 = vmax.f32 %v725, 0.0
  %v790 = vmax.f32 %v726, 0.0
  %v791 = vmax.f32 %v727, 0.0
  %v792 = vmax.f32 %v728, 0.0
  %v793 = vmax.f32 %v729, 0.0
  %v794 = vmax.f32 %v730, 0.0
  %v795 = vmax.f32 %v731, 0.0
  %v796 = vmax.f32 %v732, 0.0
  %v797 = vmax.f32 %v733, 0.0
  %v798 = vmax.f32 %v734, 0.0
  %v799 = vmax.f32 %v735, 0.0
  %v800 = vmax.f32 %v736, 0.0
  %v801 = vmax.f32 %v737, 0.0
  %v802 = vmax.f32 %v738, 0.0
  %v803 = vmax.f32 %v739, 0.0
  %v804 = vpack.c.bf16 %v740, %v740
  %v805 = vpack.c.bf16 %v741, %v741
  %v806 = vpack.c.bf16 %v742, %v742
  %v807 = vpack.c.bf16 %v743, %v743
  %v808 = vpack.c.bf16 %v744, %v744
  %v809 = vpack.c.bf16 %v745, %v745
  %v810 = vpack.c.bf16 %v746, %v746
  %v811 = vpack.c.bf16 %v747, %v747
  %v812 = vpack.c.bf16 %v748, %v748
  %v813 = vpack.c.bf16 %v749, %v749
  %v814 = vpack.c.bf16 %v750, %v750
  %v815 = vpack.c.bf16 %v751, %v751
  %v816 = vpack.c.bf16 %v752, %v752
  %v817 = vpack.c.bf16 %v753, %v753
  %v818 = vpack.c.bf16 %v754, %v754
  %v819 = vpack.c.bf16 %v755, %v755
  %v820 = vpack.c.bf16 %v756, %v756
  %v821 = vpack.c.bf16 %v757, %v757
  %v822 = vpack.c.bf16 %v758, %v758
  %v823 = vpack.c.bf16 %v759, %v759
  %v824 = vpack.c.bf16 %v760, %v760
  %v825 = vpack.c.bf16 %v761, %v761
  %v826 = vpack.c.bf16 %v762, %v762
  %v827 = vpack.c.bf16 %v763, %v763
  %v828 = vpack.c.bf16 %v764, %v764
  %v829 = vpack.c.bf16 %v765, %v765
  %v830 = vpack.c.bf16 %v766, %v766
  %v831 = vpack.c.bf16 %v767, %v767
  %v832 = vpack.c.bf16 %v768, %v768
  %v833 = vpack.c.bf16 %v769, %v769
  %v834 = vpack.c.bf16 %v770, %v770
  %v835 = vpack.c.bf16 %v771, %v771
  %v836 = vpack.c.bf16 %v772, %v772
  %v837 = vpack.c.bf16 %v773, %v773
  %v838 = vpack.c.bf16 %v774, %v774
  %v839 = vpack.c.bf16 %v775, %v775
  %v840 = vpack.c.bf16 %v776, %v776
  %v841 = vpack.c.bf16 %v777, %v777
  %v842 = vpack.c.bf16 %v778, %v778
  %v843 = vpack.c.bf16 %v779, %v779
  %v844 = vpack.c.bf16 %v780, %v780
  %v845 = vpack.c.bf16 %v781, %v781
  %v846 = vpack.c.bf16 %v782, %v782
  %v847 = vpack.c.bf16 %v783, %v783
  %v848 = vpack.c.bf16 %v784, %v784
  %v849 = vpack.c.bf16 %v785, %v785
  %v850 = vpack.c.bf16 %v786, %v786
  %v851 = vpack.c.bf16 %v787, %v787
  %v852 = vpack.c.bf16 %v788, %v788
  %v853 = vpack.c.bf16 %v789, %v789
  %v854 = vpack.c.bf16 %v790, %v790
  %v855 = vpack.c.bf16 %v791, %v791
  %v856 = vpack.c.bf16 %v792, %v792
  %v857 = vpack.c.bf16 %v793, %v793
  %v858 = vpack.c.bf16 %v794, %v794
  %v859 = vpack.c.bf16 %v795, %v795
  %v860 = vpack.c.bf16 %v796, %v796
  %v861 = vpack.c.bf16 %v797, %v797
  %v862 = vpack.c.bf16 %v798, %v798
  %v863 = vpack.c.bf16 %v799, %v799
  %v864 = vpack.c.bf16 %v800, %v800
  %v865 = vpack.c.bf16 %v801, %v801
  %v866 = vpack.c.bf16 %v802, %v802
  %v867 = vpack.c.bf16 %v803, %v803
  %vm868 = vcmask 125952
  %869 = vst.msk [vmem:[%s7] sm:$0xf] %vm868, %v804
  %870 = vst.msk [vmem:[%s7 + $0x4] sm:$0xf] %vm868, %v805
  %871 = vst.msk [vmem:[%s7 + $0x8] sm:$0xf] %vm868, %v806
  %872 = vst.msk [vmem:[%s7 + $0xc] sm:$0xf] %vm868, %v807
  %873 = vst.msk [vmem:[%s7 + $0x10] sm:$0xf] %vm868, %v808
  %874 = vst.msk [vmem:[%s7 + $0x14] sm:$0xf] %vm868, %v809
  %875 = vst.msk [vmem:[%s7 + $0x18] sm:$0xf] %vm868, %v810
  %876 = vst.msk [vmem:[%s7 + $0x1c] sm:$0xf] %vm868, %v811
  %877 = vst.msk [vmem:[%s7 + $0x20] sm:$0xf] %vm868, %v812
  %878 = vst.msk [vmem:[%s7 + $0x24] sm:$0xf] %vm868, %v813
  %879 = vst.msk [vmem:[%s7 + $0x28] sm:$0xf] %vm868, %v814
  %880 = vst.msk [vmem:[%s7 + $0x2c] sm:$0xf] %vm868, %v815
  %881 = vst.msk [vmem:[%s7 + $0x30] sm:$0xf] %vm868, %v816
  %882 = vst.msk [vmem:[%s7 + $0x34] sm:$0xf] %vm868, %v817
  %883 = vst.msk [vmem:[%s7 + $0x38] sm:$0xf] %vm868, %v818
  %884 = vst.msk [vmem:[%s7 + $0x3c] sm:$0xf] %vm868, %v819
  %885 = vst.msk [vmem:[%s7 + $0x40] sm:$0xf] %vm868, %v820
  %886 = vst.msk [vmem:[%s7 + $0x44] sm:$0xf] %vm868, %v821
  %887 = vst.msk [vmem:[%s7 + $0x48] sm:$0xf] %vm868, %v822
  %888 = vst.msk [vmem:[%s7 + $0x4c] sm:$0xf] %vm868, %v823
  %889 = vst.msk [vmem:[%s7 + $0x50] sm:$0xf] %vm868, %v824
  %890 = vst.msk [vmem:[%s7 + $0x54] sm:$0xf] %vm868, %v825
  %891 = vst.msk [vmem:[%s7 + $0x58] sm:$0xf] %vm868, %v826
  %892 = vst.msk [vmem:[%s7 + $0x5c] sm:$0xf] %vm868, %v827
  %893 = vst.msk [vmem:[%s7 + $0x60] sm:$0xf] %vm868, %v828
  %894 = vst.msk [vmem:[%s7 + $0x64] sm:$0xf] %vm868, %v829
  %895 = vst.msk [vmem:[%s7 + $0x68] sm:$0xf] %vm868, %v830
  %896 = vst.msk [vmem:[%s7 + $0x6c] sm:$0xf] %vm868, %v831
  %897 = vst.msk [vmem:[%s7 + $0x70] sm:$0xf] %vm868, %v832
  %898 = vst.msk [vmem:[%s7 + $0x74] sm:$0xf] %vm868, %v833
  %899 = vst.msk [vmem:[%s7 + $0x78] sm:$0xf] %vm868, %v834
  %900 = vst.msk [vmem:[%s7 + $0x7c] sm:$0xf] %vm868, %v835
  %901 = vst.msk [vmem:[%s7 + $0x80] sm:$0xf] %vm868, %v836
  %902 = vst.msk [vmem:[%s7 + $0x84] sm:$0xf] %vm868, %v837
  %903 = vst.msk [vmem:[%s7 + $0x88] sm:$0xf] %vm868, %v838
  %904 = vst.msk [vmem:[%s7 + $0x8c] sm:$0xf] %vm868, %v839
  %905 = vst.msk [vmem:[%s7 + $0x90] sm:$0xf] %vm868, %v840
  %906 = vst.msk [vmem:[%s7 + $0x94] sm:$0xf] %vm868, %v841
  %907 = vst.msk [vmem:[%s7 + $0x98] sm:$0xf] %vm868, %v842
  %908 = vst.msk [vmem:[%s7 + $0x9c] sm:$0xf] %vm868, %v843
  %909 = vst.msk [vmem:[%s7 + $0xa0] sm:$0xf] %vm868, %v844
  %910 = vst.msk [vmem:[%s7 + $0xa4] sm:$0xf] %vm868, %v845
  %911 = vst.msk [vmem:[%s7 + $0xa8] sm:$0xf] %vm868, %v846
  %912 = vst.msk [vmem:[%s7 + $0xac] sm:$0xf] %vm868, %v847
  %913 = vst.msk [vmem:[%s7 + $0xb0] sm:$0xf] %vm868, %v848
  %914 = vst.msk [vmem:[%s7 + $0xb4] sm:$0xf] %vm868, %v849
  %915 = vst.msk [vmem:[%s7 + $0xb8] sm:$0xf] %vm868, %v850
  %916 = vst.msk [vmem:[%s7 + $0xbc] sm:$0xf] %vm868, %v851
  %917 = vst.msk [vmem:[%s7 + $0xc0] sm:$0xf] %vm868, %v852
  %918 = vst.msk [vmem:[%s7 + $0xc4] sm:$0xf] %vm868, %v853
  %919 = vst.msk [vmem:[%s7 + $0xc8] sm:$0xf] %vm868, %v854
  %920 = vst.msk [vmem:[%s7 + $0xcc] sm:$0xf] %vm868, %v855
  %921 = vst.msk [vmem:[%s7 + $0xd0] sm:$0xf] %vm868, %v856
  %922 = vst.msk [vmem:[%s7 + $0xd4] sm:$0xf] %vm868, %v857
  %923 = vst.msk [vmem:[%s7 + $0xd8] sm:$0xf] %vm868, %v858
  %924 = vst.msk [vmem:[%s7 + $0xdc] sm:$0xf] %vm868, %v859
  %925 = vst.msk [vmem:[%s7 + $0xe0] sm:$0xf] %vm868, %v860
  %926 = vst.msk [vmem:[%s7 + $0xe4] sm:$0xf] %vm868, %v861
  %927 = vst.msk [vmem:[%s7 + $0xe8] sm:$0xf] %vm868, %v862
  %928 = vst.msk [vmem:[%s7 + $0xec] sm:$0xf] %vm868, %v863
  %929 = vst.msk [vmem:[%s7 + $0xf0] sm:$0xf] %vm868, %v864
  %930 = vst.msk [vmem:[%s7 + $0xf4] sm:$0xf] %vm868, %v865
  %931 = vst.msk [vmem:[%s7 + $0xf8] sm:$0xf] %vm868, %v866
  %932 = vst.msk [vmem:[%s7 + $0xfc] sm:$0xf] %vm868, %v867
  // Predicated region
  $region30: #{dense_block_forward.10} parent=0 // pred_check
    _
  $region31: #{dense_block_forward.10} parent=0 // pred_check_branch
    %934 = sbr.rel (0) target = $region33
  $region32: #{dense_block_forward.10} parent=0 // pred_region
    _
  $region33: #{dense_block_forward.10} parent=0 // pred_fallthru
    _
  // Predicated region
  $region34: #{dense_block_forward.10} parent=0 // pred_check
    _
  $region35: #{dense_block_forward.10} parent=0 // pred_check_branch
    %936 = sbr.rel (0) target = $region37
  $region36: #{dense_block_forward.10} parent=0 // pred_region
    _
  $region37: #{dense_block_forward.10} parent=0 // pred_fallthru
    _

</llo_original>
